<compile_context>
chip_gen: v6e
topology: v6e:2x2x1
jax: 0.10.0
libtpu: 0.0.40
codegen_flags: <defaults>
</compile_context>

<pallas_src>
import jax
import jax.numpy as jnp
from jax.experimental import pallas as pl
from jax.experimental.pallas import tpu as pltpu

# ---------------- configuration (small synthetic sizes) ----------------
B = 2            # batch
T = 8            # episode length
C = 4            # channels: channel 0 = agent, channels 1..3 = environment
H = W = 16       # spatial
ENV_C = C - 1
AGENT_C = 1
F_CONV = 8       # conv filters in the encoders
D = 32           # representation / hidden size
GOAL_TYPE_NUM = 4
G = GOAL_TYPE_NUM + 1   # goal logits dim
A = 5            # number of actions


def _log_softmax(x):
    m = jnp.max(x, axis=-1, keepdims=True)
    s = x - m
    return s - jnp.log(jnp.sum(jnp.exp(s), axis=-1, keepdims=True))


# =====================================================================
# Fused ToMNet kernel.  One grid step = one batch element:
#   env/agent conv encoders (lane-dense matmul over all T steps at once)
#   -> mental LSTM over T (fused 128-lane gates, carries as values)
#   -> goal / action heads + log-softmax (batched over T).
# =====================================================================
def tomnet_kernel(envp_ref, agtp_ref, pool_ref,
                  wce_ref, bce_ref, wle_ref, ble_ref,        # env encoder
                  wca_ref, bca_ref, wla_ref, bla_ref,        # agent encoder
                  wihe_ref, wiha_ref, whh_ref, blstm_ref,    # LSTM (fused gates)
                  wg_ref, bg_ref,                            # goal head
                  wag_ref, wae_ref, waa_ref, bact_ref,       # action head
                  goals_ref, actions_ref,                    # outputs
                  m_scr):                                    # (T, D) mental states
    f32 = jnp.float32
    Tt, Dd = m_scr.shape

    # ---- conv encoders: relu(Wc @ patches + bc) -> mean pool -> linear ----
    def encode(patches, wc, bc, wl, bl):
        # patches: (9*Cin, T*HW)  wc: (F, 9*Cin)  bc: (F, 1)  wl: (F, D)  bl: (1, D)
        feat = jnp.maximum(
            jnp.dot(wc, patches, preferred_element_type=f32) + bc, 0.0)      # (F, T*HW)
        pooled = jnp.dot(feat, pool_ref[...], preferred_element_type=f32)    # (F, T)
        return jnp.dot(pooled.T, wl, preferred_element_type=f32) + bl        # (T, D)

    env_repr = encode(envp_ref[0], wce_ref[...], bce_ref[...],
                      wle_ref[...], ble_ref[...])                            # (T, D)
    agent_repr = encode(agtp_ref[0], wca_ref[...], bca_ref[...],
                        wla_ref[...], bla_ref[...])                          # (T, D)

    env_r = jnp.maximum(env_repr, 0.0)        # F.relu(env_repr)
    agent_r = jnp.maximum(agent_repr, 0.0)    # F.relu(agent_repr)

    # ---- mental LSTM, gates fused to 4*D = 128 lanes ----
    # input-to-hidden part for all T steps in one matmul (weights pre-split so
    # that env_r @ Wih_e + agent_r @ Wih_a == [env_r ++ agent_r] @ Wih).
    xg = (jnp.dot(env_r, wihe_ref[...], preferred_element_type=f32)
          + jnp.dot(agent_r, wiha_ref[...], preferred_element_type=f32)
          + blstm_ref[...])                                                  # (T, 4D)
    whh = whh_ref[...]                                                       # (D, 4D)

    h = jnp.zeros((1, Dd), f32)
    c = jnp.zeros((1, Dd), f32)
    for t in range(Tt):                       # short fixed trip count, unrolled
        gates = xg[t:t + 1, :] + jnp.dot(h, whh, preferred_element_type=f32)  # (1, 4D)
        i_g = jax.nn.sigmoid(gates[:, 0:Dd])
        f_g = jax.nn.sigmoid(gates[:, Dd:2 * Dd])
        g_g = jnp.tanh(gates[:, 2 * Dd:3 * Dd])
        o_g = jax.nn.sigmoid(gates[:, 3 * Dd:4 * Dd])
        c = f_g * c + i_g * g_g
        h = o_g * jnp.tanh(c)
        m_scr[pl.ds(t, 1), :] = h

    mental = jnp.maximum(m_scr[...], 0.0)     # F.relu(mental_states)  (T, D)

    # ---- goal head + log-softmax (all T steps batched) ----
    goal = jnp.dot(mental, wg_ref[...], preferred_element_type=f32) + bg_ref[...]   # (T, G)
    goals_ref[0] = _log_softmax(goal)

    # ---- action head + log-softmax ----
    # Three dots instead of an in-kernel lane concat of [relu(goal),env_r,agent_r]
    # (avoids an unaligned minor-dim concatenate; math is identical).
    act = (jnp.dot(jnp.maximum(goal, 0.0), wag_ref[...], preferred_element_type=f32)
           + jnp.dot(env_r, wae_ref[...], preferred_element_type=f32)
           + jnp.dot(agent_r, waa_ref[...], preferred_element_type=f32)
           + bact_ref[...])                                                  # (T, A)
    actions_ref[0] = _log_softmax(act)


# =====================================================================
# Wrapper glue: lane-dense im2col, weight repacking, one pallas_call.
# =====================================================================
def im2col_3x3_lanedense(x5):
    # x5: (B, T, Cin, H, W) -> (B, 9*Cin, T*H*W); tap index (dy*3+dx) major,
    # channel minor; minor axis is (t, y, x) flattened => T*HW lanes.
    # TODO(synk): could be moved fully in-kernel (9 shifted-slice taps of the
    # padded image in VMEM) to avoid the 9x HBM expansion when scaling up.
    Bb, Tt, Cin, Hh, Ww = x5.shape
    xp = jnp.pad(x5, ((0, 0), (0, 0), (0, 0), (1, 1), (1, 1)))
    taps = [xp[:, :, :, dy:dy + Hh, dx:dx + Ww]
            for dy in range(3) for dx in range(3)]
    p = jnp.stack(taps, axis=2)                   # (B, T, 9, Cin, H, W)
    p = p.transpose(0, 2, 3, 1, 4, 5)             # (B, 9, Cin, T, H, W)
    return p.reshape(Bb, 9 * Cin, Tt * Hh * Ww)


def init_params(key):
    ks = jax.random.split(key, 20)
    s = 0.1
    p = {
        # encoders (PyTorch conv layout (F, Cin, 3, 3); repacked for the kernel)
        "env_conv_w":   s * jax.random.normal(ks[0], (F_CONV, ENV_C, 3, 3), jnp.float32),
        "env_conv_b":   s * jax.random.normal(ks[1], (F_CONV,), jnp.float32),
        "env_lin_w":    s * jax.random.normal(ks[2], (F_CONV, D), jnp.float32),
        "env_lin_b":    s * jax.random.normal(ks[3], (D,), jnp.float32),
        "agent_conv_w": s * jax.random.normal(ks[4], (F_CONV, AGENT_C, 3, 3), jnp.float32),
        "agent_conv_b": s * jax.random.normal(ks[5], (F_CONV,), jnp.float32),
        "agent_lin_w":  s * jax.random.normal(ks[6], (F_CONV, D), jnp.float32),
        "agent_lin_b":  s * jax.random.normal(ks[7], (D,), jnp.float32),
        # mental LSTM, fused gate layout: columns [i | f | g | o], each D wide
        "lstm_wih":     s * jax.random.normal(ks[8], (2 * D, 4 * D), jnp.float32),
        "lstm_whh":     s * jax.random.normal(ks[9], (D, 4 * D), jnp.float32),
        "lstm_b":       s * jax.random.normal(ks[10], (4 * D,), jnp.float32),
        # goal / action heads
        "goal_w":       s * jax.random.normal(ks[11], (D, G), jnp.float32),
        "goal_b":       s * jax.random.normal(ks[12], (G,), jnp.float32),
        "act_wg":       s * jax.random.normal(ks[13], (G, A), jnp.float32),
        "act_we":       s * jax.random.normal(ks[14], (D, A), jnp.float32),
        "act_wa":       s * jax.random.normal(ks[15], (D, A), jnp.float32),
        "act_b":        s * jax.random.normal(ks[16], (A,), jnp.float32),
    }
    return p


def tomnet_forward(environment, p):
    # environment: (B, T, C, H, W) float32
    Bb, Tt, Cc, Hh, Ww = environment.shape
    HW = Hh * Ww

    env_only = environment[:, :, 1:, :, :]     # (B, T, C-1, H, W)
    agent_only = environment[:, :, :1, :, :]   # (B, T, 1,   H, W)

    envp = im2col_3x3_lanedense(env_only)      # (B, 9*(C-1), T*HW)
    agtp = im2col_3x3_lanedense(agent_only)    # (B, 9,       T*HW)

    # block-diagonal mean-pool matrix: (T*HW, T), pool[j, t] = 1/HW iff j//HW == t
    pool = (jnp.arange(Tt * HW)[:, None] // HW == jnp.arange(Tt)[None, :]
            ).astype(jnp.float32) / float(HW)

    # weight repacking (tiny, trace-time)
    wce = p["env_conv_w"].transpose(0, 2, 3, 1).reshape(F_CONV, 9 * ENV_C)
    bce = p["env_conv_b"].reshape(F_CONV, 1)
    wle, ble = p["env_lin_w"], p["env_lin_b"].reshape(1, D)
    wca = p["agent_conv_w"].transpose(0, 2, 3, 1).reshape(F_CONV, 9 * AGENT_C)
    bca = p["agent_conv_b"].reshape(F_CONV, 1)
    wla, bla = p["agent_lin_w"], p["agent_lin_b"].reshape(1, D)
    wih_e, wih_a = p["lstm_wih"][:D], p["lstm_wih"][D:]     # split: env / agent half
    whh, blstm = p["lstm_whh"], p["lstm_b"].reshape(1, 4 * D)
    wg, bg = p["goal_w"], p["goal_b"].reshape(1, G)
    wag, wae, waa = p["act_wg"], p["act_we"], p["act_wa"]
    bact = p["act_b"].reshape(1, A)

    def per_b(arr):
        return pl.BlockSpec((1,) + arr.shape[1:], lambda b: (b, 0, 0))

    def const2(arr):
        return pl.BlockSpec(arr.shape, lambda b: (0, 0))

    goals_lp, actions_lp = pl.pallas_call(
        tomnet_kernel,
        out_shape=(jax.ShapeDtypeStruct((Bb, Tt, G), jnp.float32),
                   jax.ShapeDtypeStruct((Bb, Tt, A), jnp.float32)),
        grid=(Bb,),
        in_specs=[
            per_b(envp), per_b(agtp), const2(pool),
            const2(wce), const2(bce), const2(wle), const2(ble),
            const2(wca), const2(bca), const2(wla), const2(bla),
            const2(wih_e), const2(wih_a), const2(whh), const2(blstm),
            const2(wg), const2(bg),
            const2(wag), const2(wae), const2(waa), const2(bact),
        ],
        out_specs=(pl.BlockSpec((1, Tt, G), lambda b: (b, 0, 0)),
                   pl.BlockSpec((1, Tt, A), lambda b: (b, 0, 0))),
        scratch_shapes=[pltpu.VMEM((Tt, D), jnp.float32)],
        # "parallel" over batch: uses both TensorCores on v7x; a no-op on v5e/v6e.
        compiler_params=pltpu.CompilerParams(dimension_semantics=("parallel",)),
    )(envp, agtp, pool,
      wce, bce, wle, ble, wca, bca, wla, bla,
      wih_e, wih_a, whh, blstm, wg, bg, wag, wae, waa, bact)

    # TODO(synk): inject_true_goals branch (one-hot goal scatter + action head)
    # not implemented; default forward (inject_true_goals=False) returns None.
    return goals_lp, actions_lp, None


if __name__ == "__main__":
    key = jax.random.PRNGKey(0)
    k_env, k_par = jax.random.split(key)
    environment = jax.random.normal(k_env, (B, T, C, H, W), jnp.float32)
    params = init_params(k_par)

    fwd = jax.jit(tomnet_forward)
    goals_prob, actions_prob, actions_prob_true = fwd(environment, params)
    jax.block_until_ready((goals_prob, actions_prob))

    assert goals_prob.shape == (B, T, G)
    assert actions_prob.shape == (B, T, A)
    assert actions_prob_true is None
    assert bool(jnp.all(jnp.isfinite(goals_prob))) and bool(jnp.all(jnp.isfinite(actions_prob)))
    print("KERNEL_OK")
</pallas_src>

<mosaic_0001>
module attributes {stable_mosaic.version = 11 : i64} {
  func.func @tomnet_kernel(%arg0: i32, %arg1: memref<1x27x2048xf32, #tpu.memory_space<vmem>>, %arg2: memref<1x9x2048xf32, #tpu.memory_space<vmem>>, %arg3: memref<2048x8xf32, #tpu.memory_space<vmem>>, %arg4: memref<8x27xf32, #tpu.memory_space<vmem>>, %arg5: memref<8x1xf32, #tpu.memory_space<vmem>>, %arg6: memref<8x32xf32, #tpu.memory_space<vmem>>, %arg7: memref<1x32xf32, #tpu.memory_space<vmem>>, %arg8: memref<8x9xf32, #tpu.memory_space<vmem>>, %arg9: memref<8x1xf32, #tpu.memory_space<vmem>>, %arg10: memref<8x32xf32, #tpu.memory_space<vmem>>, %arg11: memref<1x32xf32, #tpu.memory_space<vmem>>, %arg12: memref<32x128xf32, #tpu.memory_space<vmem>>, %arg13: memref<32x128xf32, #tpu.memory_space<vmem>>, %arg14: memref<32x128xf32, #tpu.memory_space<vmem>>, %arg15: memref<1x128xf32, #tpu.memory_space<vmem>>, %arg16: memref<32x5xf32, #tpu.memory_space<vmem>>, %arg17: memref<1x5xf32, #tpu.memory_space<vmem>>, %arg18: memref<5x5xf32, #tpu.memory_space<vmem>>, %arg19: memref<32x5xf32, #tpu.memory_space<vmem>>, %arg20: memref<32x5xf32, #tpu.memory_space<vmem>>, %arg21: memref<1x5xf32, #tpu.memory_space<vmem>>, %arg22: memref<1x8x5xf32, #tpu.memory_space<vmem>>, %arg23: memref<1x8x5xf32, #tpu.memory_space<vmem>>, %arg24: memref<8x32xf32, #tpu.memory_space<vmem>>) attributes {dimension_semantics = [#tpu.dimension_semantics<parallel>], iteration_bounds = array<i64: 2>, scalar_prefetch = 0 : i64, scratch_operands = 1 : i64, tpu.core_type = #tpu.core_type<tc>, window_params = [{transform_indices = @transform_0, window_bounds = array<i64: 1, 27, 2048>}, {transform_indices = @transform_1, window_bounds = array<i64: 1, 9, 2048>}, {pipeline_mode = #tpu.pipeline_mode<synchronous>, transform_indices = @transform_2, window_bounds = array<i64: 2048, 8>}, {pipeline_mode = #tpu.pipeline_mode<synchronous>, transform_indices = @transform_3, window_bounds = array<i64: 8, 27>}, {pipeline_mode = #tpu.pipeline_mode<synchronous>, transform_indices = @transform_4, window_bounds = array<i64: 8, 1>}, {pipeline_mode = #tpu.pipeline_mode<synchronous>, transform_indices = @transform_5, window_bounds = array<i64: 8, 32>}, {pipeline_mode = #tpu.pipeline_mode<synchronous>, transform_indices = @transform_6, window_bounds = array<i64: 1, 32>}, {pipeline_mode = #tpu.pipeline_mode<synchronous>, transform_indices = @transform_7, window_bounds = array<i64: 8, 9>}, {pipeline_mode = #tpu.pipeline_mode<synchronous>, transform_indices = @transform_8, window_bounds = array<i64: 8, 1>}, {pipeline_mode = #tpu.pipeline_mode<synchronous>, transform_indices = @transform_9, window_bounds = array<i64: 8, 32>}, {pipeline_mode = #tpu.pipeline_mode<synchronous>, transform_indices = @transform_10, window_bounds = array<i64: 1, 32>}, {pipeline_mode = #tpu.pipeline_mode<synchronous>, transform_indices = @transform_11, window_bounds = array<i64: 32, 128>}, {pipeline_mode = #tpu.pipeline_mode<synchronous>, transform_indices = @transform_12, window_bounds = array<i64: 32, 128>}, {pipeline_mode = #tpu.pipeline_mode<synchronous>, transform_indices = @transform_13, window_bounds = array<i64: 32, 128>}, {pipeline_mode = #tpu.pipeline_mode<synchronous>, transform_indices = @transform_14, window_bounds = array<i64: 1, 128>}, {pipeline_mode = #tpu.pipeline_mode<synchronous>, transform_indices = @transform_15, window_bounds = array<i64: 32, 5>}, {pipeline_mode = #tpu.pipeline_mode<synchronous>, transform_indices = @transform_16, window_bounds = array<i64: 1, 5>}, {pipeline_mode = #tpu.pipeline_mode<synchronous>, transform_indices = @transform_17, window_bounds = array<i64: 5, 5>}, {pipeline_mode = #tpu.pipeline_mode<synchronous>, transform_indices = @transform_18, window_bounds = array<i64: 32, 5>}, {pipeline_mode = #tpu.pipeline_mode<synchronous>, transform_indices = @transform_19, window_bounds = array<i64: 32, 5>}, {pipeline_mode = #tpu.pipeline_mode<synchronous>, transform_indices = @transform_20, window_bounds = array<i64: 1, 5>}, {transform_indices = @transform_21, window_bounds = array<i64: 1, 8, 5>}, {transform_indices = @transform_22, window_bounds = array<i64: 1, 8, 5>}]} {
    %c0 = arith.constant 0 : index
    %c0_0 = arith.constant 0 : index
    %c0_1 = arith.constant 0 : index
    %0 = vector.load %arg1[%c0, %c0_0, %c0_1] : memref<1x27x2048xf32, #tpu.memory_space<vmem>>, vector<1x27x2048xf32>
    %1 = vector.shape_cast %0 : vector<1x27x2048xf32> to vector<27x2048xf32>
    %c0_2 = arith.constant 0 : index
    %c0_3 = arith.constant 0 : index
    %2 = vector.load %arg4[%c0_2, %c0_3] : memref<8x27xf32, #tpu.memory_space<vmem>>, vector<8x27xf32>
    %c0_4 = arith.constant 0 : index
    %c0_5 = arith.constant 0 : index
    %3 = vector.load %arg5[%c0_4, %c0_5] : memref<8x1xf32, #tpu.memory_space<vmem>>, vector<8x1xf32>
    %c0_6 = arith.constant 0 : index
    %c0_7 = arith.constant 0 : index
    %4 = vector.load %arg6[%c0_6, %c0_7] : memref<8x32xf32, #tpu.memory_space<vmem>>, vector<8x32xf32>
    %c0_8 = arith.constant 0 : index
    %c0_9 = arith.constant 0 : index
    %5 = vector.load %arg7[%c0_8, %c0_9] : memref<1x32xf32, #tpu.memory_space<vmem>>, vector<1x32xf32>
    %cst = arith.constant dense<0.000000e+00> : vector<8x2048xf32>
    %6 = tpu.matmul %2, %1, %cst {dimension_numbers = #tpu.dot_dimension_numbers<[1], [0], [0], [1], [0, 0, 1, 1], [], []>} : vector<8x27xf32>, vector<27x2048xf32>, vector<8x2048xf32> -> vector<8x2048xf32>
    %7 = vector.broadcast %3 : vector<8x1xf32> to vector<8x2048xf32>
    %8 = arith.addf %6, %7 : vector<8x2048xf32>
    %cst_10 = arith.constant 0.000000e+00 : f32
    %9 = vector.broadcast %cst_10 : f32 to vector<8x2048xf32>
    %10 = arith.maximumf %8, %9 : vector<8x2048xf32>
    %c0_11 = arith.constant 0 : index
    %c0_12 = arith.constant 0 : index
    %11 = vector.load %arg3[%c0_11, %c0_12] : memref<2048x8xf32, #tpu.memory_space<vmem>>, vector<2048x8xf32>
    %cst_13 = arith.constant dense<0.000000e+00> : vector<8x8xf32>
    %12 = tpu.matmul %10, %11, %cst_13 {dimension_numbers = #tpu.dot_dimension_numbers<[1], [0], [0], [1], [0, 0, 1, 1], [], []>} : vector<8x2048xf32>, vector<2048x8xf32>, vector<8x8xf32> -> vector<8x8xf32>
    %13 = tpu.transpose %12, [1, 0] : vector<8x8xf32> -> vector<8x8xf32>
    %cst_14 = arith.constant dense<0.000000e+00> : vector<8x32xf32>
    %14 = tpu.matmul %13, %4, %cst_14 {dimension_numbers = #tpu.dot_dimension_numbers<[1], [0], [0], [1], [0, 0, 1, 1], [], []>} : vector<8x8xf32>, vector<8x32xf32>, vector<8x32xf32> -> vector<8x32xf32>
    %15 = vector.broadcast %5 : vector<1x32xf32> to vector<8x32xf32>
    %16 = arith.addf %14, %15 : vector<8x32xf32>
    %c0_15 = arith.constant 0 : index
    %c0_16 = arith.constant 0 : index
    %c0_17 = arith.constant 0 : index
    %17 = vector.load %arg2[%c0_15, %c0_16, %c0_17] : memref<1x9x2048xf32, #tpu.memory_space<vmem>>, vector<1x9x2048xf32>
    %18 = vector.shape_cast %17 : vector<1x9x2048xf32> to vector<9x2048xf32>
    %c0_18 = arith.constant 0 : index
    %c0_19 = arith.constant 0 : index
    %19 = vector.load %arg8[%c0_18, %c0_19] : memref<8x9xf32, #tpu.memory_space<vmem>>, vector<8x9xf32>
    %c0_20 = arith.constant 0 : index
    %c0_21 = arith.constant 0 : index
    %20 = vector.load %arg9[%c0_20, %c0_21] : memref<8x1xf32, #tpu.memory_space<vmem>>, vector<8x1xf32>
    %c0_22 = arith.constant 0 : index
    %c0_23 = arith.constant 0 : index
    %21 = vector.load %arg10[%c0_22, %c0_23] : memref<8x32xf32, #tpu.memory_space<vmem>>, vector<8x32xf32>
    %c0_24 = arith.constant 0 : index
    %c0_25 = arith.constant 0 : index
    %22 = vector.load %arg11[%c0_24, %c0_25] : memref<1x32xf32, #tpu.memory_space<vmem>>, vector<1x32xf32>
    %cst_26 = arith.constant dense<0.000000e+00> : vector<8x2048xf32>
    %23 = tpu.matmul %19, %18, %cst_26 {dimension_numbers = #tpu.dot_dimension_numbers<[1], [0], [0], [1], [0, 0, 1, 1], [], []>} : vector<8x9xf32>, vector<9x2048xf32>, vector<8x2048xf32> -> vector<8x2048xf32>
    %24 = vector.broadcast %20 : vector<8x1xf32> to vector<8x2048xf32>
    %25 = arith.addf %23, %24 : vector<8x2048xf32>
    %cst_27 = arith.constant 0.000000e+00 : f32
    %26 = vector.broadcast %cst_27 : f32 to vector<8x2048xf32>
    %27 = arith.maximumf %25, %26 : vector<8x2048xf32>
    %c0_28 = arith.constant 0 : index
    %c0_29 = arith.constant 0 : index
    %28 = vector.load %arg3[%c0_28, %c0_29] : memref<2048x8xf32, #tpu.memory_space<vmem>>, vector<2048x8xf32>
    %cst_30 = arith.constant dense<0.000000e+00> : vector<8x8xf32>
    %29 = tpu.matmul %27, %28, %cst_30 {dimension_numbers = #tpu.dot_dimension_numbers<[1], [0], [0], [1], [0, 0, 1, 1], [], []>} : vector<8x2048xf32>, vector<2048x8xf32>, vector<8x8xf32> -> vector<8x8xf32>
    %30 = tpu.transpose %29, [1, 0] : vector<8x8xf32> -> vector<8x8xf32>
    %cst_31 = arith.constant dense<0.000000e+00> : vector<8x32xf32>
    %31 = tpu.matmul %30, %21, %cst_31 {dimension_numbers = #tpu.dot_dimension_numbers<[1], [0], [0], [1], [0, 0, 1, 1], [], []>} : vector<8x8xf32>, vector<8x32xf32>, vector<8x32xf32> -> vector<8x32xf32>
    %32 = vector.broadcast %22 : vector<1x32xf32> to vector<8x32xf32>
    %33 = arith.addf %31, %32 : vector<8x32xf32>
    %cst_32 = arith.constant 0.000000e+00 : f32
    %34 = vector.broadcast %cst_32 : f32 to vector<8x32xf32>
    %35 = arith.maximumf %16, %34 : vector<8x32xf32>
    %cst_33 = arith.constant 0.000000e+00 : f32
    %36 = vector.broadcast %cst_33 : f32 to vector<8x32xf32>
    %37 = arith.maximumf %33, %36 : vector<8x32xf32>
    %c0_34 = arith.constant 0 : index
    %c0_35 = arith.constant 0 : index
    %38 = vector.load %arg12[%c0_34, %c0_35] : memref<32x128xf32, #tpu.memory_space<vmem>>, vector<32x128xf32>
    %cst_36 = arith.constant dense<0.000000e+00> : vector<8x128xf32>
    %39 = tpu.matmul %35, %38, %cst_36 {dimension_numbers = #tpu.dot_dimension_numbers<[1], [0], [0], [1], [0, 0, 1, 1], [], []>} : vector<8x32xf32>, vector<32x128xf32>, vector<8x128xf32> -> vector<8x128xf32>
    %c0_37 = arith.constant 0 : index
    %c0_38 = arith.constant 0 : index
    %40 = vector.load %arg13[%c0_37, %c0_38] : memref<32x128xf32, #tpu.memory_space<vmem>>, vector<32x128xf32>
    %cst_39 = arith.constant dense<0.000000e+00> : vector<8x128xf32>
    %41 = tpu.matmul %37, %40, %cst_39 {dimension_numbers = #tpu.dot_dimension_numbers<[1], [0], [0], [1], [0, 0, 1, 1], [], []>} : vector<8x32xf32>, vector<32x128xf32>, vector<8x128xf32> -> vector<8x128xf32>
    %42 = arith.addf %39, %41 : vector<8x128xf32>
    %c0_40 = arith.constant 0 : index
    %c0_41 = arith.constant 0 : index
    %43 = vector.load %arg15[%c0_40, %c0_41] : memref<1x128xf32, #tpu.memory_space<vmem>>, vector<1x128xf32>
    %44 = vector.broadcast %43 : vector<1x128xf32> to vector<8x128xf32>
    %45 = arith.addf %42, %44 : vector<8x128xf32>
    %c0_42 = arith.constant 0 : index
    %c0_43 = arith.constant 0 : index
    %46 = vector.load %arg14[%c0_42, %c0_43] : memref<32x128xf32, #tpu.memory_space<vmem>>, vector<32x128xf32>
    %cst_44 = arith.constant 0.000000e+00 : f32
    %47 = vector.broadcast %cst_44 : f32 to vector<1x32xf32>
    %cst_45 = arith.constant 0.000000e+00 : f32
    %48 = vector.broadcast %cst_45 : f32 to vector<1x32xf32>
    %49 = vector.extract_strided_slice %45 {offsets = [0, 0], sizes = [1, 128], strides = [1, 1]} : vector<8x128xf32> to vector<1x128xf32>
    %cst_46 = arith.constant dense<0.000000e+00> : vector<1x128xf32>
    %50 = tpu.matmul %47, %46, %cst_46 {dimension_numbers = #tpu.dot_dimension_numbers<[1], [0], [0], [1], [0, 0, 1, 1], [], []>} : vector<1x32xf32>, vector<32x128xf32>, vector<1x128xf32> -> vector<1x128xf32>
    %51 = arith.addf %49, %50 : vector<1x128xf32>
    %52 = vector.extract_strided_slice %51 {offsets = [0, 0], sizes = [1, 32], strides = [1, 1]} : vector<1x128xf32> to vector<1x32xf32>
    %53 = arith.negf %52 : vector<1x32xf32>
    %54 = math.exp %53 : vector<1x32xf32>
    %cst_47 = arith.constant 1.000000e+00 : f32
    %55 = vector.broadcast %cst_47 : f32 to vector<1x32xf32>
    %56 = arith.addf %55, %54 : vector<1x32xf32>
    %57 = arith.divf %55, %56 : vector<1x32xf32>
    %58 = vector.extract_strided_slice %51 {offsets = [0, 32], sizes = [1, 32], strides = [1, 1]} : vector<1x128xf32> to vector<1x32xf32>
    %59 = arith.negf %58 : vector<1x32xf32>
    %60 = math.exp %59 : vector<1x32xf32>
    %cst_48 = arith.constant 1.000000e+00 : f32
    %61 = vector.broadcast %cst_48 : f32 to vector<1x32xf32>
    %62 = arith.addf %61, %60 : vector<1x32xf32>
    %63 = arith.divf %61, %62 : vector<1x32xf32>
    %64 = vector.extract_strided_slice %51 {offsets = [0, 64], sizes = [1, 32], strides = [1, 1]} : vector<1x128xf32> to vector<1x32xf32>
    %65 = math.tanh %64 : vector<1x32xf32>
    %66 = vector.extract_strided_slice %51 {offsets = [0, 96], sizes = [1, 32], strides = [1, 1]} : vector<1x128xf32> to vector<1x32xf32>
    %67 = arith.negf %66 : vector<1x32xf32>
    %68 = math.exp %67 : vector<1x32xf32>
    %cst_49 = arith.constant 1.000000e+00 : f32
    %69 = vector.broadcast %cst_49 : f32 to vector<1x32xf32>
    %70 = arith.addf %69, %68 : vector<1x32xf32>
    %71 = arith.divf %69, %70 : vector<1x32xf32>
    %72 = arith.mulf %63, %48 : vector<1x32xf32>
    %73 = arith.mulf %57, %65 : vector<1x32xf32>
    %74 = arith.addf %72, %73 : vector<1x32xf32>
    %75 = math.tanh %74 : vector<1x32xf32>
    %76 = arith.mulf %71, %75 : vector<1x32xf32>
    %c0_50 = arith.constant 0 : index
    %c0_51 = arith.constant 0 : index
    %77 = vector.load %arg24[%c0_50, %c0_51] : memref<8x32xf32, #tpu.memory_space<vmem>>, vector<1x32xf32>
    tpu.vector_store %arg24[%c0_50, %c0_51], %76 {strides = array<i32>} : memref<8x32xf32, #tpu.memory_space<vmem>>, vector<1x32xf32>,
    %78 = vector.extract_strided_slice %45 {offsets = [1, 0], sizes = [1, 128], strides = [1, 1]} : vector<8x128xf32> to vector<1x128xf32>
    %cst_52 = arith.constant dense<0.000000e+00> : vector<1x128xf32>
    %79 = tpu.matmul %76, %46, %cst_52 {dimension_numbers = #tpu.dot_dimension_numbers<[1], [0], [0], [1], [0, 0, 1, 1], [], []>} : vector<1x32xf32>, vector<32x128xf32>, vector<1x128xf32> -> vector<1x128xf32>
    %80 = arith.addf %78, %79 : vector<1x128xf32>
    %81 = vector.extract_strided_slice %80 {offsets = [0, 0], sizes = [1, 32], strides = [1, 1]} : vector<1x128xf32> to vector<1x32xf32>
    %82 = arith.negf %81 : vector<1x32xf32>
    %83 = math.exp %82 : vector<1x32xf32>
    %cst_53 = arith.constant 1.000000e+00 : f32
    %84 = vector.broadcast %cst_53 : f32 to vector<1x32xf32>
    %85 = arith.addf %84, %83 : vector<1x32xf32>
    %86 = arith.divf %84, %85 : vector<1x32xf32>
    %87 = vector.extract_strided_slice %80 {offsets = [0, 32], sizes = [1, 32], strides = [1, 1]} : vector<1x128xf32> to vector<1x32xf32>
    %88 = arith.negf %87 : vector<1x32xf32>
    %89 = math.exp %88 : vector<1x32xf32>
    %cst_54 = arith.constant 1.000000e+00 : f32
    %90 = vector.broadcast %cst_54 : f32 to vector<1x32xf32>
    %91 = arith.addf %90, %89 : vector<1x32xf32>
    %92 = arith.divf %90, %91 : vector<1x32xf32>
    %93 = vector.extract_strided_slice %80 {offsets = [0, 64], sizes = [1, 32], strides = [1, 1]} : vector<1x128xf32> to vector<1x32xf32>
    %94 = math.tanh %93 : vector<1x32xf32>
    %95 = vector.extract_strided_slice %80 {offsets = [0, 96], sizes = [1, 32], strides = [1, 1]} : vector<1x128xf32> to vector<1x32xf32>
    %96 = arith.negf %95 : vector<1x32xf32>
    %97 = math.exp %96 : vector<1x32xf32>
    %cst_55 = arith.constant 1.000000e+00 : f32
    %98 = vector.broadcast %cst_55 : f32 to vector<1x32xf32>
    %99 = arith.addf %98, %97 : vector<1x32xf32>
    %100 = arith.divf %98, %99 : vector<1x32xf32>
    %101 = arith.mulf %92, %74 : vector<1x32xf32>
    %102 = arith.mulf %86, %94 : vector<1x32xf32>
    %103 = arith.addf %101, %102 : vector<1x32xf32>
    %104 = math.tanh %103 : vector<1x32xf32>
    %105 = arith.mulf %100, %104 : vector<1x32xf32>
    %c1 = arith.constant 1 : index
    %c0_56 = arith.constant 0 : index
    %106 = vector.load %arg24[%c1, %c0_56] : memref<8x32xf32, #tpu.memory_space<vmem>>, vector<1x32xf32>
    tpu.vector_store %arg24[%c1, %c0_56], %105 {strides = array<i32>} : memref<8x32xf32, #tpu.memory_space<vmem>>, vector<1x32xf32>,
    %107 = vector.extract_strided_slice %45 {offsets = [2, 0], sizes = [1, 128], strides = [1, 1]} : vector<8x128xf32> to vector<1x128xf32>
    %cst_57 = arith.constant dense<0.000000e+00> : vector<1x128xf32>
    %108 = tpu.matmul %105, %46, %cst_57 {dimension_numbers = #tpu.dot_dimension_numbers<[1], [0], [0], [1], [0, 0, 1, 1], [], []>} : vector<1x32xf32>, vector<32x128xf32>, vector<1x128xf32> -> vector<1x128xf32>
    %109 = arith.addf %107, %108 : vector<1x128xf32>
    %110 = vector.extract_strided_slice %109 {offsets = [0, 0], sizes = [1, 32], strides = [1, 1]} : vector<1x128xf32> to vector<1x32xf32>
    %111 = arith.negf %110 : vector<1x32xf32>
    %112 = math.exp %111 : vector<1x32xf32>
    %cst_58 = arith.constant 1.000000e+00 : f32
    %113 = vector.broadcast %cst_58 : f32 to vector<1x32xf32>
    %114 = arith.addf %113, %112 : vector<1x32xf32>
    %115 = arith.divf %113, %114 : vector<1x32xf32>
    %116 = vector.extract_strided_slice %109 {offsets = [0, 32], sizes = [1, 32], strides = [1, 1]} : vector<1x128xf32> to vector<1x32xf32>
    %117 = arith.negf %116 : vector<1x32xf32>
    %118 = math.exp %117 : vector<1x32xf32>
    %cst_59 = arith.constant 1.000000e+00 : f32
    %119 = vector.broadcast %cst_59 : f32 to vector<1x32xf32>
    %120 = arith.addf %119, %118 : vector<1x32xf32>
    %121 = arith.divf %119, %120 : vector<1x32xf32>
    %122 = vector.extract_strided_slice %109 {offsets = [0, 64], sizes = [1, 32], strides = [1, 1]} : vector<1x128xf32> to vector<1x32xf32>
    %123 = math.tanh %122 : vector<1x32xf32>
    %124 = vector.extract_strided_slice %109 {offsets = [0, 96], sizes = [1, 32], strides = [1, 1]} : vector<1x128xf32> to vector<1x32xf32>
    %125 = arith.negf %124 : vector<1x32xf32>
    %126 = math.exp %125 : vector<1x32xf32>
    %cst_60 = arith.constant 1.000000e+00 : f32
    %127 = vector.broadcast %cst_60 : f32 to vector<1x32xf32>
    %128 = arith.addf %127, %126 : vector<1x32xf32>
    %129 = arith.divf %127, %128 : vector<1x32xf32>
    %130 = arith.mulf %121, %103 : vector<1x32xf32>
    %131 = arith.mulf %115, %123 : vector<1x32xf32>
    %132 = arith.addf %130, %131 : vector<1x32xf32>
    %133 = math.tanh %132 : vector<1x32xf32>
    %134 = arith.mulf %129, %133 : vector<1x32xf32>
    %c2 = arith.constant 2 : index
    %c0_61 = arith.constant 0 : index
    %135 = vector.load %arg24[%c2, %c0_61] : memref<8x32xf32, #tpu.memory_space<vmem>>, vector<1x32xf32>
    tpu.vector_store %arg24[%c2, %c0_61], %134 {strides = array<i32>} : memref<8x32xf32, #tpu.memory_space<vmem>>, vector<1x32xf32>,
    %136 = vector.extract_strided_slice %45 {offsets = [3, 0], sizes = [1, 128], strides = [1, 1]} : vector<8x128xf32> to vector<1x128xf32>
    %cst_62 = arith.constant dense<0.000000e+00> : vector<1x128xf32>
    %137 = tpu.matmul %134, %46, %cst_62 {dimension_numbers = #tpu.dot_dimension_numbers<[1], [0], [0], [1], [0, 0, 1, 1], [], []>} : vector<1x32xf32>, vector<32x128xf32>, vector<1x128xf32> -> vector<1x128xf32>
    %138 = arith.addf %136, %137 : vector<1x128xf32>
    %139 = vector.extract_strided_slice %138 {offsets = [0, 0], sizes = [1, 32], strides = [1, 1]} : vector<1x128xf32> to vector<1x32xf32>
    %140 = arith.negf %139 : vector<1x32xf32>
    %141 = math.exp %140 : vector<1x32xf32>
    %cst_63 = arith.constant 1.000000e+00 : f32
    %142 = vector.broadcast %cst_63 : f32 to vector<1x32xf32>
    %143 = arith.addf %142, %141 : vector<1x32xf32>
    %144 = arith.divf %142, %143 : vector<1x32xf32>
    %145 = vector.extract_strided_slice %138 {offsets = [0, 32], sizes = [1, 32], strides = [1, 1]} : vector<1x128xf32> to vector<1x32xf32>
    %146 = arith.negf %145 : vector<1x32xf32>
    %147 = math.exp %146 : vector<1x32xf32>
    %cst_64 = arith.constant 1.000000e+00 : f32
    %148 = vector.broadcast %cst_64 : f32 to vector<1x32xf32>
    %149 = arith.addf %148, %147 : vector<1x32xf32>
    %150 = arith.divf %148, %149 : vector<1x32xf32>
    %151 = vector.extract_strided_slice %138 {offsets = [0, 64], sizes = [1, 32], strides = [1, 1]} : vector<1x128xf32> to vector<1x32xf32>
    %152 = math.tanh %151 : vector<1x32xf32>
    %153 = vector.extract_strided_slice %138 {offsets = [0, 96], sizes = [1, 32], strides = [1, 1]} : vector<1x128xf32> to vector<1x32xf32>
    %154 = arith.negf %153 : vector<1x32xf32>
    %155 = math.exp %154 : vector<1x32xf32>
    %cst_65 = arith.constant 1.000000e+00 : f32
    %156 = vector.broadcast %cst_65 : f32 to vector<1x32xf32>
    %157 = arith.addf %156, %155 : vector<1x32xf32>
    %158 = arith.divf %156, %157 : vector<1x32xf32>
    %159 = arith.mulf %150, %132 : vector<1x32xf32>
    %160 = arith.mulf %144, %152 : vector<1x32xf32>
    %161 = arith.addf %159, %160 : vector<1x32xf32>
    %162 = math.tanh %161 : vector<1x32xf32>
    %163 = arith.mulf %158, %162 : vector<1x32xf32>
    %c3 = arith.constant 3 : index
    %c0_66 = arith.constant 0 : index
    %164 = vector.load %arg24[%c3, %c0_66] : memref<8x32xf32, #tpu.memory_space<vmem>>, vector<1x32xf32>
    tpu.vector_store %arg24[%c3, %c0_66], %163 {strides = array<i32>} : memref<8x32xf32, #tpu.memory_space<vmem>>, vector<1x32xf32>,
    %165 = vector.extract_strided_slice %45 {offsets = [4, 0], sizes = [1, 128], strides = [1, 1]} : vector<8x128xf32> to vector<1x128xf32>
    %cst_67 = arith.constant dense<0.000000e+00> : vector<1x128xf32>
    %166 = tpu.matmul %163, %46, %cst_67 {dimension_numbers = #tpu.dot_dimension_numbers<[1], [0], [0], [1], [0, 0, 1, 1], [], []>} : vector<1x32xf32>, vector<32x128xf32>, vector<1x128xf32> -> vector<1x128xf32>
    %167 = arith.addf %165, %166 : vector<1x128xf32>
    %168 = vector.extract_strided_slice %167 {offsets = [0, 0], sizes = [1, 32], strides = [1, 1]} : vector<1x128xf32> to vector<1x32xf32>
    %169 = arith.negf %168 : vector<1x32xf32>
    %170 = math.exp %169 : vector<1x32xf32>
    %cst_68 = arith.constant 1.000000e+00 : f32
    %171 = vector.broadcast %cst_68 : f32 to vector<1x32xf32>
    %172 = arith.addf %171, %170 : vector<1x32xf32>
    %173 = arith.divf %171, %172 : vector<1x32xf32>
    %174 = vector.extract_strided_slice %167 {offsets = [0, 32], sizes = [1, 32], strides = [1, 1]} : vector<1x128xf32> to vector<1x32xf32>
    %175 = arith.negf %174 : vector<1x32xf32>
    %176 = math.exp %175 : vector<1x32xf32>
    %cst_69 = arith.constant 1.000000e+00 : f32
    %177 = vector.broadcast %cst_69 : f32 to vector<1x32xf32>
    %178 = arith.addf %177, %176 : vector<1x32xf32>
    %179 = arith.divf %177, %178 : vector<1x32xf32>
    %180 = vector.extract_strided_slice %167 {offsets = [0, 64], sizes = [1, 32], strides = [1, 1]} : vector<1x128xf32> to vector<1x32xf32>
    %181 = math.tanh %180 : vector<1x32xf32>
    %182 = vector.extract_strided_slice %167 {offsets = [0, 96], sizes = [1, 32], strides = [1, 1]} : vector<1x128xf32> to vector<1x32xf32>
    %183 = arith.negf %182 : vector<1x32xf32>
    %184 = math.exp %183 : vector<1x32xf32>
    %cst_70 = arith.constant 1.000000e+00 : f32
    %185 = vector.broadcast %cst_70 : f32 to vector<1x32xf32>
    %186 = arith.addf %185, %184 : vector<1x32xf32>
    %187 = arith.divf %185, %186 : vector<1x32xf32>
    %188 = arith.mulf %179, %161 : vector<1x32xf32>
    %189 = arith.mulf %173, %181 : vector<1x32xf32>
    %190 = arith.addf %188, %189 : vector<1x32xf32>
    %191 = math.tanh %190 : vector<1x32xf32>
    %192 = arith.mulf %187, %191 : vector<1x32xf32>
    %c4 = arith.constant 4 : index
    %c0_71 = arith.constant 0 : index
    %193 = vector.load %arg24[%c4, %c0_71] : memref<8x32xf32, #tpu.memory_space<vmem>>, vector<1x32xf32>
    tpu.vector_store %arg24[%c4, %c0_71], %192 {strides = array<i32>} : memref<8x32xf32, #tpu.memory_space<vmem>>, vector<1x32xf32>,
    %194 = vector.extract_strided_slice %45 {offsets = [5, 0], sizes = [1, 128], strides = [1, 1]} : vector<8x128xf32> to vector<1x128xf32>
    %cst_72 = arith.constant dense<0.000000e+00> : vector<1x128xf32>
    %195 = tpu.matmul %192, %46, %cst_72 {dimension_numbers = #tpu.dot_dimension_numbers<[1], [0], [0], [1], [0, 0, 1, 1], [], []>} : vector<1x32xf32>, vector<32x128xf32>, vector<1x128xf32> -> vector<1x128xf32>
    %196 = arith.addf %194, %195 : vector<1x128xf32>
    %197 = vector.extract_strided_slice %196 {offsets = [0, 0], sizes = [1, 32], strides = [1, 1]} : vector<1x128xf32> to vector<1x32xf32>
    %198 = arith.negf %197 : vector<1x32xf32>
    %199 = math.exp %198 : vector<1x32xf32>
    %cst_73 = arith.constant 1.000000e+00 : f32
    %200 = vector.broadcast %cst_73 : f32 to vector<1x32xf32>
    %201 = arith.addf %200, %199 : vector<1x32xf32>
    %202 = arith.divf %200, %201 : vector<1x32xf32>
    %203 = vector.extract_strided_slice %196 {offsets = [0, 32], sizes = [1, 32], strides = [1, 1]} : vector<1x128xf32> to vector<1x32xf32>
    %204 = arith.negf %203 : vector<1x32xf32>
    %205 = math.exp %204 : vector<1x32xf32>
    %cst_74 = arith.constant 1.000000e+00 : f32
    %206 = vector.broadcast %cst_74 : f32 to vector<1x32xf32>
    %207 = arith.addf %206, %205 : vector<1x32xf32>
    %208 = arith.divf %206, %207 : vector<1x32xf32>
    %209 = vector.extract_strided_slice %196 {offsets = [0, 64], sizes = [1, 32], strides = [1, 1]} : vector<1x128xf32> to vector<1x32xf32>
    %210 = math.tanh %209 : vector<1x32xf32>
    %211 = vector.extract_strided_slice %196 {offsets = [0, 96], sizes = [1, 32], strides = [1, 1]} : vector<1x128xf32> to vector<1x32xf32>
    %212 = arith.negf %211 : vector<1x32xf32>
    %213 = math.exp %212 : vector<1x32xf32>
    %cst_75 = arith.constant 1.000000e+00 : f32
    %214 = vector.broadcast %cst_75 : f32 to vector<1x32xf32>
    %215 = arith.addf %214, %213 : vector<1x32xf32>
    %216 = arith.divf %214, %215 : vector<1x32xf32>
    %217 = arith.mulf %208, %190 : vector<1x32xf32>
    %218 = arith.mulf %202, %210 : vector<1x32xf32>
    %219 = arith.addf %217, %218 : vector<1x32xf32>
    %220 = math.tanh %219 : vector<1x32xf32>
    %221 = arith.mulf %216, %220 : vector<1x32xf32>
    %c5 = arith.constant 5 : index
    %c0_76 = arith.constant 0 : index
    %222 = vector.load %arg24[%c5, %c0_76] : memref<8x32xf32, #tpu.memory_space<vmem>>, vector<1x32xf32>
    tpu.vector_store %arg24[%c5, %c0_76], %221 {strides = array<i32>} : memref<8x32xf32, #tpu.memory_space<vmem>>, vector<1x32xf32>,
    %223 = vector.extract_strided_slice %45 {offsets = [6, 0], sizes = [1, 128], strides = [1, 1]} : vector<8x128xf32> to vector<1x128xf32>
    %cst_77 = arith.constant dense<0.000000e+00> : vector<1x128xf32>
    %224 = tpu.matmul %221, %46, %cst_77 {dimension_numbers = #tpu.dot_dimension_numbers<[1], [0], [0], [1], [0, 0, 1, 1], [], []>} : vector<1x32xf32>, vector<32x128xf32>, vector<1x128xf32> -> vector<1x128xf32>
    %225 = arith.addf %223, %224 : vector<1x128xf32>
    %226 = vector.extract_strided_slice %225 {offsets = [0, 0], sizes = [1, 32], strides = [1, 1]} : vector<1x128xf32> to vector<1x32xf32>
    %227 = arith.negf %226 : vector<1x32xf32>
    %228 = math.exp %227 : vector<1x32xf32>
    %cst_78 = arith.constant 1.000000e+00 : f32
    %229 = vector.broadcast %cst_78 : f32 to vector<1x32xf32>
    %230 = arith.addf %229, %228 : vector<1x32xf32>
    %231 = arith.divf %229, %230 : vector<1x32xf32>
    %232 = vector.extract_strided_slice %225 {offsets = [0, 32], sizes = [1, 32], strides = [1, 1]} : vector<1x128xf32> to vector<1x32xf32>
    %233 = arith.negf %232 : vector<1x32xf32>
    %234 = math.exp %233 : vector<1x32xf32>
    %cst_79 = arith.constant 1.000000e+00 : f32
    %235 = vector.broadcast %cst_79 : f32 to vector<1x32xf32>
    %236 = arith.addf %235, %234 : vector<1x32xf32>
    %237 = arith.divf %235, %236 : vector<1x32xf32>
    %238 = vector.extract_strided_slice %225 {offsets = [0, 64], sizes = [1, 32], strides = [1, 1]} : vector<1x128xf32> to vector<1x32xf32>
    %239 = math.tanh %238 : vector<1x32xf32>
    %240 = vector.extract_strided_slice %225 {offsets = [0, 96], sizes = [1, 32], strides = [1, 1]} : vector<1x128xf32> to vector<1x32xf32>
    %241 = arith.negf %240 : vector<1x32xf32>
    %242 = math.exp %241 : vector<1x32xf32>
    %cst_80 = arith.constant 1.000000e+00 : f32
    %243 = vector.broadcast %cst_80 : f32 to vector<1x32xf32>
    %244 = arith.addf %243, %242 : vector<1x32xf32>
    %245 = arith.divf %243, %244 : vector<1x32xf32>
    %246 = arith.mulf %237, %219 : vector<1x32xf32>
    %247 = arith.mulf %231, %239 : vector<1x32xf32>
    %248 = arith.addf %246, %247 : vector<1x32xf32>
    %249 = math.tanh %248 : vector<1x32xf32>
    %250 = arith.mulf %245, %249 : vector<1x32xf32>
    %c6 = arith.constant 6 : index
    %c0_81 = arith.constant 0 : index
    %251 = vector.load %arg24[%c6, %c0_81] : memref<8x32xf32, #tpu.memory_space<vmem>>, vector<1x32xf32>
    tpu.vector_store %arg24[%c6, %c0_81], %250 {strides = array<i32>} : memref<8x32xf32, #tpu.memory_space<vmem>>, vector<1x32xf32>,
    %252 = vector.extract_strided_slice %45 {offsets = [7, 0], sizes = [1, 128], strides = [1, 1]} : vector<8x128xf32> to vector<1x128xf32>
    %cst_82 = arith.constant dense<0.000000e+00> : vector<1x128xf32>
    %253 = tpu.matmul %250, %46, %cst_82 {dimension_numbers = #tpu.dot_dimension_numbers<[1], [0], [0], [1], [0, 0, 1, 1], [], []>} : vector<1x32xf32>, vector<32x128xf32>, vector<1x128xf32> -> vector<1x128xf32>
    %254 = arith.addf %252, %253 : vector<1x128xf32>
    %255 = vector.extract_strided_slice %254 {offsets = [0, 0], sizes = [1, 32], strides = [1, 1]} : vector<1x128xf32> to vector<1x32xf32>
    %256 = arith.negf %255 : vector<1x32xf32>
    %257 = math.exp %256 : vector<1x32xf32>
    %cst_83 = arith.constant 1.000000e+00 : f32
    %258 = vector.broadcast %cst_83 : f32 to vector<1x32xf32>
    %259 = arith.addf %258, %257 : vector<1x32xf32>
    %260 = arith.divf %258, %259 : vector<1x32xf32>
    %261 = vector.extract_strided_slice %254 {offsets = [0, 32], sizes = [1, 32], strides = [1, 1]} : vector<1x128xf32> to vector<1x32xf32>
    %262 = arith.negf %261 : vector<1x32xf32>
    %263 = math.exp %262 : vector<1x32xf32>
    %cst_84 = arith.constant 1.000000e+00 : f32
    %264 = vector.broadcast %cst_84 : f32 to vector<1x32xf32>
    %265 = arith.addf %264, %263 : vector<1x32xf32>
    %266 = arith.divf %264, %265 : vector<1x32xf32>
    %267 = vector.extract_strided_slice %254 {offsets = [0, 64], sizes = [1, 32], strides = [1, 1]} : vector<1x128xf32> to vector<1x32xf32>
    %268 = math.tanh %267 : vector<1x32xf32>
    %269 = vector.extract_strided_slice %254 {offsets = [0, 96], sizes = [1, 32], strides = [1, 1]} : vector<1x128xf32> to vector<1x32xf32>
    %270 = arith.negf %269 : vector<1x32xf32>
    %271 = math.exp %270 : vector<1x32xf32>
    %cst_85 = arith.constant 1.000000e+00 : f32
    %272 = vector.broadcast %cst_85 : f32 to vector<1x32xf32>
    %273 = arith.addf %272, %271 : vector<1x32xf32>
    %274 = arith.divf %272, %273 : vector<1x32xf32>
    %275 = arith.mulf %266, %248 : vector<1x32xf32>
    %276 = arith.mulf %260, %268 : vector<1x32xf32>
    %277 = arith.addf %275, %276 : vector<1x32xf32>
    %278 = math.tanh %277 : vector<1x32xf32>
    %279 = arith.mulf %274, %278 : vector<1x32xf32>
    %c7 = arith.constant 7 : index
    %c0_86 = arith.constant 0 : index
    %280 = vector.load %arg24[%c7, %c0_86] : memref<8x32xf32, #tpu.memory_space<vmem>>, vector<1x32xf32>
    tpu.vector_store %arg24[%c7, %c0_86], %279 {strides = array<i32>} : memref<8x32xf32, #tpu.memory_space<vmem>>, vector<1x32xf32>,
    %c0_87 = arith.constant 0 : index
    %c0_88 = arith.constant 0 : index
    %281 = vector.load %arg24[%c0_87, %c0_88] : memref<8x32xf32, #tpu.memory_space<vmem>>, vector<8x32xf32>
    %cst_89 = arith.constant 0.000000e+00 : f32
    %282 = vector.broadcast %cst_89 : f32 to vector<8x32xf32>
    %283 = arith.maximumf %281, %282 : vector<8x32xf32>
    %c0_90 = arith.constant 0 : index
    %c0_91 = arith.constant 0 : index
    %284 = vector.load %arg16[%c0_90, %c0_91] : memref<32x5xf32, #tpu.memory_space<vmem>>, vector<32x5xf32>
    %cst_92 = arith.constant dense<0.000000e+00> : vector<8x5xf32>
    %285 = tpu.matmul %283, %284, %cst_92 {dimension_numbers = #tpu.dot_dimension_numbers<[1], [0], [0], [1], [0, 0, 1, 1], [], []>} : vector<8x32xf32>, vector<32x5xf32>, vector<8x5xf32> -> vector<8x5xf32>
    %c0_93 = arith.constant 0 : index
    %c0_94 = arith.constant 0 : index
    %286 = vector.load %arg17[%c0_93, %c0_94] : memref<1x5xf32, #tpu.memory_space<vmem>>, vector<1x5xf32>
    %287 = vector.broadcast %286 : vector<1x5xf32> to vector<8x5xf32>
    %288 = arith.addf %285, %287 : vector<8x5xf32>
    %cst_95 = arith.constant dense<0xFF800000> : vector<8xf32>
    %289 = vector.multi_reduction <maximumf>, %288, %cst_95 [1] : vector<8x5xf32> to vector<8xf32>
    %290 = vector.shape_cast %289 : vector<8xf32> to vector<8x1xf32>
    %291 = vector.broadcast %290 : vector<8x1xf32> to vector<8x5xf32>
    %292 = arith.subf %288, %291 : vector<8x5xf32>
    %293 = math.exp %292 : vector<8x5xf32>
    %cst_96 = arith.constant dense<0.000000e+00> : vector<8xf32>
    %294 = vector.multi_reduction <add>, %293, %cst_96 [1] : vector<8x5xf32> to vector<8xf32>
    %295 = vector.shape_cast %294 : vector<8xf32> to vector<8x1xf32>
    %296 = math.log %295 : vector<8x1xf32>
    %297 = vector.broadcast %296 : vector<8x1xf32> to vector<8x5xf32>
    %298 = arith.subf %292, %297 : vector<8x5xf32>
    %c0_97 = arith.constant 0 : index
    %c0_98 = arith.constant 0 : index
    %c0_99 = arith.constant 0 : index
    %299 = vector.load %arg22[%c0_97, %c0_98, %c0_99] : memref<1x8x5xf32, #tpu.memory_space<vmem>>, vector<1x8x5xf32>
    %300 = vector.shape_cast %299 : vector<1x8x5xf32> to vector<8x5xf32>
    %301 = vector.shape_cast %298 : vector<8x5xf32> to vector<1x8x5xf32>
    tpu.vector_store %arg22[%c0_97, %c0_98, %c0_99], %301 {strides = array<i32>} : memref<1x8x5xf32, #tpu.memory_space<vmem>>, vector<1x8x5xf32>,
    %cst_100 = arith.constant 0.000000e+00 : f32
    %302 = vector.broadcast %cst_100 : f32 to vector<8x5xf32>
    %303 = arith.maximumf %288, %302 : vector<8x5xf32>
    %c0_101 = arith.constant 0 : index
    %c0_102 = arith.constant 0 : index
    %304 = vector.load %arg18[%c0_101, %c0_102] : memref<5x5xf32, #tpu.memory_space<vmem>>, vector<5x5xf32>
    %cst_103 = arith.constant dense<0.000000e+00> : vector<8x5xf32>
    %305 = tpu.matmul %303, %304, %cst_103 {dimension_numbers = #tpu.dot_dimension_numbers<[1], [0], [0], [1], [0, 0, 1, 1], [], []>} : vector<8x5xf32>, vector<5x5xf32>, vector<8x5xf32> -> vector<8x5xf32>
    %c0_104 = arith.constant 0 : index
    %c0_105 = arith.constant 0 : index
    %306 = vector.load %arg19[%c0_104, %c0_105] : memref<32x5xf32, #tpu.memory_space<vmem>>, vector<32x5xf32>
    %cst_106 = arith.constant dense<0.000000e+00> : vector<8x5xf32>
    %307 = tpu.matmul %35, %306, %cst_106 {dimension_numbers = #tpu.dot_dimension_numbers<[1], [0], [0], [1], [0, 0, 1, 1], [], []>} : vector<8x32xf32>, vector<32x5xf32>, vector<8x5xf32> -> vector<8x5xf32>
    %308 = arith.addf %305, %307 : vector<8x5xf32>
    %c0_107 = arith.constant 0 : index
    %c0_108 = arith.constant 0 : index
    %309 = vector.load %arg20[%c0_107, %c0_108] : memref<32x5xf32, #tpu.memory_space<vmem>>, vector<32x5xf32>
    %cst_109 = arith.constant dense<0.000000e+00> : vector<8x5xf32>
    %310 = tpu.matmul %37, %309, %cst_109 {dimension_numbers = #tpu.dot_dimension_numbers<[1], [0], [0], [1], [0, 0, 1, 1], [], []>} : vector<8x32xf32>, vector<32x5xf32>, vector<8x5xf32> -> vector<8x5xf32>
    %311 = arith.addf %308, %310 : vector<8x5xf32>
    %c0_110 = arith.constant 0 : index
    %c0_111 = arith.constant 0 : index
    %312 = vector.load %arg21[%c0_110, %c0_111] : memref<1x5xf32, #tpu.memory_space<vmem>>, vector<1x5xf32>
    %313 = vector.broadcast %312 : vector<1x5xf32> to vector<8x5xf32>
    %314 = arith.addf %311, %313 : vector<8x5xf32>
    %cst_112 = arith.constant dense<0xFF800000> : vector<8xf32>
    %315 = vector.multi_reduction <maximumf>, %314, %cst_112 [1] : vector<8x5xf32> to vector<8xf32>
    %316 = vector.shape_cast %315 : vector<8xf32> to vector<8x1xf32>
    %317 = vector.broadcast %316 : vector<8x1xf32> to vector<8x5xf32>
    %318 = arith.subf %314, %317 : vector<8x5xf32>
    %319 = math.exp %318 : vector<8x5xf32>
    %cst_113 = arith.constant dense<0.000000e+00> : vector<8xf32>
    %320 = vector.multi_reduction <add>, %319, %cst_113 [1] : vector<8x5xf32> to vector<8xf32>
    %321 = vector.shape_cast %320 : vector<8xf32> to vector<8x1xf32>
    %322 = math.log %321 : vector<8x1xf32>
    %323 = vector.broadcast %322 : vector<8x1xf32> to vector<8x5xf32>
    %324 = arith.subf %318, %323 : vector<8x5xf32>
    %c0_114 = arith.constant 0 : index
    %c0_115 = arith.constant 0 : index
    %c0_116 = arith.constant 0 : index
    %325 = vector.load %arg23[%c0_114, %c0_115, %c0_116] : memref<1x8x5xf32, #tpu.memory_space<vmem>>, vector<1x8x5xf32>
    %326 = vector.shape_cast %325 : vector<1x8x5xf32> to vector<8x5xf32>
    %327 = vector.shape_cast %324 : vector<8x5xf32> to vector<1x8x5xf32>
    tpu.vector_store %arg23[%c0_114, %c0_115, %c0_116], %327 {strides = array<i32>} : memref<1x8x5xf32, #tpu.memory_space<vmem>>, vector<1x8x5xf32>,
    return
  }
  func.func @transform_0(%arg0: i32) -> (i32, i32, i32) {
    %c0_i32 = arith.constant 0 : i32
    %c0_i32_0 = arith.constant 0 : i32
    %c0_i32_1 = arith.constant 0 : i32
    return %arg0, %c0_i32, %c0_i32_0 : i32, i32, i32
  }
  func.func @transform_1(%arg0: i32) -> (i32, i32, i32) {
    %c0_i32 = arith.constant 0 : i32
    %c0_i32_0 = arith.constant 0 : i32
    %c0_i32_1 = arith.constant 0 : i32
    return %arg0, %c0_i32, %c0_i32_0 : i32, i32, i32
  }
  func.func @transform_2(%arg0: i32) -> (i32, i32) {
    %c0_i32 = arith.constant 0 : i32
    %c0_i32_0 = arith.constant 0 : i32
    %c0_i32_1 = arith.constant 0 : i32
    return %c0_i32, %c0_i32_0 : i32, i32
  }
  func.func @transform_3(%arg0: i32) -> (i32, i32) {
    %c0_i32 = arith.constant 0 : i32
    %c0_i32_0 = arith.constant 0 : i32
    %c0_i32_1 = arith.constant 0 : i32
    return %c0_i32, %c0_i32_0 : i32, i32
  }
  func.func @transform_4(%arg0: i32) -> (i32, i32) {
    %c0_i32 = arith.constant 0 : i32
    %c0_i32_0 = arith.constant 0 : i32
    %c0_i32_1 = arith.constant 0 : i32
    return %c0_i32, %c0_i32_0 : i32, i32
  }
  func.func @transform_5(%arg0: i32) -> (i32, i32) {
    %c0_i32 = arith.constant 0 : i32
    %c0_i32_0 = arith.constant 0 : i32
    %c0_i32_1 = arith.constant 0 : i32
    return %c0_i32, %c0_i32_0 : i32, i32
  }
  func.func @transform_6(%arg0: i32) -> (i32, i32) {
    %c0_i32 = arith.constant 0 : i32
    %c0_i32_0 = arith.constant 0 : i32
    %c0_i32_1 = arith.constant 0 : i32
    return %c0_i32, %c0_i32_0 : i32, i32
  }
  func.func @transform_7(%arg0: i32) -> (i32, i32) {
    %c0_i32 = arith.constant 0 : i32
    %c0_i32_0 = arith.constant 0 : i32
    %c0_i32_1 = arith.constant 0 : i32
    return %c0_i32, %c0_i32_0 : i32, i32
  }
  func.func @transform_8(%arg0: i32) -> (i32, i32) {
    %c0_i32 = arith.constant 0 : i32
    %c0_i32_0 = arith.constant 0 : i32
    %c0_i32_1 = arith.constant 0 : i32
    return %c0_i32, %c0_i32_0 : i32, i32
  }
  func.func @transform_9(%arg0: i32) -> (i32, i32) {
    %c0_i32 = arith.constant 0 : i32
    %c0_i32_0 = arith.constant 0 : i32
    %c0_i32_1 = arith.constant 0 : i32
    return %c0_i32, %c0_i32_0 : i32, i32
  }
  func.func @transform_10(%arg0: i32) -> (i32, i32) {
    %c0_i32 = arith.constant 0 : i32
    %c0_i32_0 = arith.constant 0 : i32
    %c0_i32_1 = arith.constant 0 : i32
    return %c0_i32, %c0_i32_0 : i32, i32
  }
  func.func @transform_11(%arg0: i32) -> (i32, i32) {
    %c0_i32 = arith.constant 0 : i32
    %c0_i32_0 = arith.constant 0 : i32
    %c0_i32_1 = arith.constant 0 : i32
    return %c0_i32, %c0_i32_0 : i32, i32
  }
  func.func @transform_12(%arg0: i32) -> (i32, i32) {
    %c0_i32 = arith.constant 0 : i32
    %c0_i32_0 = arith.constant 0 : i32
    %c0_i32_1 = arith.constant 0 : i32
    return %c0_i32, %c0_i32_0 : i32, i32
  }
  func.func @transform_13(%arg0: i32) -> (i32, i32) {
    %c0_i32 = arith.constant 0 : i32
    %c0_i32_0 = arith.constant 0 : i32
    %c0_i32_1 = arith.constant 0 : i32
    return %c0_i32, %c0_i32_0 : i32, i32
  }
  func.func @transform_14(%arg0: i32) -> (i32, i32) {
    %c0_i32 = arith.constant 0 : i32
    %c0_i32_0 = arith.constant 0 : i32
    %c0_i32_1 = arith.constant 0 : i32
    return %c0_i32, %c0_i32_0 : i32, i32
  }
  func.func @transform_15(%arg0: i32) -> (i32, i32) {
    %c0_i32 = arith.constant 0 : i32
    %c0_i32_0 = arith.constant 0 : i32
    %c0_i32_1 = arith.constant 0 : i32
    return %c0_i32, %c0_i32_0 : i32, i32
  }
  func.func @transform_16(%arg0: i32) -> (i32, i32) {
    %c0_i32 = arith.constant 0 : i32
    %c0_i32_0 = arith.constant 0 : i32
    %c0_i32_1 = arith.constant 0 : i32
    return %c0_i32, %c0_i32_0 : i32, i32
  }
  func.func @transform_17(%arg0: i32) -> (i32, i32) {
    %c0_i32 = arith.constant 0 : i32
    %c0_i32_0 = arith.constant 0 : i32
    %c0_i32_1 = arith.constant 0 : i32
    return %c0_i32, %c0_i32_0 : i32, i32
  }
  func.func @transform_18(%arg0: i32) -> (i32, i32) {
    %c0_i32 = arith.constant 0 : i32
    %c0_i32_0 = arith.constant 0 : i32
    %c0_i32_1 = arith.constant 0 : i32
    return %c0_i32, %c0_i32_0 : i32, i32
  }
  func.func @transform_19(%arg0: i32) -> (i32, i32) {
    %c0_i32 = arith.constant 0 : i32
    %c0_i32_0 = arith.constant 0 : i32
    %c0_i32_1 = arith.constant 0 : i32
    return %c0_i32, %c0_i32_0 : i32, i32
  }
  func.func @transform_20(%arg0: i32) -> (i32, i32) {
    %c0_i32 = arith.constant 0 : i32
    %c0_i32_0 = arith.constant 0 : i32
    %c0_i32_1 = arith.constant 0 : i32
    return %c0_i32, %c0_i32_0 : i32, i32
  }
  func.func @transform_21(%arg0: i32) -> (i32, i32, i32) {
    %c0_i32 = arith.constant 0 : i32
    %c0_i32_0 = arith.constant 0 : i32
    %c0_i32_1 = arith.constant 0 : i32
    return %arg0, %c0_i32, %c0_i32_0 : i32, i32, i32
  }
  func.func @transform_22(%arg0: i32) -> (i32, i32, i32) {
    %c0_i32 = arith.constant 0 : i32
    %c0_i32_0 = arith.constant 0 : i32
    %c0_i32_1 = arith.constant 0 : i32
    return %arg0, %c0_i32, %c0_i32_0 : i32, i32, i32
  }
}

</mosaic_0001>

<llo_original>
// kernel: tomnet_forward.1
$region0: #{tomnet_forward.1}
  #allocation0 [shape = 'u32[]', space=smem, size = 0x4, offset = 0x4, fixed_abs, tag = 'smem constant byte address 0x4 - core index']
  #allocation1 [shape = 'u32[144,128]{1,0:T(1,128)}', space=vmem, size = 0x12000, scoped, tag = 'internal scratch']
  #allocation2 [shape = 'f32[8,32]{1,0:T(8,128)}', space=vmem, size = 0x1000, scoped, tag = 'scratch operand']
  %s0 = inlined_call_operand.vmem [shape: f32[2,27,2048], index: 0, kind: input, shape index: {}]
  %s1 = inlined_call_operand.vmem [shape: f32[2,9,2048], index: 1, kind: input, shape index: {}]
  %s2 = inlined_call_operand.vmem [shape: f32[2048,8], index: 2, kind: input, shape index: {}]
  %s3 = inlined_call_operand.vmem [shape: f32[8,27], index: 3, kind: input, shape index: {}]
  %s4 = inlined_call_operand.vmem [shape: f32[8,1], index: 4, kind: input, shape index: {}]
  %s5 = inlined_call_operand.vmem [shape: f32[8,32], index: 5, kind: input, shape index: {}]
  %s6 = inlined_call_operand.vmem [shape: f32[1,32], index: 6, kind: input, shape index: {}]
  %s7 = inlined_call_operand.vmem [shape: f32[8,9], index: 7, kind: input, shape index: {}]
  %s8 = inlined_call_operand.vmem [shape: f32[8,1], index: 8, kind: input, shape index: {}]
  %s9 = inlined_call_operand.vmem [shape: f32[8,32], index: 9, kind: input, shape index: {}]
  %s10 = inlined_call_operand.vmem [shape: f32[1,32], index: 10, kind: input, shape index: {}]
  %s11 = inlined_call_operand.vmem [shape: f32[32,128], index: 11, kind: input, shape index: {}]
  %s12 = inlined_call_operand.vmem [shape: f32[32,128], index: 12, kind: input, shape index: {}]
  %s13 = inlined_call_operand.vmem [shape: f32[32,128], index: 13, kind: input, shape index: {}]
  %s14 = inlined_call_operand.vmem [shape: f32[1,128], index: 14, kind: input, shape index: {}]
  %s15 = inlined_call_operand.vmem [shape: f32[32,5], index: 15, kind: input, shape index: {}]
  %s16 = inlined_call_operand.vmem [shape: f32[1,5], index: 16, kind: input, shape index: {}]
  %s17 = inlined_call_operand.vmem [shape: f32[5,5], index: 17, kind: input, shape index: {}]
  %s18 = inlined_call_operand.vmem [shape: f32[32,5], index: 18, kind: input, shape index: {}]
  %s19 = inlined_call_operand.vmem [shape: f32[32,5], index: 19, kind: input, shape index: {}]
  %s20 = inlined_call_operand.vmem [shape: f32[1,5], index: 20, kind: input, shape index: {}]
  %s21 = inlined_call_operand.vmem [shape: f32[2,8,5], index: 21, kind: output, shape index: {0}]
  %s22 = inlined_call_operand.vmem [shape: f32[2,8,5], index: 22, kind: output, shape index: {1}]
  %23 = xla_tuple %s21, %s22
  %s24 = sld [smem:[#allocation0]]
  $region125: #{tomnet_forward.1} parent=0
    _
  %s26 = ssub.s32 1, %s24
  %s27 = scalar_select 0, %s26, %s24
  loop: start=0, step=1, limit=4
  $region2: #{tomnet_forward.1} parent=0 // loop_pre_header
    _
  $region3: #{tomnet_forward.1} parent=0 // loop_header
    %s29 = sphi 0, %s33
    %p30 = scmp.ge.s32.totalorder %s29, 4
    %s39 = sphi 0, %s41
    %s42 = sphi 0, %s39
    %s43 = sphi 0, %s42
    %s59 = sphi 0, %s43
    %s65 = sphi 0, %s67
    %s68 = sphi 0, %s65
    %s69 = sphi 0, %s68
    %s85 = sphi 0, %s69
    %s89 = sphi 0, %s89
    %s91 = sphi 0, %s89
    %s92 = sphi 0, %s91
    %s106 = sphi 0, %s92
    %s110 = sphi 0, %s110
    %s112 = sphi 0, %s110
    %s113 = sphi 0, %s112
    %s127 = sphi 0, %s113
    %s131 = sphi 0, %s131
    %s133 = sphi 0, %s131
    %s134 = sphi 0, %s133
    %s148 = sphi 0, %s134
    %s152 = sphi 0, %s152
    %s154 = sphi 0, %s152
    %s155 = sphi 0, %s154
    %s169 = sphi 0, %s155
    %s173 = sphi 0, %s173
    %s175 = sphi 0, %s173
    %s176 = sphi 0, %s175
    %s190 = sphi 0, %s176
    %s194 = sphi 0, %s194
    %s196 = sphi 0, %s194
    %s197 = sphi 0, %s196
    %s211 = sphi 0, %s197
    %s215 = sphi 0, %s215
    %s217 = sphi 0, %s215
    %s218 = sphi 0, %s217
    %s232 = sphi 0, %s218
    %s236 = sphi 0, %s236
    %s238 = sphi 0, %s236
    %s239 = sphi 0, %s238
    %s253 = sphi 0, %s239
    %s257 = sphi 0, %s257
    %s259 = sphi 0, %s257
    %s260 = sphi 0, %s259
    %s274 = sphi 0, %s260
    %s278 = sphi 0, %s278
    %s280 = sphi 0, %s278
    %s281 = sphi 0, %s280
    %s295 = sphi 0, %s281
    %s299 = sphi 0, %s299
    %s301 = sphi 0, %s299
    %s302 = sphi 0, %s301
    %s316 = sphi 0, %s302
    %s320 = sphi 0, %s320
    %s322 = sphi 0, %s320
    %s323 = sphi 0, %s322
    %s337 = sphi 0, %s323
    %s341 = sphi 0, %s341
    %s343 = sphi 0, %s341
    %s344 = sphi 0, %s343
    %s358 = sphi 0, %s344
    %s362 = sphi 0, %s362
    %s364 = sphi 0, %s362
    %s365 = sphi 0, %s364
    %s379 = sphi 0, %s365
    %s383 = sphi 0, %s383
    %s385 = sphi 0, %s383
    %s386 = sphi 0, %s385
    %s400 = sphi 0, %s386
    %s404 = sphi 0, %s404
    %s406 = sphi 0, %s404
    %s407 = sphi 0, %s406
    %s421 = sphi 0, %s407
    %s425 = sphi 0, %s425
    %s427 = sphi 0, %s425
    %s428 = sphi 0, %s427
    %s442 = sphi 0, %s428
    %s446 = sphi 0, %s446
    %s448 = sphi 0, %s446
    %s449 = sphi 0, %s448
    %s463 = sphi 0, %s449
    %s467 = sphi 0, %s467
    %s469 = sphi 0, %s467
    %s470 = sphi 0, %s469
    %s484 = sphi 0, %s470
    %s490 = sphi 0, %s492
    %s493 = sphi 0, %s490
    %s494 = sphi 0, %s493
    %s510 = sphi 0, %s494
    %s516 = sphi 0, %s518
    %s519 = sphi 0, %s516
    %s520 = sphi 0, %s519
    %s536 = sphi 0, %s520
  $region4: #{tomnet_forward.1} parent=0 // loop_header_branch
    %32 = sbr.rel (%p30) target = $region8
  $region5: #{tomnet_forward.1} parent=0 // loop_body
    %s34 = ssub.s32 %s29, 1
    %s35 = ssub.s32 %s29, 2
    %s36 = sadd.s32 %s29, 1
    %s37 = ssub.s32 %s29, %s36
    %p38 = scmp.eq.s32.totalorder %s37, 0
    %s40 = sadd.s32 %s39, 1
    %s41 = scalar_select %p38, %s39, %s40
    %p44 = pneg %p38
    %p45 = scmp.eq.s32.totalorder %s29, 1
    %p46 = por %p44, %p45
    %p47 = scmp.ne.s32.totalorder %s39, %s42
    %p48 = scmp.eq.s32.totalorder %s29, 0
    %p49 = por %p47, %p48
    %p50 = scmp.ne.s32.totalorder %s39, %s42
    %p51 = scmp.eq.s32.totalorder %s34, 1
    %p52 = por %p50, %p51
    %p53 = scmp.ne.s32.totalorder %s42, %s43
    %p54 = scmp.eq.s32.totalorder %s34, 0
    %p55 = por %p53, %p54
    %p56 = scmp.ne.s32.totalorder %s42, %s43
    %p57 = scmp.eq.s32.totalorder %s35, 1
    %p58 = por %p56, %p57
    %p60 = scmp.ne.s32.totalorder %s43, %s59
    %p61 = scmp.eq.s32.totalorder %s35, 0
    %p62 = por %p60, %p61
    %s63 = ssub.s32 %s29, %s36
    %p64 = scmp.eq.s32.totalorder %s63, 0
    %s66 = sadd.s32 %s65, 1
    %s67 = scalar_select %p64, %s65, %s66
    %p70 = pneg %p64
    %p71 = scmp.eq.s32.totalorder %s29, 1
    %p72 = por %p70, %p71
    %p73 = scmp.ne.s32.totalorder %s65, %s68
    %p74 = scmp.eq.s32.totalorder %s29, 0
    %p75 = por %p73, %p74
    %p76 = scmp.ne.s32.totalorder %s65, %s68
    %p77 = scmp.eq.s32.totalorder %s34, 1
    %p78 = por %p76, %p77
    %p79 = scmp.ne.s32.totalorder %s68, %s69
    %p80 = scmp.eq.s32.totalorder %s34, 0
    %p81 = por %p79, %p80
    %p82 = scmp.ne.s32.totalorder %s68, %s69
    %p83 = scmp.eq.s32.totalorder %s35, 1
    %p84 = por %p82, %p83
    %p86 = scmp.ne.s32.totalorder %s69, %s85
    %p87 = scmp.eq.s32.totalorder %s35, 0
    %p88 = por %p86, %p87
    %s90 = sadd.s32 %s89, 1
    %p93 = scmp.eq.s32.totalorder %s29, 1
    %p94 = scmp.ne.s32.totalorder %s89, %s91
    %p95 = scmp.eq.s32.totalorder %s29, 0
    %p96 = por %p94, %p95
    %p97 = scmp.ne.s32.totalorder %s89, %s91
    %p98 = scmp.eq.s32.totalorder %s34, 1
    %p99 = por %p97, %p98
    %p100 = scmp.ne.s32.totalorder %s91, %s92
    %p101 = scmp.eq.s32.totalorder %s34, 0
    %p102 = por %p100, %p101
    %p103 = scmp.ne.s32.totalorder %s91, %s92
    %p104 = scmp.eq.s32.totalorder %s35, 1
    %p105 = por %p103, %p104
    %p107 = scmp.ne.s32.totalorder %s92, %s106
    %p108 = scmp.eq.s32.totalorder %s35, 0
    %p109 = por %p107, %p108
    %s111 = sadd.s32 %s110, 1
    %p114 = scmp.eq.s32.totalorder %s29, 1
    %p115 = scmp.ne.s32.totalorder %s110, %s112
    %p116 = scmp.eq.s32.totalorder %s29, 0
    %p117 = por %p115, %p116
    %p118 = scmp.ne.s32.totalorder %s110, %s112
    %p119 = scmp.eq.s32.totalorder %s34, 1
    %p120 = por %p118, %p119
    %p121 = scmp.ne.s32.totalorder %s112, %s113
    %p122 = scmp.eq.s32.totalorder %s34, 0
    %p123 = por %p121, %p122
    %p124 = scmp.ne.s32.totalorder %s112, %s113
    %p125 = scmp.eq.s32.totalorder %s35, 1
    %p126 = por %p124, %p125
    %p128 = scmp.ne.s32.totalorder %s113, %s127
    %p129 = scmp.eq.s32.totalorder %s35, 0
    %p130 = por %p128, %p129
    %s132 = sadd.s32 %s131, 1
    %p135 = scmp.eq.s32.totalorder %s29, 1
    %p136 = scmp.ne.s32.totalorder %s131, %s133
    %p137 = scmp.eq.s32.totalorder %s29, 0
    %p138 = por %p136, %p137
    %p139 = scmp.ne.s32.totalorder %s131, %s133
    %p140 = scmp.eq.s32.totalorder %s34, 1
    %p141 = por %p139, %p140
    %p142 = scmp.ne.s32.totalorder %s133, %s134
    %p143 = scmp.eq.s32.totalorder %s34, 0
    %p144 = por %p142, %p143
    %p145 = scmp.ne.s32.totalorder %s133, %s134
    %p146 = scmp.eq.s32.totalorder %s35, 1
    %p147 = por %p145, %p146
    %p149 = scmp.ne.s32.totalorder %s134, %s148
    %p150 = scmp.eq.s32.totalorder %s35, 0
    %p151 = por %p149, %p150
    %s153 = sadd.s32 %s152, 1
    %p156 = scmp.eq.s32.totalorder %s29, 1
    %p157 = scmp.ne.s32.totalorder %s152, %s154
    %p158 = scmp.eq.s32.totalorder %s29, 0
    %p159 = por %p157, %p158
    %p160 = scmp.ne.s32.totalorder %s152, %s154
    %p161 = scmp.eq.s32.totalorder %s34, 1
    %p162 = por %p160, %p161
    %p163 = scmp.ne.s32.totalorder %s154, %s155
    %p164 = scmp.eq.s32.totalorder %s34, 0
    %p165 = por %p163, %p164
    %p166 = scmp.ne.s32.totalorder %s154, %s155
    %p167 = scmp.eq.s32.totalorder %s35, 1
    %p168 = por %p166, %p167
    %p170 = scmp.ne.s32.totalorder %s155, %s169
    %p171 = scmp.eq.s32.totalorder %s35, 0
    %p172 = por %p170, %p171
    %s174 = sadd.s32 %s173, 1
    %p177 = scmp.eq.s32.totalorder %s29, 1
    %p178 = scmp.ne.s32.totalorder %s173, %s175
    %p179 = scmp.eq.s32.totalorder %s29, 0
    %p180 = por %p178, %p179
    %p181 = scmp.ne.s32.totalorder %s173, %s175
    %p182 = scmp.eq.s32.totalorder %s34, 1
    %p183 = por %p181, %p182
    %p184 = scmp.ne.s32.totalorder %s175, %s176
    %p185 = scmp.eq.s32.totalorder %s34, 0
    %p186 = por %p184, %p185
    %p187 = scmp.ne.s32.totalorder %s175, %s176
    %p188 = scmp.eq.s32.totalorder %s35, 1
    %p189 = por %p187, %p188
    %p191 = scmp.ne.s32.totalorder %s176, %s190
    %p192 = scmp.eq.s32.totalorder %s35, 0
    %p193 = por %p191, %p192
    %s195 = sadd.s32 %s194, 1
    %p198 = scmp.eq.s32.totalorder %s29, 1
    %p199 = scmp.ne.s32.totalorder %s194, %s196
    %p200 = scmp.eq.s32.totalorder %s29, 0
    %p201 = por %p199, %p200
    %p202 = scmp.ne.s32.totalorder %s194, %s196
    %p203 = scmp.eq.s32.totalorder %s34, 1
    %p204 = por %p202, %p203
    %p205 = scmp.ne.s32.totalorder %s196, %s197
    %p206 = scmp.eq.s32.totalorder %s34, 0
    %p207 = por %p205, %p206
    %p208 = scmp.ne.s32.totalorder %s196, %s197
    %p209 = scmp.eq.s32.totalorder %s35, 1
    %p210 = por %p208, %p209
    %p212 = scmp.ne.s32.totalorder %s197, %s211
    %p213 = scmp.eq.s32.totalorder %s35, 0
    %p214 = por %p212, %p213
    %s216 = sadd.s32 %s215, 1
    %p219 = scmp.eq.s32.totalorder %s29, 1
    %p220 = scmp.ne.s32.totalorder %s215, %s217
    %p221 = scmp.eq.s32.totalorder %s29, 0
    %p222 = por %p220, %p221
    %p223 = scmp.ne.s32.totalorder %s215, %s217
    %p224 = scmp.eq.s32.totalorder %s34, 1
    %p225 = por %p223, %p224
    %p226 = scmp.ne.s32.totalorder %s217, %s218
    %p227 = scmp.eq.s32.totalorder %s34, 0
    %p228 = por %p226, %p227
    %p229 = scmp.ne.s32.totalorder %s217, %s218
    %p230 = scmp.eq.s32.totalorder %s35, 1
    %p231 = por %p229, %p230
    %p233 = scmp.ne.s32.totalorder %s218, %s232
    %p234 = scmp.eq.s32.totalorder %s35, 0
    %p235 = por %p233, %p234
    %s237 = sadd.s32 %s236, 1
    %p240 = scmp.eq.s32.totalorder %s29, 1
    %p241 = scmp.ne.s32.totalorder %s236, %s238
    %p242 = scmp.eq.s32.totalorder %s29, 0
    %p243 = por %p241, %p242
    %p244 = scmp.ne.s32.totalorder %s236, %s238
    %p245 = scmp.eq.s32.totalorder %s34, 1
    %p246 = por %p244, %p245
    %p247 = scmp.ne.s32.totalorder %s238, %s239
    %p248 = scmp.eq.s32.totalorder %s34, 0
    %p249 = por %p247, %p248
    %p250 = scmp.ne.s32.totalorder %s238, %s239
    %p251 = scmp.eq.s32.totalorder %s35, 1
    %p252 = por %p250, %p251
    %p254 = scmp.ne.s32.totalorder %s239, %s253
    %p255 = scmp.eq.s32.totalorder %s35, 0
    %p256 = por %p254, %p255
    %s258 = sadd.s32 %s257, 1
    %p261 = scmp.eq.s32.totalorder %s29, 1
    %p262 = scmp.ne.s32.totalorder %s257, %s259
    %p263 = scmp.eq.s32.totalorder %s29, 0
    %p264 = por %p262, %p263
    %p265 = scmp.ne.s32.totalorder %s257, %s259
    %p266 = scmp.eq.s32.totalorder %s34, 1
    %p267 = por %p265, %p266
    %p268 = scmp.ne.s32.totalorder %s259, %s260
    %p269 = scmp.eq.s32.totalorder %s34, 0
    %p270 = por %p268, %p269
    %p271 = scmp.ne.s32.totalorder %s259, %s260
    %p272 = scmp.eq.s32.totalorder %s35, 1
    %p273 = por %p271, %p272
    %p275 = scmp.ne.s32.totalorder %s260, %s274
    %p276 = scmp.eq.s32.totalorder %s35, 0
    %p277 = por %p275, %p276
    %s279 = sadd.s32 %s278, 1
    %p282 = scmp.eq.s32.totalorder %s29, 1
    %p283 = scmp.ne.s32.totalorder %s278, %s280
    %p284 = scmp.eq.s32.totalorder %s29, 0
    %p285 = por %p283, %p284
    %p286 = scmp.ne.s32.totalorder %s278, %s280
    %p287 = scmp.eq.s32.totalorder %s34, 1
    %p288 = por %p286, %p287
    %p289 = scmp.ne.s32.totalorder %s280, %s281
    %p290 = scmp.eq.s32.totalorder %s34, 0
    %p291 = por %p289, %p290
    %p292 = scmp.ne.s32.totalorder %s280, %s281
    %p293 = scmp.eq.s32.totalorder %s35, 1
    %p294 = por %p292, %p293
    %p296 = scmp.ne.s32.totalorder %s281, %s295
    %p297 = scmp.eq.s32.totalorder %s35, 0
    %p298 = por %p296, %p297
    %s300 = sadd.s32 %s299, 1
    %p303 = scmp.eq.s32.totalorder %s29, 1
    %p304 = scmp.ne.s32.totalorder %s299, %s301
    %p305 = scmp.eq.s32.totalorder %s29, 0
    %p306 = por %p304, %p305
    %p307 = scmp.ne.s32.totalorder %s299, %s301
    %p308 = scmp.eq.s32.totalorder %s34, 1
    %p309 = por %p307, %p308
    %p310 = scmp.ne.s32.totalorder %s301, %s302
    %p311 = scmp.eq.s32.totalorder %s34, 0
    %p312 = por %p310, %p311
    %p313 = scmp.ne.s32.totalorder %s301, %s302
    %p314 = scmp.eq.s32.totalorder %s35, 1
    %p315 = por %p313, %p314
    %p317 = scmp.ne.s32.totalorder %s302, %s316
    %p318 = scmp.eq.s32.totalorder %s35, 0
    %p319 = por %p317, %p318
    %s321 = sadd.s32 %s320, 1
    %p324 = scmp.eq.s32.totalorder %s29, 1
    %p325 = scmp.ne.s32.totalorder %s320, %s322
    %p326 = scmp.eq.s32.totalorder %s29, 0
    %p327 = por %p325, %p326
    %p328 = scmp.ne.s32.totalorder %s320, %s322
    %p329 = scmp.eq.s32.totalorder %s34, 1
    %p330 = por %p328, %p329
    %p331 = scmp.ne.s32.totalorder %s322, %s323
    %p332 = scmp.eq.s32.totalorder %s34, 0
    %p333 = por %p331, %p332
    %p334 = scmp.ne.s32.totalorder %s322, %s323
    %p335 = scmp.eq.s32.totalorder %s35, 1
    %p336 = por %p334, %p335
    %p338 = scmp.ne.s32.totalorder %s323, %s337
    %p339 = scmp.eq.s32.totalorder %s35, 0
    %p340 = por %p338, %p339
    %s342 = sadd.s32 %s341, 1
    %p345 = scmp.eq.s32.totalorder %s29, 1
    %p346 = scmp.ne.s32.totalorder %s341, %s343
    %p347 = scmp.eq.s32.totalorder %s29, 0
    %p348 = por %p346, %p347
    %p349 = scmp.ne.s32.totalorder %s341, %s343
    %p350 = scmp.eq.s32.totalorder %s34, 1
    %p351 = por %p349, %p350
    %p352 = scmp.ne.s32.totalorder %s343, %s344
    %p353 = scmp.eq.s32.totalorder %s34, 0
    %p354 = por %p352, %p353
    %p355 = scmp.ne.s32.totalorder %s343, %s344
    %p356 = scmp.eq.s32.totalorder %s35, 1
    %p357 = por %p355, %p356
    %p359 = scmp.ne.s32.totalorder %s344, %s358
    %p360 = scmp.eq.s32.totalorder %s35, 0
    %p361 = por %p359, %p360
    %s363 = sadd.s32 %s362, 1
    %p366 = scmp.eq.s32.totalorder %s29, 1
    %p367 = scmp.ne.s32.totalorder %s362, %s364
    %p368 = scmp.eq.s32.totalorder %s29, 0
    %p369 = por %p367, %p368
    %p370 = scmp.ne.s32.totalorder %s362, %s364
    %p371 = scmp.eq.s32.totalorder %s34, 1
    %p372 = por %p370, %p371
    %p373 = scmp.ne.s32.totalorder %s364, %s365
    %p374 = scmp.eq.s32.totalorder %s34, 0
    %p375 = por %p373, %p374
    %p376 = scmp.ne.s32.totalorder %s364, %s365
    %p377 = scmp.eq.s32.totalorder %s35, 1
    %p378 = por %p376, %p377
    %p380 = scmp.ne.s32.totalorder %s365, %s379
    %p381 = scmp.eq.s32.totalorder %s35, 0
    %p382 = por %p380, %p381
    %s384 = sadd.s32 %s383, 1
    %p387 = scmp.eq.s32.totalorder %s29, 1
    %p388 = scmp.ne.s32.totalorder %s383, %s385
    %p389 = scmp.eq.s32.totalorder %s29, 0
    %p390 = por %p388, %p389
    %p391 = scmp.ne.s32.totalorder %s383, %s385
    %p392 = scmp.eq.s32.totalorder %s34, 1
    %p393 = por %p391, %p392
    %p394 = scmp.ne.s32.totalorder %s385, %s386
    %p395 = scmp.eq.s32.totalorder %s34, 0
    %p396 = por %p394, %p395
    %p397 = scmp.ne.s32.totalorder %s385, %s386
    %p398 = scmp.eq.s32.totalorder %s35, 1
    %p399 = por %p397, %p398
    %p401 = scmp.ne.s32.totalorder %s386, %s400
    %p402 = scmp.eq.s32.totalorder %s35, 0
    %p403 = por %p401, %p402
    %s405 = sadd.s32 %s404, 1
    %p408 = scmp.eq.s32.totalorder %s29, 1
    %p409 = scmp.ne.s32.totalorder %s404, %s406
    %p410 = scmp.eq.s32.totalorder %s29, 0
    %p411 = por %p409, %p410
    %p412 = scmp.ne.s32.totalorder %s404, %s406
    %p413 = scmp.eq.s32.totalorder %s34, 1
    %p414 = por %p412, %p413
    %p415 = scmp.ne.s32.totalorder %s406, %s407
    %p416 = scmp.eq.s32.totalorder %s34, 0
    %p417 = por %p415, %p416
    %p418 = scmp.ne.s32.totalorder %s406, %s407
    %p419 = scmp.eq.s32.totalorder %s35, 1
    %p420 = por %p418, %p419
    %p422 = scmp.ne.s32.totalorder %s407, %s421
    %p423 = scmp.eq.s32.totalorder %s35, 0
    %p424 = por %p422, %p423
    %s426 = sadd.s32 %s425, 1
    %p429 = scmp.eq.s32.totalorder %s29, 1
    %p430 = scmp.ne.s32.totalorder %s425, %s427
    %p431 = scmp.eq.s32.totalorder %s29, 0
    %p432 = por %p430, %p431
    %p433 = scmp.ne.s32.totalorder %s425, %s427
    %p434 = scmp.eq.s32.totalorder %s34, 1
    %p435 = por %p433, %p434
    %p436 = scmp.ne.s32.totalorder %s427, %s428
    %p437 = scmp.eq.s32.totalorder %s34, 0
    %p438 = por %p436, %p437
    %p439 = scmp.ne.s32.totalorder %s427, %s428
    %p440 = scmp.eq.s32.totalorder %s35, 1
    %p441 = por %p439, %p440
    %p443 = scmp.ne.s32.totalorder %s428, %s442
    %p444 = scmp.eq.s32.totalorder %s35, 0
    %p445 = por %p443, %p444
    %s447 = sadd.s32 %s446, 1
    %p450 = scmp.eq.s32.totalorder %s29, 1
    %p451 = scmp.ne.s32.totalorder %s446, %s448
    %p452 = scmp.eq.s32.totalorder %s29, 0
    %p453 = por %p451, %p452
    %p454 = scmp.ne.s32.totalorder %s446, %s448
    %p455 = scmp.eq.s32.totalorder %s34, 1
    %p456 = por %p454, %p455
    %p457 = scmp.ne.s32.totalorder %s448, %s449
    %p458 = scmp.eq.s32.totalorder %s34, 0
    %p459 = por %p457, %p458
    %p460 = scmp.ne.s32.totalorder %s448, %s449
    %p461 = scmp.eq.s32.totalorder %s35, 1
    %p462 = por %p460, %p461
    %p464 = scmp.ne.s32.totalorder %s449, %s463
    %p465 = scmp.eq.s32.totalorder %s35, 0
    %p466 = por %p464, %p465
    %s468 = sadd.s32 %s467, 1
    %p471 = scmp.eq.s32.totalorder %s29, 1
    %p472 = scmp.ne.s32.totalorder %s467, %s469
    %p473 = scmp.eq.s32.totalorder %s29, 0
    %p474 = por %p472, %p473
    %p475 = scmp.ne.s32.totalorder %s467, %s469
    %p476 = scmp.eq.s32.totalorder %s34, 1
    %p477 = por %p475, %p476
    %p478 = scmp.ne.s32.totalorder %s469, %s470
    %p479 = scmp.eq.s32.totalorder %s34, 0
    %p480 = por %p478, %p479
    %p481 = scmp.ne.s32.totalorder %s469, %s470
    %p482 = scmp.eq.s32.totalorder %s35, 1
    %p483 = por %p481, %p482
    %p485 = scmp.ne.s32.totalorder %s470, %s484
    %p486 = scmp.eq.s32.totalorder %s35, 0
    %p487 = por %p485, %p486
    %s488 = ssub.s32 %s29, %s36
    %p489 = scmp.eq.s32.totalorder %s488, 0
    %s491 = sadd.s32 %s490, 1
    %s492 = scalar_select %p489, %s490, %s491
    %p495 = pneg %p489
    %p496 = scmp.eq.s32.totalorder %s29, 1
    %p497 = por %p495, %p496
    %p498 = scmp.ne.s32.totalorder %s490, %s493
    %p499 = scmp.eq.s32.totalorder %s29, 0
    %p500 = por %p498, %p499
    %p501 = scmp.ne.s32.totalorder %s490, %s493
    %p502 = scmp.eq.s32.totalorder %s34, 1
    %p503 = por %p501, %p502
    %p504 = scmp.ne.s32.totalorder %s493, %s494
    %p505 = scmp.eq.s32.totalorder %s34, 0
    %p506 = por %p504, %p505
    %p507 = scmp.ne.s32.totalorder %s493, %s494
    %p508 = scmp.eq.s32.totalorder %s35, 1
    %p509 = por %p507, %p508
    %p511 = scmp.ne.s32.totalorder %s494, %s510
    %p512 = scmp.eq.s32.totalorder %s35, 0
    %p513 = por %p511, %p512
    %s514 = ssub.s32 %s29, %s36
    %p515 = scmp.eq.s32.totalorder %s514, 0
    %s517 = sadd.s32 %s516, 1
    %s518 = scalar_select %p515, %s516, %s517
    %p521 = pneg %p515
    %p522 = scmp.eq.s32.totalorder %s29, 1
    %p523 = por %p521, %p522
    %p524 = scmp.ne.s32.totalorder %s516, %s519
    %p525 = scmp.eq.s32.totalorder %s29, 0
    %p526 = por %p524, %p525
    %p527 = scmp.ne.s32.totalorder %s516, %s519
    %p528 = scmp.eq.s32.totalorder %s34, 1
    %p529 = por %p527, %p528
    %p530 = scmp.ne.s32.totalorder %s519, %s520
    %p531 = scmp.eq.s32.totalorder %s34, 0
    %p532 = por %p530, %p531
    %p533 = scmp.ne.s32.totalorder %s519, %s520
    %p534 = scmp.eq.s32.totalorder %s35, 1
    %p535 = por %p533, %p534
    %p537 = scmp.ne.s32.totalorder %s520, %s536
    %p538 = scmp.eq.s32.totalorder %s35, 0
    %p539 = por %p537, %p538
    %p540 = scmp.le.s32.totalorder 1, %s29
    %p541 = scmp.lt.s32.totalorder %s29, 3
    %p542 = pnand %p540, %p541
    %p543 = pneg %p542
    // Predicated region
    $region9: #{tomnet_forward.1} parent=5 // pred_check
      _
    $region10: #{tomnet_forward.1} parent=5 // pred_check_branch
      %545 = sbr.rel (%p542) target = $region12
    $region11: #{tomnet_forward.1} parent=5 // pred_region
      %s546 = ssub.s32 %s29, 1
      // Predicated region
      $region13: #{tomnet_forward.1} parent=11 // pred_check
        %p547 = pneg %p102
      $region14: #{tomnet_forward.1} parent=11 // pred_check_branch
        %549 = sbr.rel (%p547) target = $region16
      $region15: #{tomnet_forward.1} parent=11 // pred_region
        _
      $region16: #{tomnet_forward.1} parent=11 // pred_fallthru
        _
      // Predicated region
      $region17: #{tomnet_forward.1} parent=11 // pred_check
        %p550 = pneg %p123
      $region18: #{tomnet_forward.1} parent=11 // pred_check_branch
        %552 = sbr.rel (%p550) target = $region20
      $region19: #{tomnet_forward.1} parent=11 // pred_region
        _
      $region20: #{tomnet_forward.1} parent=11 // pred_fallthru
        _
      // Predicated region
      $region21: #{tomnet_forward.1} parent=11 // pred_check
        %p553 = pneg %p144
      $region22: #{tomnet_forward.1} parent=11 // pred_check_branch
        %555 = sbr.rel (%p553) target = $region24
      $region23: #{tomnet_forward.1} parent=11 // pred_region
        _
      $region24: #{tomnet_forward.1} parent=11 // pred_fallthru
        _
      // Predicated region
      $region25: #{tomnet_forward.1} parent=11 // pred_check
        %p556 = pneg %p165
      $region26: #{tomnet_forward.1} parent=11 // pred_check_branch
        %558 = sbr.rel (%p556) target = $region28
      $region27: #{tomnet_forward.1} parent=11 // pred_region
        _
      $region28: #{tomnet_forward.1} parent=11 // pred_fallthru
        _
      // Predicated region
      $region29: #{tomnet_forward.1} parent=11 // pred_check
        %p559 = pneg %p186
      $region30: #{tomnet_forward.1} parent=11 // pred_check_branch
        %561 = sbr.rel (%p559) target = $region32
      $region31: #{tomnet_forward.1} parent=11 // pred_region
        _
      $region32: #{tomnet_forward.1} parent=11 // pred_fallthru
        _
      // Predicated region
      $region33: #{tomnet_forward.1} parent=11 // pred_check
        %p562 = pneg %p207
      $region34: #{tomnet_forward.1} parent=11 // pred_check_branch
        %564 = sbr.rel (%p562) target = $region36
      $region35: #{tomnet_forward.1} parent=11 // pred_region
        _
      $region36: #{tomnet_forward.1} parent=11 // pred_fallthru
        _
      // Predicated region
      $region37: #{tomnet_forward.1} parent=11 // pred_check
        %p565 = pneg %p228
      $region38: #{tomnet_forward.1} parent=11 // pred_check_branch
        %567 = sbr.rel (%p565) target = $region40
      $region39: #{tomnet_forward.1} parent=11 // pred_region
        _
      $region40: #{tomnet_forward.1} parent=11 // pred_fallthru
        _
      // Predicated region
      $region41: #{tomnet_forward.1} parent=11 // pred_check
        %p568 = pneg %p249
      $region42: #{tomnet_forward.1} parent=11 // pred_check_branch
        %570 = sbr.rel (%p568) target = $region44
      $region43: #{tomnet_forward.1} parent=11 // pred_region
        _
      $region44: #{tomnet_forward.1} parent=11 // pred_fallthru
        _
      // Predicated region
      $region45: #{tomnet_forward.1} parent=11 // pred_check
        %p571 = pneg %p270
      $region46: #{tomnet_forward.1} parent=11 // pred_check_branch
        %573 = sbr.rel (%p571) target = $region48
      $region47: #{tomnet_forward.1} parent=11 // pred_region
        _
      $region48: #{tomnet_forward.1} parent=11 // pred_fallthru
        _
      // Predicated region
      $region49: #{tomnet_forward.1} parent=11 // pred_check
        %p574 = pneg %p291
      $region50: #{tomnet_forward.1} parent=11 // pred_check_branch
        %576 = sbr.rel (%p574) target = $region52
      $region51: #{tomnet_forward.1} parent=11 // pred_region
        _
      $region52: #{tomnet_forward.1} parent=11 // pred_fallthru
        _
      // Predicated region
      $region53: #{tomnet_forward.1} parent=11 // pred_check
        %p577 = pneg %p312
      $region54: #{tomnet_forward.1} parent=11 // pred_check_branch
        %579 = sbr.rel (%p577) target = $region56
      $region55: #{tomnet_forward.1} parent=11 // pred_region
        _
      $region56: #{tomnet_forward.1} parent=11 // pred_fallthru
        _
      // Predicated region
      $region57: #{tomnet_forward.1} parent=11 // pred_check
        %p580 = pneg %p333
      $region58: #{tomnet_forward.1} parent=11 // pred_check_branch
        %582 = sbr.rel (%p580) target = $region60
      $region59: #{tomnet_forward.1} parent=11 // pred_region
        _
      $region60: #{tomnet_forward.1} parent=11 // pred_fallthru
        _
      // Predicated region
      $region61: #{tomnet_forward.1} parent=11 // pred_check
        %p583 = pneg %p354
      $region62: #{tomnet_forward.1} parent=11 // pred_check_branch
        %585 = sbr.rel (%p583) target = $region64
      $region63: #{tomnet_forward.1} parent=11 // pred_region
        _
      $region64: #{tomnet_forward.1} parent=11 // pred_fallthru
        _
      // Predicated region
      $region65: #{tomnet_forward.1} parent=11 // pred_check
        %p586 = pneg %p375
      $region66: #{tomnet_forward.1} parent=11 // pred_check_branch
        %588 = sbr.rel (%p586) target = $region68
      $region67: #{tomnet_forward.1} parent=11 // pred_region
        _
      $region68: #{tomnet_forward.1} parent=11 // pred_fallthru
        _
      // Predicated region
      $region69: #{tomnet_forward.1} parent=11 // pred_check
        %p589 = pneg %p396
      $region70: #{tomnet_forward.1} parent=11 // pred_check_branch
        %591 = sbr.rel (%p589) target = $region72
      $region71: #{tomnet_forward.1} parent=11 // pred_region
        _
      $region72: #{tomnet_forward.1} parent=11 // pred_fallthru
        _
      // Predicated region
      $region73: #{tomnet_forward.1} parent=11 // pred_check
        %p592 = pneg %p417
      $region74: #{tomnet_forward.1} parent=11 // pred_check_branch
        %594 = sbr.rel (%p592) target = $region76
      $region75: #{tomnet_forward.1} parent=11 // pred_region
        _
      $region76: #{tomnet_forward.1} parent=11 // pred_fallthru
        _
      // Predicated region
      $region77: #{tomnet_forward.1} parent=11 // pred_check
        %p595 = pneg %p438
      $region78: #{tomnet_forward.1} parent=11 // pred_check_branch
        %597 = sbr.rel (%p595) target = $region80
      $region79: #{tomnet_forward.1} parent=11 // pred_region
        _
      $region80: #{tomnet_forward.1} parent=11 // pred_fallthru
        _
      // Predicated region
      $region81: #{tomnet_forward.1} parent=11 // pred_check
        %p598 = pneg %p459
      $region82: #{tomnet_forward.1} parent=11 // pred_check_branch
        %600 = sbr.rel (%p598) target = $region84
      $region83: #{tomnet_forward.1} parent=11 // pred_region
        _
      $region84: #{tomnet_forward.1} parent=11 // pred_fallthru
        _
      // Predicated region
      $region85: #{tomnet_forward.1} parent=11 // pred_check
        %p601 = pneg %p480
      $region86: #{tomnet_forward.1} parent=11 // pred_check_branch
        %603 = sbr.rel (%p601) target = $region88
      $region87: #{tomnet_forward.1} parent=11 // pred_region
        _
      $region88: #{tomnet_forward.1} parent=11 // pred_fallthru
        _
    $region12: #{tomnet_forward.1} parent=5 // pred_fallthru
      _
    %p604 = scmp.lt.s32.totalorder %s29, 2
    // Predicated region
    $region89: #{tomnet_forward.1} parent=5 // pred_check
      %p605 = pneg %p604
    $region90: #{tomnet_forward.1} parent=5 // pred_check_branch
      %607 = sbr.rel (%p605) target = $region92
    $region91: #{tomnet_forward.1} parent=5 // pred_region
      // Predicated region
      $region93: #{tomnet_forward.1} parent=91 // pred_check
        %p608 = pneg %p49
      $region94: #{tomnet_forward.1} parent=91 // pred_check_branch
        %610 = sbr.rel (%p608) target = $region96
      $region95: #{tomnet_forward.1} parent=91 // pred_region
        %p611 = scmp.lt.s32.totalorder %s29, 1
        %s612 = scalar_select %p611, %s29, 1
        %s613 = smul.addr %s612, 64
        %s614 = smul.addr %s613, 8
        %s615 = scalar_lea.vmem %s0, %s614
      $region96: #{tomnet_forward.1} parent=91 // pred_fallthru
        _
      // Predicated region
      $region97: #{tomnet_forward.1} parent=91 // pred_check
        %p616 = pneg %p75
      $region98: #{tomnet_forward.1} parent=91 // pred_check_branch
        %618 = sbr.rel (%p616) target = $region100
      $region99: #{tomnet_forward.1} parent=91 // pred_region
        %p619 = scmp.lt.s32.totalorder %s29, 1
        %s620 = scalar_select %p619, %s29, 1
        %s621 = smul.addr %s620, 32
        %s622 = smul.addr %s621, 8
        %s623 = scalar_lea.vmem %s1, %s622
      $region100: #{tomnet_forward.1} parent=91 // pred_fallthru
        _
    $region92: #{tomnet_forward.1} parent=5 // pred_fallthru
      _
    %p624 = scmp.le.s32.totalorder 1, %s29
    %p625 = scmp.lt.s32.totalorder %s29, 3
    %p626 = pnand %p624, %p625
    %p627 = pneg %p626
    // Predicated region
    $region101: #{tomnet_forward.1} parent=5 // pred_check
      _
    $region102: #{tomnet_forward.1} parent=5 // pred_check_branch
      %629 = sbr.rel (%p626) target = $region104
    $region103: #{tomnet_forward.1} parent=5 // pred_region
      %s630 = ssub.s32 %s29, 1
      %p631 = scmp.lt.s32.totalorder %s34, 1
      %s632 = scalar_select %p631, %s34, 1
      %s633 = smul.addr %s632, 64
      %s634 = smul.addr %s633, 8
      %s635 = scalar_lea.vmem %s0, %s634
      %p636 = pneg %p55
      %p637 = pneg %p52
      %p638 = scmp.lt.s32.totalorder %s34, 1
      %s639 = scalar_select %p638, %s34, 1
      %s640 = smul.addr %s639, 32
      %s641 = smul.addr %s640, 8
      %s642 = scalar_lea.vmem %s1, %s641
      %p643 = pneg %p81
      %p644 = pneg %p78
      %p645 = pneg %p102
      %p646 = pneg %p99
      %p647 = pneg %p123
      %p648 = pneg %p120
      %p649 = pneg %p144
      %p650 = pneg %p141
      %p651 = pneg %p165
      %p652 = pneg %p162
      %p653 = pneg %p186
      %p654 = pneg %p183
      %p655 = pneg %p207
      %p656 = pneg %p204
      %p657 = pneg %p228
      %p658 = pneg %p225
      %p659 = pneg %p249
      %p660 = pneg %p246
      %p661 = pneg %p270
      %p662 = pneg %p267
      %p663 = pneg %p291
      %p664 = pneg %p288
      %p665 = pneg %p312
      %p666 = pneg %p309
      %p667 = pneg %p333
      %p668 = pneg %p330
      %p669 = pneg %p354
      %p670 = pneg %p351
      %p671 = pneg %p375
      %p672 = pneg %p372
      %p673 = pneg %p396
      %p674 = pneg %p393
      %p675 = pneg %p417
      %p676 = pneg %p414
      %p677 = pneg %p438
      %p678 = pneg %p435
      %p679 = pneg %p459
      %p680 = pneg %p456
      %p681 = pneg %p480
      %p682 = pneg %p477
      %p683 = pneg %p506
      %p684 = pneg %p503
      %p685 = scmp.lt.s32.totalorder %s34, 1
      %s686 = scalar_select %p685, %s34, 1
      %s687 = smul.addr %s686, 8
      %s688 = scalar_lea.vmem %s21, %s687
      %p689 = pneg %p532
      %p690 = pneg %p529
      %p691 = scmp.lt.s32.totalorder %s34, 1
      %s692 = scalar_select %p691, %s34, 1
      %s693 = smul.addr %s692, 8
      %s694 = scalar_lea.vmem %s22, %s693
      %p695 = scmp.lt.s32.totalorder %s34, 1
      %s696 = scalar_select %p695, %s34, 1
      %s697 = smul.addr %s696, 64
      %s698 = smul.addr %s697, 8
      %s699 = scalar_lea.vmem %s0, %s698
      %p700 = scmp.lt.s32.totalorder %s34, 1
      %s701 = scalar_select %p700, %s34, 1
      %s702 = smul.addr %s701, 32
      %s703 = smul.addr %s702, 8
      %s704 = scalar_lea.vmem %s1, %s703
      %p705 = scmp.lt.s32.totalorder %s34, 1
      %s706 = scalar_select %p705, %s34, 1
      %s707 = smul.addr %s706, 8
      %s708 = scalar_lea.vmem %s21, %s707
      %p709 = scmp.lt.s32.totalorder %s34, 1
      %s710 = scalar_select %p709, %s34, 1
      %s711 = smul.addr %s710, 8
      %s712 = scalar_lea.vmem %s22, %s711
      %v713 = vld [vmem:[%s699] sm:$0xff]
      %v714 = vld [vmem:[%s699 + $0x8] sm:$0xff]
      %v715 = vld [vmem:[%s699 + $0x10] sm:$0xff]
      %v716 = vld [vmem:[%s699 + $0x18] sm:$0xff]
      %v717 = vld [vmem:[%s699 + $0x20] sm:$0xff]
      %v718 = vld [vmem:[%s699 + $0x28] sm:$0xff]
      %v719 = vld [vmem:[%s699 + $0x30] sm:$0xff]
      %v720 = vld [vmem:[%s699 + $0x38] sm:$0xff]
      %v721 = vld [vmem:[%s699 + $0x40] sm:$0xff]
      %v722 = vld [vmem:[%s699 + $0x48] sm:$0xff]
      %v723 = vld [vmem:[%s699 + $0x50] sm:$0xff]
      %v724 = vld [vmem:[%s699 + $0x58] sm:$0xff]
      %v725 = vld [vmem:[%s699 + $0x60] sm:$0xff]
      %v726 = vld [vmem:[%s699 + $0x68] sm:$0xff]
      %v727 = vld [vmem:[%s699 + $0x70] sm:$0xff]
      %v728 = vld [vmem:[%s699 + $0x78] sm:$0xff]
      %v729 = vld [vmem:[%s699 + $0x80] sm:$0xff]
      %v730 = vld [vmem:[%s699 + $0x88] sm:$0xff]
      %v731 = vld [vmem:[%s699 + $0x90] sm:$0xff]
      %v732 = vld [vmem:[%s699 + $0x98] sm:$0xff]
      %v733 = vld [vmem:[%s699 + $0xa0] sm:$0xff]
      %v734 = vld [vmem:[%s699 + $0xa8] sm:$0xff]
      %v735 = vld [vmem:[%s699 + $0xb0] sm:$0xff]
      %v736 = vld [vmem:[%s699 + $0xb8] sm:$0xff]
      %v737 = vld [vmem:[%s699 + $0xc0] sm:$0xff]
      %v738 = vld [vmem:[%s699 + $0xc8] sm:$0xff]
      %v739 = vld [vmem:[%s699 + $0xd0] sm:$0xff]
      %v740 = vld [vmem:[%s699 + $0xd8] sm:$0xff]
      %v741 = vld [vmem:[%s699 + $0xe0] sm:$0xff]
      %v742 = vld [vmem:[%s699 + $0xe8] sm:$0xff]
      %v743 = vld [vmem:[%s699 + $0xf0] sm:$0xff]
      %v744 = vld [vmem:[%s699 + $0xf8] sm:$0xff]
      %v745 = vld [vmem:[%s699 + $0x100] sm:$0xff]
      %v746 = vld [vmem:[%s699 + $0x108] sm:$0xff]
      %v747 = vld [vmem:[%s699 + $0x110] sm:$0xff]
      %v748 = vld [vmem:[%s699 + $0x118] sm:$0xff]
      %v749 = vld [vmem:[%s699 + $0x120] sm:$0xff]
      %v750 = vld [vmem:[%s699 + $0x128] sm:$0xff]
      %v751 = vld [vmem:[%s699 + $0x130] sm:$0xff]
      %v752 = vld [vmem:[%s699 + $0x138] sm:$0xff]
      %v753 = vld [vmem:[%s699 + $0x140] sm:$0xff]
      %v754 = vld [vmem:[%s699 + $0x148] sm:$0xff]
      %v755 = vld [vmem:[%s699 + $0x150] sm:$0xff]
      %v756 = vld [vmem:[%s699 + $0x158] sm:$0xff]
      %v757 = vld [vmem:[%s699 + $0x160] sm:$0xff]
      %v758 = vld [vmem:[%s699 + $0x168] sm:$0xff]
      %v759 = vld [vmem:[%s699 + $0x170] sm:$0xff]
      %v760 = vld [vmem:[%s699 + $0x178] sm:$0xff]
      %v761 = vld [vmem:[%s699 + $0x180] sm:$0x7]
      %v762 = vld [vmem:[%s699 + $0x188] sm:$0x7]
      %v763 = vld [vmem:[%s699 + $0x190] sm:$0x7]
      %v764 = vld [vmem:[%s699 + $0x198] sm:$0x7]
      %v765 = vld [vmem:[%s699 + $0x1a0] sm:$0x7]
      %v766 = vld [vmem:[%s699 + $0x1a8] sm:$0x7]
      %v767 = vld [vmem:[%s699 + $0x1b0] sm:$0x7]
      %v768 = vld [vmem:[%s699 + $0x1b8] sm:$0x7]
      %v769 = vld [vmem:[%s699 + $0x1c0] sm:$0x7]
      %v770 = vld [vmem:[%s699 + $0x1c8] sm:$0x7]
      %v771 = vld [vmem:[%s699 + $0x1d0] sm:$0x7]
      %v772 = vld [vmem:[%s699 + $0x1d8] sm:$0x7]
      %v773 = vld [vmem:[%s699 + $0x1e0] sm:$0x7]
      %v774 = vld [vmem:[%s699 + $0x1e8] sm:$0x7]
      %v775 = vld [vmem:[%s699 + $0x1f0] sm:$0x7]
      %v776 = vld [vmem:[%s699 + $0x1f8] sm:$0x7]
      %v777 = vld [vmem:[%s3] sm:$0xff]
      %v778 = vld [vmem:[%s4] sm:$0xff]
      %v779 = vld [vmem:[%s5] sm:$0xff]
      %v780 = vld [vmem:[%s6] sm:$0x1]
      %782 = vset.pattern.permute.xlu0 0
      %783 = vperm.xlu0 %782, %v778
      %v784 = vpop.permute.xlu0 %783
      %vm786 = vcmask 220160
      %v788 = vsel %vm786, %v777, 0
      %vm790 = vcmask 1042432
      %v792 = vsel %vm790, %v761, 0
      %v795 = vsel %vm790, %v762, 0
      %v798 = vsel %vm790, %v763, 0
      %v801 = vsel %vm790, %v764, 0
      %v804 = vsel %vm790, %v765, 0
      %v807 = vsel %vm790, %v766, 0
      %v810 = vsel %vm790, %v767, 0
      %v813 = vsel %vm790, %v768, 0
      %v816 = vsel %vm790, %v769, 0
      %v819 = vsel %vm790, %v770, 0
      %v822 = vsel %vm790, %v771, 0
      %v825 = vsel %vm790, %v772, 0
      %v828 = vsel %vm790, %v773, 0
      %v831 = vsel %vm790, %v774, 0
      %v834 = vsel %vm790, %v775, 0
      %v837 = vsel %vm790, %v776, 0
      %839 = vmatprep.subr.mxu0 0.0
      %840 = vmatpush1.msra.mxu0 0.0
      %841 = vmatprep.subr.mxu0 0.0
      %842 = vmatpush1.msra.mxu0 0.0
      %843 = vmatprep.subr.mxu0 0.0
      %844 = vmatpush1.msra.mxu0 0.0
      %845 = vmatprep.subr.mxu0 0.0
      %846 = vmatpush1.msra.mxu0 0.0
      %847 = vmatprep.subr.mxu0 0.0
      %848 = vmatpush1.msra.mxu0 0.0
      %849 = vmatprep.subr.mxu0 0.0
      %850 = vmatpush1.msra.mxu0 0.0
      %851 = vmatprep.subr.mxu0 0.0
      %852 = vmatpush1.msra.mxu0 0.0
      %853 = vmatprep.subr.mxu0 0.0
      %854 = vmatpush1.msra.mxu0 0.0
      %855 = vmatprep.subr.mxu0 0.0
      %856 = vmatpush1.msra.mxu0 0.0
      %857 = vmatprep.subr.mxu0 0.0
      %858 = vmatpush1.msra.mxu0 0.0
      %859 = vmatprep.subr.mxu0 0.0
      %860 = vmatpush1.msra.mxu0 0.0
      %861 = vmatprep.subr.mxu0 0.0
      %862 = vmatpush1.msra.mxu0 0.0
      %863 = vmatprep.subr.mxu0 %v795
      %864 = vmatpush1.msra.mxu0 %v792
      %865 = vmatprep.subr.mxu0 %v746
      %866 = vmatpush1.msra.mxu0 %v745
      %867 = vmatprep.subr.mxu0 %v730
      %868 = vmatpush1.msra.mxu0 %v729
      %869 = vmatprep.subr.mxu0 %v714
      %870 = vmatpush1.msra.mxu0 %v713
      %871 = vmatprep.subr.mxu0 0.0
      %872 = vmatpush2.msra.mxu0 0.0
      %873 = vmatprep.subr.mxu0 0.0
      %874 = vmatpush2.msra.mxu0 0.0
      %875 = vmatprep.subr.mxu0 0.0
      %876 = vmatpush2.msra.mxu0 0.0
      %877 = vmatprep.subr.mxu0 0.0
      %878 = vmatpush2.msra.mxu0 0.0
      %879 = vmatprep.subr.mxu0 0.0
      %880 = vmatpush2.msra.mxu0 0.0
      %881 = vmatprep.subr.mxu0 0.0
      %882 = vmatpush2.msra.mxu0 0.0
      %883 = vmatprep.subr.mxu0 0.0
      %884 = vmatpush2.msra.mxu0 0.0
      %885 = vmatprep.subr.mxu0 0.0
      %886 = vmatpush2.msra.mxu0 0.0
      %887 = vmatprep.subr.mxu0 0.0
      %888 = vmatpush2.msra.mxu0 0.0
      %889 = vmatprep.subr.mxu0 0.0
      %890 = vmatpush2.msra.mxu0 0.0
      %891 = vmatprep.subr.mxu0 0.0
      %892 = vmatpush2.msra.mxu0 0.0
      %893 = vmatprep.subr.mxu0 0.0
      %894 = vmatpush2.msra.mxu0 0.0
      %895 = vmatprep.subr.mxu0 0.0
      %896 = vmatpush2.msra.mxu0 0.0
      %897 = vmatprep.subr.mxu0 0.0
      %898 = vmatpush2.msra.mxu0 0.0
      %899 = vmatprep.subr.mxu0 0.0
      %900 = vmatpush2.msra.mxu0 0.0
      %901 = vmatprep.subr.mxu0 0.0
      %902 = vmatpush2.msra.mxu0 0.0
      %903 = vmatprep.mubr.f32.mxu0 0.0
      %904 = vmatmul.mubr.f32.gmra.mxu0 %v788
      %v905 = vpop.f32.mrf.mxu0
      %v906 = vadd.f32 %v784, %v905
      %v907 = vpop.f32.mrf.mxu0
      %v908 = vadd.f32 %v784, %v907
      %909 = vdwg.mxu0
      %910 = vmatprep.subr.mxu0 0.0
      %911 = vmatpush1.msra.mxu0 0.0
      %912 = vmatprep.subr.mxu0 0.0
      %913 = vmatpush1.msra.mxu0 0.0
      %914 = vmatprep.subr.mxu0 0.0
      %915 = vmatpush1.msra.mxu0 0.0
      %916 = vmatprep.subr.mxu0 0.0
      %917 = vmatpush1.msra.mxu0 0.0
      %918 = vmatprep.subr.mxu0 0.0
      %919 = vmatpush1.msra.mxu0 0.0
      %920 = vmatprep.subr.mxu0 0.0
      %921 = vmatpush1.msra.mxu0 0.0
      %922 = vmatprep.subr.mxu0 0.0
      %923 = vmatpush1.msra.mxu0 0.0
      %924 = vmatprep.subr.mxu0 0.0
      %925 = vmatpush1.msra.mxu0 0.0
      %926 = vmatprep.subr.mxu0 0.0
      %927 = vmatpush1.msra.mxu0 0.0
      %928 = vmatprep.subr.mxu0 0.0
      %929 = vmatpush1.msra.mxu0 0.0
      %930 = vmatprep.subr.mxu0 0.0
      %931 = vmatpush1.msra.mxu0 0.0
      %932 = vmatprep.subr.mxu0 0.0
      %933 = vmatpush1.msra.mxu0 0.0
      %934 = vmatprep.subr.mxu0 %v801
      %935 = vmatpush1.msra.mxu0 %v798
      %936 = vmatprep.subr.mxu0 %v748
      %937 = vmatpush1.msra.mxu0 %v747
      %938 = vmatprep.subr.mxu0 %v732
      %939 = vmatpush1.msra.mxu0 %v731
      %940 = vmatprep.subr.mxu0 %v716
      %941 = vmatpush1.msra.mxu0 %v715
      %942 = vmatprep.subr.mxu0 0.0
      %943 = vmatpush2.msra.mxu0 0.0
      %944 = vmatprep.subr.mxu0 0.0
      %945 = vmatpush2.msra.mxu0 0.0
      %946 = vmatprep.subr.mxu0 0.0
      %947 = vmatpush2.msra.mxu0 0.0
      %948 = vmatprep.subr.mxu0 0.0
      %949 = vmatpush2.msra.mxu0 0.0
      %950 = vmatprep.subr.mxu0 0.0
      %951 = vmatpush2.msra.mxu0 0.0
      %952 = vmatprep.subr.mxu0 0.0
      %953 = vmatpush2.msra.mxu0 0.0
      %954 = vmatprep.subr.mxu0 0.0
      %955 = vmatpush2.msra.mxu0 0.0
      %956 = vmatprep.subr.mxu0 0.0
      %957 = vmatpush2.msra.mxu0 0.0
      %958 = vmatprep.subr.mxu0 0.0
      %959 = vmatpush2.msra.mxu0 0.0
      %960 = vmatprep.subr.mxu0 0.0
      %961 = vmatpush2.msra.mxu0 0.0
      %962 = vmatprep.subr.mxu0 0.0
      %963 = vmatpush2.msra.mxu0 0.0
      %964 = vmatprep.subr.mxu0 0.0
      %965 = vmatpush2.msra.mxu0 0.0
      %966 = vmatprep.subr.mxu0 0.0
      %967 = vmatpush2.msra.mxu0 0.0
      %968 = vmatprep.subr.mxu0 0.0
      %969 = vmatpush2.msra.mxu0 0.0
      %970 = vmatprep.subr.mxu0 0.0
      %971 = vmatpush2.msra.mxu0 0.0
      %972 = vmatprep.subr.mxu0 0.0
      %973 = vmatpush2.msra.mxu0 0.0
      %974 = vmatprep.mubr.f32.mxu0 0.0
      %975 = vmatmul.mubr.f32.gmra.mxu0 %v788
      %v976 = vpop.f32.mrf.mxu0
      %v977 = vadd.f32 %v784, %v976
      %v978 = vpop.f32.mrf.mxu0
      %v979 = vadd.f32 %v784, %v978
      %980 = vdwg.mxu0
      %981 = vmatprep.subr.mxu0 0.0
      %982 = vmatpush1.msra.mxu0 0.0
      %983 = vmatprep.subr.mxu0 0.0
      %984 = vmatpush1.msra.mxu0 0.0
      %985 = vmatprep.subr.mxu0 0.0
      %986 = vmatpush1.msra.mxu0 0.0
      %987 = vmatprep.subr.mxu0 0.0
      %988 = vmatpush1.msra.mxu0 0.0
      %989 = vmatprep.subr.mxu0 0.0
      %990 = vmatpush1.msra.mxu0 0.0
      %991 = vmatprep.subr.mxu0 0.0
      %992 = vmatpush1.msra.mxu0 0.0
      %993 = vmatprep.subr.mxu0 0.0
      %994 = vmatpush1.msra.mxu0 0.0
      %995 = vmatprep.subr.mxu0 0.0
      %996 = vmatpush1.msra.mxu0 0.0
      %997 = vmatprep.subr.mxu0 0.0
      %998 = vmatpush1.msra.mxu0 0.0
      %999 = vmatprep.subr.mxu0 0.0
      %1000 = vmatpush1.msra.mxu0 0.0
      %1001 = vmatprep.subr.mxu0 0.0
      %1002 = vmatpush1.msra.mxu0 0.0
      %1003 = vmatprep.subr.mxu0 0.0
      %1004 = vmatpush1.msra.mxu0 0.0
      %1005 = vmatprep.subr.mxu0 %v807
      %1006 = vmatpush1.msra.mxu0 %v804
      %1007 = vmatprep.subr.mxu0 %v750
      %1008 = vmatpush1.msra.mxu0 %v749
      %1009 = vmatprep.subr.mxu0 %v734
      %1010 = vmatpush1.msra.mxu0 %v733
      %1011 = vmatprep.subr.mxu0 %v718
      %1012 = vmatpush1.msra.mxu0 %v717
      %1013 = vmatprep.subr.mxu0 0.0
      %1014 = vmatpush2.msra.mxu0 0.0
      %1015 = vmatprep.subr.mxu0 0.0
      %1016 = vmatpush2.msra.mxu0 0.0
      %1017 = vmatprep.subr.mxu0 0.0
      %1018 = vmatpush2.msra.mxu0 0.0
      %1019 = vmatprep.subr.mxu0 0.0
      %1020 = vmatpush2.msra.mxu0 0.0
      %1021 = vmatprep.subr.mxu0 0.0
      %1022 = vmatpush2.msra.mxu0 0.0
      %1023 = vmatprep.subr.mxu0 0.0
      %1024 = vmatpush2.msra.mxu0 0.0
      %1025 = vmatprep.subr.mxu0 0.0
      %1026 = vmatpush2.msra.mxu0 0.0
      %1027 = vmatprep.subr.mxu0 0.0
      %1028 = vmatpush2.msra.mxu0 0.0
      %1029 = vmatprep.subr.mxu0 0.0
      %1030 = vmatpush2.msra.mxu0 0.0
      %1031 = vmatprep.subr.mxu0 0.0
      %1032 = vmatpush2.msra.mxu0 0.0
      %1033 = vmatprep.subr.mxu0 0.0
      %1034 = vmatpush2.msra.mxu0 0.0
      %1035 = vmatprep.subr.mxu0 0.0
      %1036 = vmatpush2.msra.mxu0 0.0
      %1037 = vmatprep.subr.mxu0 0.0
      %1038 = vmatpush2.msra.mxu0 0.0
      %1039 = vmatprep.subr.mxu0 0.0
      %1040 = vmatpush2.msra.mxu0 0.0
      %1041 = vmatprep.subr.mxu0 0.0
      %1042 = vmatpush2.msra.mxu0 0.0
      %1043 = vmatprep.subr.mxu0 0.0
      %1044 = vmatpush2.msra.mxu0 0.0
      %1045 = vmatprep.mubr.f32.mxu0 0.0
      %1046 = vmatmul.mubr.f32.gmra.mxu0 %v788
      %v1047 = vpop.f32.mrf.mxu0
      %v1048 = vadd.f32 %v784, %v1047
      %v1049 = vpop.f32.mrf.mxu0
      %v1050 = vadd.f32 %v784, %v1049
      %1051 = vdwg.mxu0
      %1052 = vmatprep.subr.mxu0 0.0
      %1053 = vmatpush1.msra.mxu0 0.0
      %1054 = vmatprep.subr.mxu0 0.0
      %1055 = vmatpush1.msra.mxu0 0.0
      %1056 = vmatprep.subr.mxu0 0.0
      %1057 = vmatpush1.msra.mxu0 0.0
      %1058 = vmatprep.subr.mxu0 0.0
      %1059 = vmatpush1.msra.mxu0 0.0
      %1060 = vmatprep.subr.mxu0 0.0
      %1061 = vmatpush1.msra.mxu0 0.0
      %1062 = vmatprep.subr.mxu0 0.0
      %1063 = vmatpush1.msra.mxu0 0.0
      %1064 = vmatprep.subr.mxu0 0.0
      %1065 = vmatpush1.msra.mxu0 0.0
      %1066 = vmatprep.subr.mxu0 0.0
      %1067 = vmatpush1.msra.mxu0 0.0
      %1068 = vmatprep.subr.mxu0 0.0
      %1069 = vmatpush1.msra.mxu0 0.0
      %1070 = vmatprep.subr.mxu0 0.0
      %1071 = vmatpush1.msra.mxu0 0.0
      %1072 = vmatprep.subr.mxu0 0.0
      %1073 = vmatpush1.msra.mxu0 0.0
      %1074 = vmatprep.subr.mxu0 0.0
      %1075 = vmatpush1.msra.mxu0 0.0
      %1076 = vmatprep.subr.mxu0 %v813
      %1077 = vmatpush1.msra.mxu0 %v810
      %1078 = vmatprep.subr.mxu0 %v752
      %1079 = vmatpush1.msra.mxu0 %v751
      %1080 = vmatprep.subr.mxu0 %v736
      %1081 = vmatpush1.msra.mxu0 %v735
      %1082 = vmatprep.subr.mxu0 %v720
      %1083 = vmatpush1.msra.mxu0 %v719
      %1084 = vmatprep.subr.mxu0 0.0
      %1085 = vmatpush2.msra.mxu0 0.0
      %1086 = vmatprep.subr.mxu0 0.0
      %1087 = vmatpush2.msra.mxu0 0.0
      %1088 = vmatprep.subr.mxu0 0.0
      %1089 = vmatpush2.msra.mxu0 0.0
      %1090 = vmatprep.subr.mxu0 0.0
      %1091 = vmatpush2.msra.mxu0 0.0
      %1092 = vmatprep.subr.mxu0 0.0
      %1093 = vmatpush2.msra.mxu0 0.0
      %1094 = vmatprep.subr.mxu0 0.0
      %1095 = vmatpush2.msra.mxu0 0.0
      %1096 = vmatprep.subr.mxu0 0.0
      %1097 = vmatpush2.msra.mxu0 0.0
      %1098 = vmatprep.subr.mxu0 0.0
      %1099 = vmatpush2.msra.mxu0 0.0
      %1100 = vmatprep.subr.mxu0 0.0
      %1101 = vmatpush2.msra.mxu0 0.0
      %1102 = vmatprep.subr.mxu0 0.0
      %1103 = vmatpush2.msra.mxu0 0.0
      %1104 = vmatprep.subr.mxu0 0.0
      %1105 = vmatpush2.msra.mxu0 0.0
      %1106 = vmatprep.subr.mxu0 0.0
      %1107 = vmatpush2.msra.mxu0 0.0
      %1108 = vmatprep.subr.mxu0 0.0
      %1109 = vmatpush2.msra.mxu0 0.0
      %1110 = vmatprep.subr.mxu0 0.0
      %1111 = vmatpush2.msra.mxu0 0.0
      %1112 = vmatprep.subr.mxu0 0.0
      %1113 = vmatpush2.msra.mxu0 0.0
      %1114 = vmatprep.subr.mxu0 0.0
      %1115 = vmatpush2.msra.mxu0 0.0
      %1116 = vmatprep.mubr.f32.mxu0 0.0
      %1117 = vmatmul.mubr.f32.gmra.mxu0 %v788
      %v1118 = vpop.f32.mrf.mxu0
      %v1119 = vadd.f32 %v784, %v1118
      %v1120 = vpop.f32.mrf.mxu0
      %v1121 = vadd.f32 %v784, %v1120
      %1122 = vdwg.mxu0
      %1123 = vmatprep.subr.mxu0 0.0
      %1124 = vmatpush1.msra.mxu0 0.0
      %1125 = vmatprep.subr.mxu0 0.0
      %1126 = vmatpush1.msra.mxu0 0.0
      %1127 = vmatprep.subr.mxu0 0.0
      %1128 = vmatpush1.msra.mxu0 0.0
      %1129 = vmatprep.subr.mxu0 0.0
      %1130 = vmatpush1.msra.mxu0 0.0
      %1131 = vmatprep.subr.mxu0 0.0
      %1132 = vmatpush1.msra.mxu0 0.0
      %1133 = vmatprep.subr.mxu0 0.0
      %1134 = vmatpush1.msra.mxu0 0.0
      %1135 = vmatprep.subr.mxu0 0.0
      %1136 = vmatpush1.msra.mxu0 0.0
      %1137 = vmatprep.subr.mxu0 0.0
      %1138 = vmatpush1.msra.mxu0 0.0
      %1139 = vmatprep.subr.mxu0 0.0
      %1140 = vmatpush1.msra.mxu0 0.0
      %1141 = vmatprep.subr.mxu0 0.0
      %1142 = vmatpush1.msra.mxu0 0.0
      %1143 = vmatprep.subr.mxu0 0.0
      %1144 = vmatpush1.msra.mxu0 0.0
      %1145 = vmatprep.subr.mxu0 0.0
      %1146 = vmatpush1.msra.mxu0 0.0
      %1147 = vmatprep.subr.mxu0 %v819
      %1148 = vmatpush1.msra.mxu0 %v816
      %1149 = vmatprep.subr.mxu0 %v754
      %1150 = vmatpush1.msra.mxu0 %v753
      %1151 = vmatprep.subr.mxu0 %v738
      %1152 = vmatpush1.msra.mxu0 %v737
      %1153 = vmatprep.subr.mxu0 %v722
      %1154 = vmatpush1.msra.mxu0 %v721
      %1155 = vmatprep.subr.mxu0 0.0
      %1156 = vmatpush2.msra.mxu0 0.0
      %1157 = vmatprep.subr.mxu0 0.0
      %1158 = vmatpush2.msra.mxu0 0.0
      %1159 = vmatprep.subr.mxu0 0.0
      %1160 = vmatpush2.msra.mxu0 0.0
      %1161 = vmatprep.subr.mxu0 0.0
      %1162 = vmatpush2.msra.mxu0 0.0
      %1163 = vmatprep.subr.mxu0 0.0
      %1164 = vmatpush2.msra.mxu0 0.0
      %1165 = vmatprep.subr.mxu0 0.0
      %1166 = vmatpush2.msra.mxu0 0.0
      %1167 = vmatprep.subr.mxu0 0.0
      %1168 = vmatpush2.msra.mxu0 0.0
      %1169 = vmatprep.subr.mxu0 0.0
      %1170 = vmatpush2.msra.mxu0 0.0
      %1171 = vmatprep.subr.mxu0 0.0
      %1172 = vmatpush2.msra.mxu0 0.0
      %1173 = vmatprep.subr.mxu0 0.0
      %1174 = vmatpush2.msra.mxu0 0.0
      %1175 = vmatprep.subr.mxu0 0.0
      %1176 = vmatpush2.msra.mxu0 0.0
      %1177 = vmatprep.subr.mxu0 0.0
      %1178 = vmatpush2.msra.mxu0 0.0
      %1179 = vmatprep.subr.mxu0 0.0
      %1180 = vmatpush2.msra.mxu0 0.0
      %1181 = vmatprep.subr.mxu0 0.0
      %1182 = vmatpush2.msra.mxu0 0.0
      %1183 = vmatprep.subr.mxu0 0.0
      %1184 = vmatpush2.msra.mxu0 0.0
      %1185 = vmatprep.subr.mxu0 0.0
      %1186 = vmatpush2.msra.mxu0 0.0
      %1187 = vmatprep.mubr.f32.mxu0 0.0
      %1188 = vmatmul.mubr.f32.gmra.mxu0 %v788
      %v1189 = vpop.f32.mrf.mxu0
      %v1190 = vadd.f32 %v784, %v1189
      %v1191 = vpop.f32.mrf.mxu0
      %v1192 = vadd.f32 %v784, %v1191
      %1193 = vdwg.mxu0
      %1194 = vmatprep.subr.mxu0 0.0
      %1195 = vmatpush1.msra.mxu0 0.0
      %1196 = vmatprep.subr.mxu0 0.0
      %1197 = vmatpush1.msra.mxu0 0.0
      %1198 = vmatprep.subr.mxu0 0.0
      %1199 = vmatpush1.msra.mxu0 0.0
      %1200 = vmatprep.subr.mxu0 0.0
      %1201 = vmatpush1.msra.mxu0 0.0
      %1202 = vmatprep.subr.mxu0 0.0
      %1203 = vmatpush1.msra.mxu0 0.0
      %1204 = vmatprep.subr.mxu0 0.0
      %1205 = vmatpush1.msra.mxu0 0.0
      %1206 = vmatprep.subr.mxu0 0.0
      %1207 = vmatpush1.msra.mxu0 0.0
      %1208 = vmatprep.subr.mxu0 0.0
      %1209 = vmatpush1.msra.mxu0 0.0
      %1210 = vmatprep.subr.mxu0 0.0
      %1211 = vmatpush1.msra.mxu0 0.0
      %1212 = vmatprep.subr.mxu0 0.0
      %1213 = vmatpush1.msra.mxu0 0.0
      %1214 = vmatprep.subr.mxu0 0.0
      %1215 = vmatpush1.msra.mxu0 0.0
      %1216 = vmatprep.subr.mxu0 0.0
      %1217 = vmatpush1.msra.mxu0 0.0
      %1218 = vmatprep.subr.mxu0 %v825
      %1219 = vmatpush1.msra.mxu0 %v822
      %1220 = vmatprep.subr.mxu0 %v756
      %1221 = vmatpush1.msra.mxu0 %v755
      %1222 = vmatprep.subr.mxu0 %v740
      %1223 = vmatpush1.msra.mxu0 %v739
      %1224 = vmatprep.subr.mxu0 %v724
      %1225 = vmatpush1.msra.mxu0 %v723
      %1226 = vmatprep.subr.mxu0 0.0
      %1227 = vmatpush2.msra.mxu0 0.0
      %1228 = vmatprep.subr.mxu0 0.0
      %1229 = vmatpush2.msra.mxu0 0.0
      %1230 = vmatprep.subr.mxu0 0.0
      %1231 = vmatpush2.msra.mxu0 0.0
      %1232 = vmatprep.subr.mxu0 0.0
      %1233 = vmatpush2.msra.mxu0 0.0
      %1234 = vmatprep.subr.mxu0 0.0
      %1235 = vmatpush2.msra.mxu0 0.0
      %1236 = vmatprep.subr.mxu0 0.0
      %1237 = vmatpush2.msra.mxu0 0.0
      %1238 = vmatprep.subr.mxu0 0.0
      %1239 = vmatpush2.msra.mxu0 0.0
      %1240 = vmatprep.subr.mxu0 0.0
      %1241 = vmatpush2.msra.mxu0 0.0
      %1242 = vmatprep.subr.mxu0 0.0
      %1243 = vmatpush2.msra.mxu0 0.0
      %1244 = vmatprep.subr.mxu0 0.0
      %1245 = vmatpush2.msra.mxu0 0.0
      %1246 = vmatprep.subr.mxu0 0.0
      %1247 = vmatpush2.msra.mxu0 0.0
      %1248 = vmatprep.subr.mxu0 0.0
      %1249 = vmatpush2.msra.mxu0 0.0
      %1250 = vmatprep.subr.mxu0 0.0
      %1251 = vmatpush2.msra.mxu0 0.0
      %1252 = vmatprep.subr.mxu0 0.0
      %1253 = vmatpush2.msra.mxu0 0.0
      %1254 = vmatprep.subr.mxu0 0.0
      %1255 = vmatpush2.msra.mxu0 0.0
      %1256 = vmatprep.subr.mxu0 0.0
      %1257 = vmatpush2.msra.mxu0 0.0
      %1258 = vmatprep.mubr.f32.mxu0 0.0
      %1259 = vmatmul.mubr.f32.gmra.mxu0 %v788
      %v1260 = vpop.f32.mrf.mxu0
      %v1261 = vadd.f32 %v784, %v1260
      %v1262 = vpop.f32.mrf.mxu0
      %v1263 = vadd.f32 %v784, %v1262
      %1264 = vdwg.mxu0
      %1265 = vmatprep.subr.mxu0 0.0
      %1266 = vmatpush1.msra.mxu0 0.0
      %1267 = vmatprep.subr.mxu0 0.0
      %1268 = vmatpush1.msra.mxu0 0.0
      %1269 = vmatprep.subr.mxu0 0.0
      %1270 = vmatpush1.msra.mxu0 0.0
      %1271 = vmatprep.subr.mxu0 0.0
      %1272 = vmatpush1.msra.mxu0 0.0
      %1273 = vmatprep.subr.mxu0 0.0
      %1274 = vmatpush1.msra.mxu0 0.0
      %1275 = vmatprep.subr.mxu0 0.0
      %1276 = vmatpush1.msra.mxu0 0.0
      %1277 = vmatprep.subr.mxu0 0.0
      %1278 = vmatpush1.msra.mxu0 0.0
      %1279 = vmatprep.subr.mxu0 0.0
      %1280 = vmatpush1.msra.mxu0 0.0
      %1281 = vmatprep.subr.mxu0 0.0
      %1282 = vmatpush1.msra.mxu0 0.0
      %1283 = vmatprep.subr.mxu0 0.0
      %1284 = vmatpush1.msra.mxu0 0.0
      %1285 = vmatprep.subr.mxu0 0.0
      %1286 = vmatpush1.msra.mxu0 0.0
      %1287 = vmatprep.subr.mxu0 0.0
      %1288 = vmatpush1.msra.mxu0 0.0
      %1289 = vmatprep.subr.mxu0 %v831
      %1290 = vmatpush1.msra.mxu0 %v828
      %1291 = vmatprep.subr.mxu0 %v758
      %1292 = vmatpush1.msra.mxu0 %v757
      %1293 = vmatprep.subr.mxu0 %v742
      %1294 = vmatpush1.msra.mxu0 %v741
      %1295 = vmatprep.subr.mxu0 %v726
      %1296 = vmatpush1.msra.mxu0 %v725
      %1297 = vmatprep.subr.mxu0 0.0
      %1298 = vmatpush2.msra.mxu0 0.0
      %1299 = vmatprep.subr.mxu0 0.0
      %1300 = vmatpush2.msra.mxu0 0.0
      %1301 = vmatprep.subr.mxu0 0.0
      %1302 = vmatpush2.msra.mxu0 0.0
      %1303 = vmatprep.subr.mxu0 0.0
      %1304 = vmatpush2.msra.mxu0 0.0
      %1305 = vmatprep.subr.mxu0 0.0
      %1306 = vmatpush2.msra.mxu0 0.0
      %1307 = vmatprep.subr.mxu0 0.0
      %1308 = vmatpush2.msra.mxu0 0.0
      %1309 = vmatprep.subr.mxu0 0.0
      %1310 = vmatpush2.msra.mxu0 0.0
      %1311 = vmatprep.subr.mxu0 0.0
      %1312 = vmatpush2.msra.mxu0 0.0
      %1313 = vmatprep.subr.mxu0 0.0
      %1314 = vmatpush2.msra.mxu0 0.0
      %1315 = vmatprep.subr.mxu0 0.0
      %1316 = vmatpush2.msra.mxu0 0.0
      %1317 = vmatprep.subr.mxu0 0.0
      %1318 = vmatpush2.msra.mxu0 0.0
      %1319 = vmatprep.subr.mxu0 0.0
      %1320 = vmatpush2.msra.mxu0 0.0
      %1321 = vmatprep.subr.mxu0 0.0
      %1322 = vmatpush2.msra.mxu0 0.0
      %1323 = vmatprep.subr.mxu0 0.0
      %1324 = vmatpush2.msra.mxu0 0.0
      %1325 = vmatprep.subr.mxu0 0.0
      %1326 = vmatpush2.msra.mxu0 0.0
      %1327 = vmatprep.subr.mxu0 0.0
      %1328 = vmatpush2.msra.mxu0 0.0
      %1329 = vmatprep.mubr.f32.mxu0 0.0
      %1330 = vmatmul.mubr.f32.gmra.mxu0 %v788
      %v1331 = vpop.f32.mrf.mxu0
      %v1332 = vadd.f32 %v784, %v1331
      %v1333 = vpop.f32.mrf.mxu0
      %v1334 = vadd.f32 %v784, %v1333
      %1335 = vdwg.mxu0
      %1336 = vmatprep.subr.mxu0 0.0
      %1337 = vmatpush1.msra.mxu0 0.0
      %1338 = vmatprep.subr.mxu0 0.0
      %1339 = vmatpush1.msra.mxu0 0.0
      %1340 = vmatprep.subr.mxu0 0.0
      %1341 = vmatpush1.msra.mxu0 0.0
      %1342 = vmatprep.subr.mxu0 0.0
      %1343 = vmatpush1.msra.mxu0 0.0
      %1344 = vmatprep.subr.mxu0 0.0
      %1345 = vmatpush1.msra.mxu0 0.0
      %1346 = vmatprep.subr.mxu0 0.0
      %1347 = vmatpush1.msra.mxu0 0.0
      %1348 = vmatprep.subr.mxu0 0.0
      %1349 = vmatpush1.msra.mxu0 0.0
      %1350 = vmatprep.subr.mxu0 0.0
      %1351 = vmatpush1.msra.mxu0 0.0
      %1352 = vmatprep.subr.mxu0 0.0
      %1353 = vmatpush1.msra.mxu0 0.0
      %1354 = vmatprep.subr.mxu0 0.0
      %1355 = vmatpush1.msra.mxu0 0.0
      %1356 = vmatprep.subr.mxu0 0.0
      %1357 = vmatpush1.msra.mxu0 0.0
      %1358 = vmatprep.subr.mxu0 0.0
      %1359 = vmatpush1.msra.mxu0 0.0
      %1360 = vmatprep.subr.mxu0 %v837
      %1361 = vmatpush1.msra.mxu0 %v834
      %1362 = vmatprep.subr.mxu0 %v760
      %1363 = vmatpush1.msra.mxu0 %v759
      %1364 = vmatprep.subr.mxu0 %v744
      %1365 = vmatpush1.msra.mxu0 %v743
      %1366 = vmatprep.subr.mxu0 %v728
      %1367 = vmatpush1.msra.mxu0 %v727
      %1368 = vmatprep.subr.mxu0 0.0
      %1369 = vmatpush2.msra.mxu0 0.0
      %1370 = vmatprep.subr.mxu0 0.0
      %1371 = vmatpush2.msra.mxu0 0.0
      %1372 = vmatprep.subr.mxu0 0.0
      %1373 = vmatpush2.msra.mxu0 0.0
      %1374 = vmatprep.subr.mxu0 0.0
      %1375 = vmatpush2.msra.mxu0 0.0
      %1376 = vmatprep.subr.mxu0 0.0
      %1377 = vmatpush2.msra.mxu0 0.0
      %1378 = vmatprep.subr.mxu0 0.0
      %1379 = vmatpush2.msra.mxu0 0.0
      %1380 = vmatprep.subr.mxu0 0.0
      %1381 = vmatpush2.msra.mxu0 0.0
      %1382 = vmatprep.subr.mxu0 0.0
      %1383 = vmatpush2.msra.mxu0 0.0
      %1384 = vmatprep.subr.mxu0 0.0
      %1385 = vmatpush2.msra.mxu0 0.0
      %1386 = vmatprep.subr.mxu0 0.0
      %1387 = vmatpush2.msra.mxu0 0.0
      %1388 = vmatprep.subr.mxu0 0.0
      %1389 = vmatpush2.msra.mxu0 0.0
      %1390 = vmatprep.subr.mxu0 0.0
      %1391 = vmatpush2.msra.mxu0 0.0
      %1392 = vmatprep.subr.mxu0 0.0
      %1393 = vmatpush2.msra.mxu0 0.0
      %1394 = vmatprep.subr.mxu0 0.0
      %1395 = vmatpush2.msra.mxu0 0.0
      %1396 = vmatprep.subr.mxu0 0.0
      %1397 = vmatpush2.msra.mxu0 0.0
      %1398 = vmatprep.subr.mxu0 0.0
      %1399 = vmatpush2.msra.mxu0 0.0
      %1400 = vmatprep.mubr.f32.mxu0 0.0
      %1401 = vmatmul.mubr.f32.gmra.mxu0 %v788
      %v1402 = vpop.f32.mrf.mxu0
      %v1403 = vadd.f32 %v784, %v1402
      %v1404 = vpop.f32.mrf.mxu0
      %v1405 = vadd.f32 %v784, %v1404
      %1406 = vdwg.mxu0
      %v1407 = vmax.f32 %v906, 0.0
      %v1408 = vmax.f32 %v908, 0.0
      %v1409 = vmax.f32 %v977, 0.0
      %v1410 = vmax.f32 %v979, 0.0
      %v1411 = vmax.f32 %v1048, 0.0
      %v1412 = vmax.f32 %v1050, 0.0
      %v1413 = vmax.f32 %v1119, 0.0
      %v1414 = vmax.f32 %v1121, 0.0
      %v1415 = vmax.f32 %v1190, 0.0
      %v1416 = vmax.f32 %v1192, 0.0
      %v1417 = vmax.f32 %v1261, 0.0
      %v1418 = vmax.f32 %v1263, 0.0
      %v1419 = vmax.f32 %v1332, 0.0
      %v1420 = vmax.f32 %v1334, 0.0
      %v1421 = vmax.f32 %v1403, 0.0
      %v1422 = vmax.f32 %v1405, 0.0
      %v1423 = vld [vmem:[%s2] sm:$0xff]
      %v1424 = vld [vmem:[%s2 + $0x8] sm:$0xff]
      %v1425 = vld [vmem:[%s2 + $0x10] sm:$0xff]
      %v1426 = vld [vmem:[%s2 + $0x18] sm:$0xff]
      %v1427 = vld [vmem:[%s2 + $0x20] sm:$0xff]
      %v1428 = vld [vmem:[%s2 + $0x28] sm:$0xff]
      %v1429 = vld [vmem:[%s2 + $0x30] sm:$0xff]
      %v1430 = vld [vmem:[%s2 + $0x38] sm:$0xff]
      %v1431 = vld [vmem:[%s2 + $0x40] sm:$0xff]
      %v1432 = vld [vmem:[%s2 + $0x48] sm:$0xff]
      %v1433 = vld [vmem:[%s2 + $0x50] sm:$0xff]
      %v1434 = vld [vmem:[%s2 + $0x58] sm:$0xff]
      %v1435 = vld [vmem:[%s2 + $0x60] sm:$0xff]
      %v1436 = vld [vmem:[%s2 + $0x68] sm:$0xff]
      %v1437 = vld [vmem:[%s2 + $0x70] sm:$0xff]
      %v1438 = vld [vmem:[%s2 + $0x78] sm:$0xff]
      %v1439 = vld [vmem:[%s2 + $0x80] sm:$0xff]
      %v1440 = vld [vmem:[%s2 + $0x88] sm:$0xff]
      %v1441 = vld [vmem:[%s2 + $0x90] sm:$0xff]
      %v1442 = vld [vmem:[%s2 + $0x98] sm:$0xff]
      %v1443 = vld [vmem:[%s2 + $0xa0] sm:$0xff]
      %v1444 = vld [vmem:[%s2 + $0xa8] sm:$0xff]
      %v1445 = vld [vmem:[%s2 + $0xb0] sm:$0xff]
      %v1446 = vld [vmem:[%s2 + $0xb8] sm:$0xff]
      %v1447 = vld [vmem:[%s2 + $0xc0] sm:$0xff]
      %v1448 = vld [vmem:[%s2 + $0xc8] sm:$0xff]
      %v1449 = vld [vmem:[%s2 + $0xd0] sm:$0xff]
      %v1450 = vld [vmem:[%s2 + $0xd8] sm:$0xff]
      %v1451 = vld [vmem:[%s2 + $0xe0] sm:$0xff]
      %v1452 = vld [vmem:[%s2 + $0xe8] sm:$0xff]
      %v1453 = vld [vmem:[%s2 + $0xf0] sm:$0xff]
      %v1454 = vld [vmem:[%s2 + $0xf8] sm:$0xff]
      %v1455 = vld [vmem:[%s2 + $0x100] sm:$0xff]
      %v1456 = vld [vmem:[%s2 + $0x108] sm:$0xff]
      %v1457 = vld [vmem:[%s2 + $0x110] sm:$0xff]
      %v1458 = vld [vmem:[%s2 + $0x118] sm:$0xff]
      %v1459 = vld [vmem:[%s2 + $0x120] sm:$0xff]
      %v1460 = vld [vmem:[%s2 + $0x128] sm:$0xff]
      %v1461 = vld [vmem:[%s2 + $0x130] sm:$0xff]
      %v1462 = vld [vmem:[%s2 + $0x138] sm:$0xff]
      %v1463 = vld [vmem:[%s2 + $0x140] sm:$0xff]
      %v1464 = vld [vmem:[%s2 + $0x148] sm:$0xff]
      %v1465 = vld [vmem:[%s2 + $0x150] sm:$0xff]
      %v1466 = vld [vmem:[%s2 + $0x158] sm:$0xff]
      %v1467 = vld [vmem:[%s2 + $0x160] sm:$0xff]
      %v1468 = vld [vmem:[%s2 + $0x168] sm:$0xff]
      %v1469 = vld [vmem:[%s2 + $0x170] sm:$0xff]
      %v1470 = vld [vmem:[%s2 + $0x178] sm:$0xff]
      %v1471 = vld [vmem:[%s2 + $0x180] sm:$0xff]
      %v1472 = vld [vmem:[%s2 + $0x188] sm:$0xff]
      %v1473 = vld [vmem:[%s2 + $0x190] sm:$0xff]
      %v1474 = vld [vmem:[%s2 + $0x198] sm:$0xff]
      %v1475 = vld [vmem:[%s2 + $0x1a0] sm:$0xff]
      %v1476 = vld [vmem:[%s2 + $0x1a8] sm:$0xff]
      %v1477 = vld [vmem:[%s2 + $0x1b0] sm:$0xff]
      %v1478 = vld [vmem:[%s2 + $0x1b8] sm:$0xff]
      %v1479 = vld [vmem:[%s2 + $0x1c0] sm:$0xff]
      %v1480 = vld [vmem:[%s2 + $0x1c8] sm:$0xff]
      %v1481 = vld [vmem:[%s2 + $0x1d0] sm:$0xff]
      %v1482 = vld [vmem:[%s2 + $0x1d8] sm:$0xff]
      %v1483 = vld [vmem:[%s2 + $0x1e0] sm:$0xff]
      %v1484 = vld [vmem:[%s2 + $0x1e8] sm:$0xff]
      %v1485 = vld [vmem:[%s2 + $0x1f0] sm:$0xff]
      %v1486 = vld [vmem:[%s2 + $0x1f8] sm:$0xff]
      %v1487 = vld [vmem:[%s2 + $0x200] sm:$0xff]
      %v1488 = vld [vmem:[%s2 + $0x208] sm:$0xff]
      %v1489 = vld [vmem:[%s2 + $0x210] sm:$0xff]
      %v1490 = vld [vmem:[%s2 + $0x218] sm:$0xff]
      %v1491 = vld [vmem:[%s2 + $0x220] sm:$0xff]
      %v1492 = vld [vmem:[%s2 + $0x228] sm:$0xff]
      %v1493 = vld [vmem:[%s2 + $0x230] sm:$0xff]
      %v1494 = vld [vmem:[%s2 + $0x238] sm:$0xff]
      %v1495 = vld [vmem:[%s2 + $0x240] sm:$0xff]
      %v1496 = vld [vmem:[%s2 + $0x248] sm:$0xff]
      %v1497 = vld [vmem:[%s2 + $0x250] sm:$0xff]
      %v1498 = vld [vmem:[%s2 + $0x258] sm:$0xff]
      %v1499 = vld [vmem:[%s2 + $0x260] sm:$0xff]
      %v1500 = vld [vmem:[%s2 + $0x268] sm:$0xff]
      %v1501 = vld [vmem:[%s2 + $0x270] sm:$0xff]
      %v1502 = vld [vmem:[%s2 + $0x278] sm:$0xff]
      %v1503 = vld [vmem:[%s2 + $0x280] sm:$0xff]
      %v1504 = vld [vmem:[%s2 + $0x288] sm:$0xff]
      %v1505 = vld [vmem:[%s2 + $0x290] sm:$0xff]
      %v1506 = vld [vmem:[%s2 + $0x298] sm:$0xff]
      %v1507 = vld [vmem:[%s2 + $0x2a0] sm:$0xff]
      %v1508 = vld [vmem:[%s2 + $0x2a8] sm:$0xff]
      %v1509 = vld [vmem:[%s2 + $0x2b0] sm:$0xff]
      %v1510 = vld [vmem:[%s2 + $0x2b8] sm:$0xff]
      %v1511 = vld [vmem:[%s2 + $0x2c0] sm:$0xff]
      %v1512 = vld [vmem:[%s2 + $0x2c8] sm:$0xff]
      %v1513 = vld [vmem:[%s2 + $0x2d0] sm:$0xff]
      %v1514 = vld [vmem:[%s2 + $0x2d8] sm:$0xff]
      %v1515 = vld [vmem:[%s2 + $0x2e0] sm:$0xff]
      %v1516 = vld [vmem:[%s2 + $0x2e8] sm:$0xff]
      %v1517 = vld [vmem:[%s2 + $0x2f0] sm:$0xff]
      %v1518 = vld [vmem:[%s2 + $0x2f8] sm:$0xff]
      %v1519 = vld [vmem:[%s2 + $0x300] sm:$0xff]
      %v1520 = vld [vmem:[%s2 + $0x308] sm:$0xff]
      %v1521 = vld [vmem:[%s2 + $0x310] sm:$0xff]
      %v1522 = vld [vmem:[%s2 + $0x318] sm:$0xff]
      %v1523 = vld [vmem:[%s2 + $0x320] sm:$0xff]
      %v1524 = vld [vmem:[%s2 + $0x328] sm:$0xff]
      %v1525 = vld [vmem:[%s2 + $0x330] sm:$0xff]
      %v1526 = vld [vmem:[%s2 + $0x338] sm:$0xff]
      %v1527 = vld [vmem:[%s2 + $0x340] sm:$0xff]
      %v1528 = vld [vmem:[%s2 + $0x348] sm:$0xff]
      %v1529 = vld [vmem:[%s2 + $0x350] sm:$0xff]
      %v1530 = vld [vmem:[%s2 + $0x358] sm:$0xff]
      %v1531 = vld [vmem:[%s2 + $0x360] sm:$0xff]
      %v1532 = vld [vmem:[%s2 + $0x368] sm:$0xff]
      %v1533 = vld [vmem:[%s2 + $0x370] sm:$0xff]
      %v1534 = vld [vmem:[%s2 + $0x378] sm:$0xff]
      %v1535 = vld [vmem:[%s2 + $0x380] sm:$0xff]
      %v1536 = vld [vmem:[%s2 + $0x388] sm:$0xff]
      %v1537 = vld [vmem:[%s2 + $0x390] sm:$0xff]
      %v1538 = vld [vmem:[%s2 + $0x398] sm:$0xff]
      %v1539 = vld [vmem:[%s2 + $0x3a0] sm:$0xff]
      %v1540 = vld [vmem:[%s2 + $0x3a8] sm:$0xff]
      %v1541 = vld [vmem:[%s2 + $0x3b0] sm:$0xff]
      %v1542 = vld [vmem:[%s2 + $0x3b8] sm:$0xff]
      %v1543 = vld [vmem:[%s2 + $0x3c0] sm:$0xff]
      %v1544 = vld [vmem:[%s2 + $0x3c8] sm:$0xff]
      %v1545 = vld [vmem:[%s2 + $0x3d0] sm:$0xff]
      %v1546 = vld [vmem:[%s2 + $0x3d8] sm:$0xff]
      %v1547 = vld [vmem:[%s2 + $0x3e0] sm:$0xff]
      %v1548 = vld [vmem:[%s2 + $0x3e8] sm:$0xff]
      %v1549 = vld [vmem:[%s2 + $0x3f0] sm:$0xff]
      %v1550 = vld [vmem:[%s2 + $0x3f8] sm:$0xff]
      %v1551 = vld [vmem:[%s2 + $0x400] sm:$0xff]
      %v1552 = vld [vmem:[%s2 + $0x408] sm:$0xff]
      %v1553 = vld [vmem:[%s2 + $0x410] sm:$0xff]
      %v1554 = vld [vmem:[%s2 + $0x418] sm:$0xff]
      %v1555 = vld [vmem:[%s2 + $0x420] sm:$0xff]
      %v1556 = vld [vmem:[%s2 + $0x428] sm:$0xff]
      %v1557 = vld [vmem:[%s2 + $0x430] sm:$0xff]
      %v1558 = vld [vmem:[%s2 + $0x438] sm:$0xff]
      %v1559 = vld [vmem:[%s2 + $0x440] sm:$0xff]
      %v1560 = vld [vmem:[%s2 + $0x448] sm:$0xff]
      %v1561 = vld [vmem:[%s2 + $0x450] sm:$0xff]
      %v1562 = vld [vmem:[%s2 + $0x458] sm:$0xff]
      %v1563 = vld [vmem:[%s2 + $0x460] sm:$0xff]
      %v1564 = vld [vmem:[%s2 + $0x468] sm:$0xff]
      %v1565 = vld [vmem:[%s2 + $0x470] sm:$0xff]
      %v1566 = vld [vmem:[%s2 + $0x478] sm:$0xff]
      %v1567 = vld [vmem:[%s2 + $0x480] sm:$0xff]
      %v1568 = vld [vmem:[%s2 + $0x488] sm:$0xff]
      %v1569 = vld [vmem:[%s2 + $0x490] sm:$0xff]
      %v1570 = vld [vmem:[%s2 + $0x498] sm:$0xff]
      %v1571 = vld [vmem:[%s2 + $0x4a0] sm:$0xff]
      %v1572 = vld [vmem:[%s2 + $0x4a8] sm:$0xff]
      %v1573 = vld [vmem:[%s2 + $0x4b0] sm:$0xff]
      %v1574 = vld [vmem:[%s2 + $0x4b8] sm:$0xff]
      %v1575 = vld [vmem:[%s2 + $0x4c0] sm:$0xff]
      %v1576 = vld [vmem:[%s2 + $0x4c8] sm:$0xff]
      %v1577 = vld [vmem:[%s2 + $0x4d0] sm:$0xff]
      %v1578 = vld [vmem:[%s2 + $0x4d8] sm:$0xff]
      %v1579 = vld [vmem:[%s2 + $0x4e0] sm:$0xff]
      %v1580 = vld [vmem:[%s2 + $0x4e8] sm:$0xff]
      %v1581 = vld [vmem:[%s2 + $0x4f0] sm:$0xff]
      %v1582 = vld [vmem:[%s2 + $0x4f8] sm:$0xff]
      %v1583 = vld [vmem:[%s2 + $0x500] sm:$0xff]
      %v1584 = vld [vmem:[%s2 + $0x508] sm:$0xff]
      %v1585 = vld [vmem:[%s2 + $0x510] sm:$0xff]
      %v1586 = vld [vmem:[%s2 + $0x518] sm:$0xff]
      %v1587 = vld [vmem:[%s2 + $0x520] sm:$0xff]
      %v1588 = vld [vmem:[%s2 + $0x528] sm:$0xff]
      %v1589 = vld [vmem:[%s2 + $0x530] sm:$0xff]
      %v1590 = vld [vmem:[%s2 + $0x538] sm:$0xff]
      %v1591 = vld [vmem:[%s2 + $0x540] sm:$0xff]
      %v1592 = vld [vmem:[%s2 + $0x548] sm:$0xff]
      %v1593 = vld [vmem:[%s2 + $0x550] sm:$0xff]
      %v1594 = vld [vmem:[%s2 + $0x558] sm:$0xff]
      %v1595 = vld [vmem:[%s2 + $0x560] sm:$0xff]
      %v1596 = vld [vmem:[%s2 + $0x568] sm:$0xff]
      %v1597 = vld [vmem:[%s2 + $0x570] sm:$0xff]
      %v1598 = vld [vmem:[%s2 + $0x578] sm:$0xff]
      %v1599 = vld [vmem:[%s2 + $0x580] sm:$0xff]
      %v1600 = vld [vmem:[%s2 + $0x588] sm:$0xff]
      %v1601 = vld [vmem:[%s2 + $0x590] sm:$0xff]
      %v1602 = vld [vmem:[%s2 + $0x598] sm:$0xff]
      %v1603 = vld [vmem:[%s2 + $0x5a0] sm:$0xff]
      %v1604 = vld [vmem:[%s2 + $0x5a8] sm:$0xff]
      %v1605 = vld [vmem:[%s2 + $0x5b0] sm:$0xff]
      %v1606 = vld [vmem:[%s2 + $0x5b8] sm:$0xff]
      %v1607 = vld [vmem:[%s2 + $0x5c0] sm:$0xff]
      %v1608 = vld [vmem:[%s2 + $0x5c8] sm:$0xff]
      %v1609 = vld [vmem:[%s2 + $0x5d0] sm:$0xff]
      %v1610 = vld [vmem:[%s2 + $0x5d8] sm:$0xff]
      %v1611 = vld [vmem:[%s2 + $0x5e0] sm:$0xff]
      %v1612 = vld [vmem:[%s2 + $0x5e8] sm:$0xff]
      %v1613 = vld [vmem:[%s2 + $0x5f0] sm:$0xff]
      %v1614 = vld [vmem:[%s2 + $0x5f8] sm:$0xff]
      %v1615 = vld [vmem:[%s2 + $0x600] sm:$0xff]
      %v1616 = vld [vmem:[%s2 + $0x608] sm:$0xff]
      %v1617 = vld [vmem:[%s2 + $0x610] sm:$0xff]
      %v1618 = vld [vmem:[%s2 + $0x618] sm:$0xff]
      %v1619 = vld [vmem:[%s2 + $0x620] sm:$0xff]
      %v1620 = vld [vmem:[%s2 + $0x628] sm:$0xff]
      %v1621 = vld [vmem:[%s2 + $0x630] sm:$0xff]
      %v1622 = vld [vmem:[%s2 + $0x638] sm:$0xff]
      %v1623 = vld [vmem:[%s2 + $0x640] sm:$0xff]
      %v1624 = vld [vmem:[%s2 + $0x648] sm:$0xff]
      %v1625 = vld [vmem:[%s2 + $0x650] sm:$0xff]
      %v1626 = vld [vmem:[%s2 + $0x658] sm:$0xff]
      %v1627 = vld [vmem:[%s2 + $0x660] sm:$0xff]
      %v1628 = vld [vmem:[%s2 + $0x668] sm:$0xff]
      %v1629 = vld [vmem:[%s2 + $0x670] sm:$0xff]
      %v1630 = vld [vmem:[%s2 + $0x678] sm:$0xff]
      %v1631 = vld [vmem:[%s2 + $0x680] sm:$0xff]
      %v1632 = vld [vmem:[%s2 + $0x688] sm:$0xff]
      %v1633 = vld [vmem:[%s2 + $0x690] sm:$0xff]
      %v1634 = vld [vmem:[%s2 + $0x698] sm:$0xff]
      %v1635 = vld [vmem:[%s2 + $0x6a0] sm:$0xff]
      %v1636 = vld [vmem:[%s2 + $0x6a8] sm:$0xff]
      %v1637 = vld [vmem:[%s2 + $0x6b0] sm:$0xff]
      %v1638 = vld [vmem:[%s2 + $0x6b8] sm:$0xff]
      %v1639 = vld [vmem:[%s2 + $0x6c0] sm:$0xff]
      %v1640 = vld [vmem:[%s2 + $0x6c8] sm:$0xff]
      %v1641 = vld [vmem:[%s2 + $0x6d0] sm:$0xff]
      %v1642 = vld [vmem:[%s2 + $0x6d8] sm:$0xff]
      %v1643 = vld [vmem:[%s2 + $0x6e0] sm:$0xff]
      %v1644 = vld [vmem:[%s2 + $0x6e8] sm:$0xff]
      %v1645 = vld [vmem:[%s2 + $0x6f0] sm:$0xff]
      %v1646 = vld [vmem:[%s2 + $0x6f8] sm:$0xff]
      %v1647 = vld [vmem:[%s2 + $0x700] sm:$0xff]
      %v1648 = vld [vmem:[%s2 + $0x708] sm:$0xff]
      %v1649 = vld [vmem:[%s2 + $0x710] sm:$0xff]
      %v1650 = vld [vmem:[%s2 + $0x718] sm:$0xff]
      %v1651 = vld [vmem:[%s2 + $0x720] sm:$0xff]
      %v1652 = vld [vmem:[%s2 + $0x728] sm:$0xff]
      %v1653 = vld [vmem:[%s2 + $0x730] sm:$0xff]
      %v1654 = vld [vmem:[%s2 + $0x738] sm:$0xff]
      %v1655 = vld [vmem:[%s2 + $0x740] sm:$0xff]
      %v1656 = vld [vmem:[%s2 + $0x748] sm:$0xff]
      %v1657 = vld [vmem:[%s2 + $0x750] sm:$0xff]
      %v1658 = vld [vmem:[%s2 + $0x758] sm:$0xff]
      %v1659 = vld [vmem:[%s2 + $0x760] sm:$0xff]
      %v1660 = vld [vmem:[%s2 + $0x768] sm:$0xff]
      %v1661 = vld [vmem:[%s2 + $0x770] sm:$0xff]
      %v1662 = vld [vmem:[%s2 + $0x778] sm:$0xff]
      %v1663 = vld [vmem:[%s2 + $0x780] sm:$0xff]
      %v1664 = vld [vmem:[%s2 + $0x788] sm:$0xff]
      %v1665 = vld [vmem:[%s2 + $0x790] sm:$0xff]
      %v1666 = vld [vmem:[%s2 + $0x798] sm:$0xff]
      %v1667 = vld [vmem:[%s2 + $0x7a0] sm:$0xff]
      %v1668 = vld [vmem:[%s2 + $0x7a8] sm:$0xff]
      %v1669 = vld [vmem:[%s2 + $0x7b0] sm:$0xff]
      %v1670 = vld [vmem:[%s2 + $0x7b8] sm:$0xff]
      %v1671 = vld [vmem:[%s2 + $0x7c0] sm:$0xff]
      %v1672 = vld [vmem:[%s2 + $0x7c8] sm:$0xff]
      %v1673 = vld [vmem:[%s2 + $0x7d0] sm:$0xff]
      %v1674 = vld [vmem:[%s2 + $0x7d8] sm:$0xff]
      %v1675 = vld [vmem:[%s2 + $0x7e0] sm:$0xff]
      %v1676 = vld [vmem:[%s2 + $0x7e8] sm:$0xff]
      %v1677 = vld [vmem:[%s2 + $0x7f0] sm:$0xff]
      %v1678 = vld [vmem:[%s2 + $0x7f8] sm:$0xff]
      %1679 = vmatprep.subr.mxu0 0.0
      %1680 = vmatpush1.msra.mxu0 %v1438
      %1681 = vmatprep.subr.mxu0 0.0
      %1682 = vmatpush1.msra.mxu0 %v1437
      %1683 = vmatprep.subr.mxu0 0.0
      %1684 = vmatpush1.msra.mxu0 %v1436
      %1685 = vmatprep.subr.mxu0 0.0
      %1686 = vmatpush1.msra.mxu0 %v1435
      %1687 = vmatprep.subr.mxu0 0.0
      %1688 = vmatpush1.msra.mxu0 %v1434
      %1689 = vmatprep.subr.mxu0 0.0
      %1690 = vmatpush1.msra.mxu0 %v1433
      %1691 = vmatprep.subr.mxu0 0.0
      %1692 = vmatpush1.msra.mxu0 %v1432
      %1693 = vmatprep.subr.mxu0 0.0
      %1694 = vmatpush1.msra.mxu0 %v1431
      %1695 = vmatprep.subr.mxu0 0.0
      %1696 = vmatpush1.msra.mxu0 %v1430
      %1697 = vmatprep.subr.mxu0 0.0
      %1698 = vmatpush1.msra.mxu0 %v1429
      %1699 = vmatprep.subr.mxu0 0.0
      %1700 = vmatpush1.msra.mxu0 %v1428
      %1701 = vmatprep.subr.mxu0 0.0
      %1702 = vmatpush1.msra.mxu0 %v1427
      %1703 = vmatprep.subr.mxu0 0.0
      %1704 = vmatpush1.msra.mxu0 %v1426
      %1705 = vmatprep.subr.mxu0 0.0
      %1706 = vmatpush1.msra.mxu0 %v1425
      %1707 = vmatprep.subr.mxu0 0.0
      %1708 = vmatpush1.msra.mxu0 %v1424
      %1709 = vmatprep.subr.mxu0 0.0
      %1710 = vmatpush1.msra.mxu0 %v1423
      %1711 = vmatprep.subr.mxu0 0.0
      %1712 = vmatpush2.msra.mxu0 %v1454
      %1713 = vmatprep.subr.mxu0 0.0
      %1714 = vmatpush2.msra.mxu0 %v1453
      %1715 = vmatprep.subr.mxu0 0.0
      %1716 = vmatpush2.msra.mxu0 %v1452
      %1717 = vmatprep.subr.mxu0 0.0
      %1718 = vmatpush2.msra.mxu0 %v1451
      %1719 = vmatprep.subr.mxu0 0.0
      %1720 = vmatpush2.msra.mxu0 %v1450
      %1721 = vmatprep.subr.mxu0 0.0
      %1722 = vmatpush2.msra.mxu0 %v1449
      %1723 = vmatprep.subr.mxu0 0.0
      %1724 = vmatpush2.msra.mxu0 %v1448
      %1725 = vmatprep.subr.mxu0 0.0
      %1726 = vmatpush2.msra.mxu0 %v1447
      %1727 = vmatprep.subr.mxu0 0.0
      %1728 = vmatpush2.msra.mxu0 %v1446
      %1729 = vmatprep.subr.mxu0 0.0
      %1730 = vmatpush2.msra.mxu0 %v1445
      %1731 = vmatprep.subr.mxu0 0.0
      %1732 = vmatpush2.msra.mxu0 %v1444
      %1733 = vmatprep.subr.mxu0 0.0
      %1734 = vmatpush2.msra.mxu0 %v1443
      %1735 = vmatprep.subr.mxu0 0.0
      %1736 = vmatpush2.msra.mxu0 %v1442
      %1737 = vmatprep.subr.mxu0 0.0
      %1738 = vmatpush2.msra.mxu0 %v1441
      %1739 = vmatprep.subr.mxu0 0.0
      %1740 = vmatpush2.msra.mxu0 %v1440
      %1741 = vmatprep.subr.mxu0 0.0
      %1742 = vmatpush2.msra.mxu0 %v1439
      %1743 = vmatprep.mubr.f32.mxu0 %v1408
      %1744 = vmatmul.mubr.f32.gmra.mxu0 %v1407
      %v1745 = vpop.f32.mrf.mxu0
      %v1746 = vadd.f32 0.0, %v1745
      %v1747 = vpop.f32.mrf.mxu0
      %1748 = vdwg.mxu0
      %1749 = vmatprep.subr.mxu0 0.0
      %1750 = vmatpush1.msra.mxu0 %v1470
      %1751 = vmatprep.subr.mxu0 0.0
      %1752 = vmatpush1.msra.mxu0 %v1469
      %1753 = vmatprep.subr.mxu0 0.0
      %1754 = vmatpush1.msra.mxu0 %v1468
      %1755 = vmatprep.subr.mxu0 0.0
      %1756 = vmatpush1.msra.mxu0 %v1467
      %1757 = vmatprep.subr.mxu0 0.0
      %1758 = vmatpush1.msra.mxu0 %v1466
      %1759 = vmatprep.subr.mxu0 0.0
      %1760 = vmatpush1.msra.mxu0 %v1465
      %1761 = vmatprep.subr.mxu0 0.0
      %1762 = vmatpush1.msra.mxu0 %v1464
      %1763 = vmatprep.subr.mxu0 0.0
      %1764 = vmatpush1.msra.mxu0 %v1463
      %1765 = vmatprep.subr.mxu0 0.0
      %1766 = vmatpush1.msra.mxu0 %v1462
      %1767 = vmatprep.subr.mxu0 0.0
      %1768 = vmatpush1.msra.mxu0 %v1461
      %1769 = vmatprep.subr.mxu0 0.0
      %1770 = vmatpush1.msra.mxu0 %v1460
      %1771 = vmatprep.subr.mxu0 0.0
      %1772 = vmatpush1.msra.mxu0 %v1459
      %1773 = vmatprep.subr.mxu0 0.0
      %1774 = vmatpush1.msra.mxu0 %v1458
      %1775 = vmatprep.subr.mxu0 0.0
      %1776 = vmatpush1.msra.mxu0 %v1457
      %1777 = vmatprep.subr.mxu0 0.0
      %1778 = vmatpush1.msra.mxu0 %v1456
      %1779 = vmatprep.subr.mxu0 0.0
      %1780 = vmatpush1.msra.mxu0 %v1455
      %1781 = vmatprep.subr.mxu0 0.0
      %1782 = vmatpush2.msra.mxu0 %v1486
      %1783 = vmatprep.subr.mxu0 0.0
      %1784 = vmatpush2.msra.mxu0 %v1485
      %1785 = vmatprep.subr.mxu0 0.0
      %1786 = vmatpush2.msra.mxu0 %v1484
      %1787 = vmatprep.subr.mxu0 0.0
      %1788 = vmatpush2.msra.mxu0 %v1483
      %1789 = vmatprep.subr.mxu0 0.0
      %1790 = vmatpush2.msra.mxu0 %v1482
      %1791 = vmatprep.subr.mxu0 0.0
      %1792 = vmatpush2.msra.mxu0 %v1481
      %1793 = vmatprep.subr.mxu0 0.0
      %1794 = vmatpush2.msra.mxu0 %v1480
      %1795 = vmatprep.subr.mxu0 0.0
      %1796 = vmatpush2.msra.mxu0 %v1479
      %1797 = vmatprep.subr.mxu0 0.0
      %1798 = vmatpush2.msra.mxu0 %v1478
      %1799 = vmatprep.subr.mxu0 0.0
      %1800 = vmatpush2.msra.mxu0 %v1477
      %1801 = vmatprep.subr.mxu0 0.0
      %1802 = vmatpush2.msra.mxu0 %v1476
      %1803 = vmatprep.subr.mxu0 0.0
      %1804 = vmatpush2.msra.mxu0 %v1475
      %1805 = vmatprep.subr.mxu0 0.0
      %1806 = vmatpush2.msra.mxu0 %v1474
      %1807 = vmatprep.subr.mxu0 0.0
      %1808 = vmatpush2.msra.mxu0 %v1473
      %1809 = vmatprep.subr.mxu0 0.0
      %1810 = vmatpush2.msra.mxu0 %v1472
      %1811 = vmatprep.subr.mxu0 0.0
      %1812 = vmatpush2.msra.mxu0 %v1471
      %1813 = vmatprep.mubr.f32.mxu0 %v1410
      %1814 = vmatmul.mubr.f32.gmra.mxu0 %v1409
      %v1815 = vpop.f32.mrf.mxu0
      %v1816 = vadd.f32 %v1746, %v1815
      %v1817 = vpop.f32.mrf.mxu0
      %1818 = vdwg.mxu0
      %1819 = vmatprep.subr.mxu0 0.0
      %1820 = vmatpush1.msra.mxu0 %v1502
      %1821 = vmatprep.subr.mxu0 0.0
      %1822 = vmatpush1.msra.mxu0 %v1501
      %1823 = vmatprep.subr.mxu0 0.0
      %1824 = vmatpush1.msra.mxu0 %v1500
      %1825 = vmatprep.subr.mxu0 0.0
      %1826 = vmatpush1.msra.mxu0 %v1499
      %1827 = vmatprep.subr.mxu0 0.0
      %1828 = vmatpush1.msra.mxu0 %v1498
      %1829 = vmatprep.subr.mxu0 0.0
      %1830 = vmatpush1.msra.mxu0 %v1497
      %1831 = vmatprep.subr.mxu0 0.0
      %1832 = vmatpush1.msra.mxu0 %v1496
      %1833 = vmatprep.subr.mxu0 0.0
      %1834 = vmatpush1.msra.mxu0 %v1495
      %1835 = vmatprep.subr.mxu0 0.0
      %1836 = vmatpush1.msra.mxu0 %v1494
      %1837 = vmatprep.subr.mxu0 0.0
      %1838 = vmatpush1.msra.mxu0 %v1493
      %1839 = vmatprep.subr.mxu0 0.0
      %1840 = vmatpush1.msra.mxu0 %v1492
      %1841 = vmatprep.subr.mxu0 0.0
      %1842 = vmatpush1.msra.mxu0 %v1491
      %1843 = vmatprep.subr.mxu0 0.0
      %1844 = vmatpush1.msra.mxu0 %v1490
      %1845 = vmatprep.subr.mxu0 0.0
      %1846 = vmatpush1.msra.mxu0 %v1489
      %1847 = vmatprep.subr.mxu0 0.0
      %1848 = vmatpush1.msra.mxu0 %v1488
      %1849 = vmatprep.subr.mxu0 0.0
      %1850 = vmatpush1.msra.mxu0 %v1487
      %1851 = vmatprep.subr.mxu0 0.0
      %1852 = vmatpush2.msra.mxu0 %v1518
      %1853 = vmatprep.subr.mxu0 0.0
      %1854 = vmatpush2.msra.mxu0 %v1517
      %1855 = vmatprep.subr.mxu0 0.0
      %1856 = vmatpush2.msra.mxu0 %v1516
      %1857 = vmatprep.subr.mxu0 0.0
      %1858 = vmatpush2.msra.mxu0 %v1515
      %1859 = vmatprep.subr.mxu0 0.0
      %1860 = vmatpush2.msra.mxu0 %v1514
      %1861 = vmatprep.subr.mxu0 0.0
      %1862 = vmatpush2.msra.mxu0 %v1513
      %1863 = vmatprep.subr.mxu0 0.0
      %1864 = vmatpush2.msra.mxu0 %v1512
      %1865 = vmatprep.subr.mxu0 0.0
      %1866 = vmatpush2.msra.mxu0 %v1511
      %1867 = vmatprep.subr.mxu0 0.0
      %1868 = vmatpush2.msra.mxu0 %v1510
      %1869 = vmatprep.subr.mxu0 0.0
      %1870 = vmatpush2.msra.mxu0 %v1509
      %1871 = vmatprep.subr.mxu0 0.0
      %1872 = vmatpush2.msra.mxu0 %v1508
      %1873 = vmatprep.subr.mxu0 0.0
      %1874 = vmatpush2.msra.mxu0 %v1507
      %1875 = vmatprep.subr.mxu0 0.0
      %1876 = vmatpush2.msra.mxu0 %v1506
      %1877 = vmatprep.subr.mxu0 0.0
      %1878 = vmatpush2.msra.mxu0 %v1505
      %1879 = vmatprep.subr.mxu0 0.0
      %1880 = vmatpush2.msra.mxu0 %v1504
      %1881 = vmatprep.subr.mxu0 0.0
      %1882 = vmatpush2.msra.mxu0 %v1503
      %1883 = vmatprep.mubr.f32.mxu0 %v1412
      %1884 = vmatmul.mubr.f32.gmra.mxu0 %v1411
      %v1885 = vpop.f32.mrf.mxu0
      %v1886 = vadd.f32 %v1816, %v1885
      %v1887 = vpop.f32.mrf.mxu0
      %1888 = vdwg.mxu0
      %1889 = vmatprep.subr.mxu0 0.0
      %1890 = vmatpush1.msra.mxu0 %v1534
      %1891 = vmatprep.subr.mxu0 0.0
      %1892 = vmatpush1.msra.mxu0 %v1533
      %1893 = vmatprep.subr.mxu0 0.0
      %1894 = vmatpush1.msra.mxu0 %v1532
      %1895 = vmatprep.subr.mxu0 0.0
      %1896 = vmatpush1.msra.mxu0 %v1531
      %1897 = vmatprep.subr.mxu0 0.0
      %1898 = vmatpush1.msra.mxu0 %v1530
      %1899 = vmatprep.subr.mxu0 0.0
      %1900 = vmatpush1.msra.mxu0 %v1529
      %1901 = vmatprep.subr.mxu0 0.0
      %1902 = vmatpush1.msra.mxu0 %v1528
      %1903 = vmatprep.subr.mxu0 0.0
      %1904 = vmatpush1.msra.mxu0 %v1527
      %1905 = vmatprep.subr.mxu0 0.0
      %1906 = vmatpush1.msra.mxu0 %v1526
      %1907 = vmatprep.subr.mxu0 0.0
      %1908 = vmatpush1.msra.mxu0 %v1525
      %1909 = vmatprep.subr.mxu0 0.0
      %1910 = vmatpush1.msra.mxu0 %v1524
      %1911 = vmatprep.subr.mxu0 0.0
      %1912 = vmatpush1.msra.mxu0 %v1523
      %1913 = vmatprep.subr.mxu0 0.0
      %1914 = vmatpush1.msra.mxu0 %v1522
      %1915 = vmatprep.subr.mxu0 0.0
      %1916 = vmatpush1.msra.mxu0 %v1521
      %1917 = vmatprep.subr.mxu0 0.0
      %1918 = vmatpush1.msra.mxu0 %v1520
      %1919 = vmatprep.subr.mxu0 0.0
      %1920 = vmatpush1.msra.mxu0 %v1519
      %1921 = vmatprep.subr.mxu0 0.0
      %1922 = vmatpush2.msra.mxu0 %v1550
      %1923 = vmatprep.subr.mxu0 0.0
      %1924 = vmatpush2.msra.mxu0 %v1549
      %1925 = vmatprep.subr.mxu0 0.0
      %1926 = vmatpush2.msra.mxu0 %v1548
      %1927 = vmatprep.subr.mxu0 0.0
      %1928 = vmatpush2.msra.mxu0 %v1547
      %1929 = vmatprep.subr.mxu0 0.0
      %1930 = vmatpush2.msra.mxu0 %v1546
      %1931 = vmatprep.subr.mxu0 0.0
      %1932 = vmatpush2.msra.mxu0 %v1545
      %1933 = vmatprep.subr.mxu0 0.0
      %1934 = vmatpush2.msra.mxu0 %v1544
      %1935 = vmatprep.subr.mxu0 0.0
      %1936 = vmatpush2.msra.mxu0 %v1543
      %1937 = vmatprep.subr.mxu0 0.0
      %1938 = vmatpush2.msra.mxu0 %v1542
      %1939 = vmatprep.subr.mxu0 0.0
      %1940 = vmatpush2.msra.mxu0 %v1541
      %1941 = vmatprep.subr.mxu0 0.0
      %1942 = vmatpush2.msra.mxu0 %v1540
      %1943 = vmatprep.subr.mxu0 0.0
      %1944 = vmatpush2.msra.mxu0 %v1539
      %1945 = vmatprep.subr.mxu0 0.0
      %1946 = vmatpush2.msra.mxu0 %v1538
      %1947 = vmatprep.subr.mxu0 0.0
      %1948 = vmatpush2.msra.mxu0 %v1537
      %1949 = vmatprep.subr.mxu0 0.0
      %1950 = vmatpush2.msra.mxu0 %v1536
      %1951 = vmatprep.subr.mxu0 0.0
      %1952 = vmatpush2.msra.mxu0 %v1535
      %1953 = vmatprep.mubr.f32.mxu0 %v1414
      %1954 = vmatmul.mubr.f32.gmra.mxu0 %v1413
      %v1955 = vpop.f32.mrf.mxu0
      %v1956 = vadd.f32 %v1886, %v1955
      %v1957 = vpop.f32.mrf.mxu0
      %1958 = vdwg.mxu0
      %1959 = vmatprep.subr.mxu0 0.0
      %1960 = vmatpush1.msra.mxu0 %v1566
      %1961 = vmatprep.subr.mxu0 0.0
      %1962 = vmatpush1.msra.mxu0 %v1565
      %1963 = vmatprep.subr.mxu0 0.0
      %1964 = vmatpush1.msra.mxu0 %v1564
      %1965 = vmatprep.subr.mxu0 0.0
      %1966 = vmatpush1.msra.mxu0 %v1563
      %1967 = vmatprep.subr.mxu0 0.0
      %1968 = vmatpush1.msra.mxu0 %v1562
      %1969 = vmatprep.subr.mxu0 0.0
      %1970 = vmatpush1.msra.mxu0 %v1561
      %1971 = vmatprep.subr.mxu0 0.0
      %1972 = vmatpush1.msra.mxu0 %v1560
      %1973 = vmatprep.subr.mxu0 0.0
      %1974 = vmatpush1.msra.mxu0 %v1559
      %1975 = vmatprep.subr.mxu0 0.0
      %1976 = vmatpush1.msra.mxu0 %v1558
      %1977 = vmatprep.subr.mxu0 0.0
      %1978 = vmatpush1.msra.mxu0 %v1557
      %1979 = vmatprep.subr.mxu0 0.0
      %1980 = vmatpush1.msra.mxu0 %v1556
      %1981 = vmatprep.subr.mxu0 0.0
      %1982 = vmatpush1.msra.mxu0 %v1555
      %1983 = vmatprep.subr.mxu0 0.0
      %1984 = vmatpush1.msra.mxu0 %v1554
      %1985 = vmatprep.subr.mxu0 0.0
      %1986 = vmatpush1.msra.mxu0 %v1553
      %1987 = vmatprep.subr.mxu0 0.0
      %1988 = vmatpush1.msra.mxu0 %v1552
      %1989 = vmatprep.subr.mxu0 0.0
      %1990 = vmatpush1.msra.mxu0 %v1551
      %1991 = vmatprep.subr.mxu0 0.0
      %1992 = vmatpush2.msra.mxu0 %v1582
      %1993 = vmatprep.subr.mxu0 0.0
      %1994 = vmatpush2.msra.mxu0 %v1581
      %1995 = vmatprep.subr.mxu0 0.0
      %1996 = vmatpush2.msra.mxu0 %v1580
      %1997 = vmatprep.subr.mxu0 0.0
      %1998 = vmatpush2.msra.mxu0 %v1579
      %1999 = vmatprep.subr.mxu0 0.0
      %2000 = vmatpush2.msra.mxu0 %v1578
      %2001 = vmatprep.subr.mxu0 0.0
      %2002 = vmatpush2.msra.mxu0 %v1577
      %2003 = vmatprep.subr.mxu0 0.0
      %2004 = vmatpush2.msra.mxu0 %v1576
      %2005 = vmatprep.subr.mxu0 0.0
      %2006 = vmatpush2.msra.mxu0 %v1575
      %2007 = vmatprep.subr.mxu0 0.0
      %2008 = vmatpush2.msra.mxu0 %v1574
      %2009 = vmatprep.subr.mxu0 0.0
      %2010 = vmatpush2.msra.mxu0 %v1573
      %2011 = vmatprep.subr.mxu0 0.0
      %2012 = vmatpush2.msra.mxu0 %v1572
      %2013 = vmatprep.subr.mxu0 0.0
      %2014 = vmatpush2.msra.mxu0 %v1571
      %2015 = vmatprep.subr.mxu0 0.0
      %2016 = vmatpush2.msra.mxu0 %v1570
      %2017 = vmatprep.subr.mxu0 0.0
      %2018 = vmatpush2.msra.mxu0 %v1569
      %2019 = vmatprep.subr.mxu0 0.0
      %2020 = vmatpush2.msra.mxu0 %v1568
      %2021 = vmatprep.subr.mxu0 0.0
      %2022 = vmatpush2.msra.mxu0 %v1567
      %2023 = vmatprep.mubr.f32.mxu0 %v1416
      %2024 = vmatmul.mubr.f32.gmra.mxu0 %v1415
      %v2025 = vpop.f32.mrf.mxu0
      %v2026 = vadd.f32 %v1956, %v2025
      %v2027 = vpop.f32.mrf.mxu0
      %2028 = vdwg.mxu0
      %2029 = vmatprep.subr.mxu0 0.0
      %2030 = vmatpush1.msra.mxu0 %v1598
      %2031 = vmatprep.subr.mxu0 0.0
      %2032 = vmatpush1.msra.mxu0 %v1597
      %2033 = vmatprep.subr.mxu0 0.0
      %2034 = vmatpush1.msra.mxu0 %v1596
      %2035 = vmatprep.subr.mxu0 0.0
      %2036 = vmatpush1.msra.mxu0 %v1595
      %2037 = vmatprep.subr.mxu0 0.0
      %2038 = vmatpush1.msra.mxu0 %v1594
      %2039 = vmatprep.subr.mxu0 0.0
      %2040 = vmatpush1.msra.mxu0 %v1593
      %2041 = vmatprep.subr.mxu0 0.0
      %2042 = vmatpush1.msra.mxu0 %v1592
      %2043 = vmatprep.subr.mxu0 0.0
      %2044 = vmatpush1.msra.mxu0 %v1591
      %2045 = vmatprep.subr.mxu0 0.0
      %2046 = vmatpush1.msra.mxu0 %v1590
      %2047 = vmatprep.subr.mxu0 0.0
      %2048 = vmatpush1.msra.mxu0 %v1589
      %2049 = vmatprep.subr.mxu0 0.0
      %2050 = vmatpush1.msra.mxu0 %v1588
      %2051 = vmatprep.subr.mxu0 0.0
      %2052 = vmatpush1.msra.mxu0 %v1587
      %2053 = vmatprep.subr.mxu0 0.0
      %2054 = vmatpush1.msra.mxu0 %v1586
      %2055 = vmatprep.subr.mxu0 0.0
      %2056 = vmatpush1.msra.mxu0 %v1585
      %2057 = vmatprep.subr.mxu0 0.0
      %2058 = vmatpush1.msra.mxu0 %v1584
      %2059 = vmatprep.subr.mxu0 0.0
      %2060 = vmatpush1.msra.mxu0 %v1583
      %2061 = vmatprep.subr.mxu0 0.0
      %2062 = vmatpush2.msra.mxu0 %v1614
      %2063 = vmatprep.subr.mxu0 0.0
      %2064 = vmatpush2.msra.mxu0 %v1613
      %2065 = vmatprep.subr.mxu0 0.0
      %2066 = vmatpush2.msra.mxu0 %v1612
      %2067 = vmatprep.subr.mxu0 0.0
      %2068 = vmatpush2.msra.mxu0 %v1611
      %2069 = vmatprep.subr.mxu0 0.0
      %2070 = vmatpush2.msra.mxu0 %v1610
      %2071 = vmatprep.subr.mxu0 0.0
      %2072 = vmatpush2.msra.mxu0 %v1609
      %2073 = vmatprep.subr.mxu0 0.0
      %2074 = vmatpush2.msra.mxu0 %v1608
      %2075 = vmatprep.subr.mxu0 0.0
      %2076 = vmatpush2.msra.mxu0 %v1607
      %2077 = vmatprep.subr.mxu0 0.0
      %2078 = vmatpush2.msra.mxu0 %v1606
      %2079 = vmatprep.subr.mxu0 0.0
      %2080 = vmatpush2.msra.mxu0 %v1605
      %2081 = vmatprep.subr.mxu0 0.0
      %2082 = vmatpush2.msra.mxu0 %v1604
      %2083 = vmatprep.subr.mxu0 0.0
      %2084 = vmatpush2.msra.mxu0 %v1603
      %2085 = vmatprep.subr.mxu0 0.0
      %2086 = vmatpush2.msra.mxu0 %v1602
      %2087 = vmatprep.subr.mxu0 0.0
      %2088 = vmatpush2.msra.mxu0 %v1601
      %2089 = vmatprep.subr.mxu0 0.0
      %2090 = vmatpush2.msra.mxu0 %v1600
      %2091 = vmatprep.subr.mxu0 0.0
      %2092 = vmatpush2.msra.mxu0 %v1599
      %2093 = vmatprep.mubr.f32.mxu0 %v1418
      %2094 = vmatmul.mubr.f32.gmra.mxu0 %v1417
      %v2095 = vpop.f32.mrf.mxu0
      %v2096 = vadd.f32 %v2026, %v2095
      %v2097 = vpop.f32.mrf.mxu0
      %2098 = vdwg.mxu0
      %2099 = vmatprep.subr.mxu0 0.0
      %2100 = vmatpush1.msra.mxu0 %v1630
      %2101 = vmatprep.subr.mxu0 0.0
      %2102 = vmatpush1.msra.mxu0 %v1629
      %2103 = vmatprep.subr.mxu0 0.0
      %2104 = vmatpush1.msra.mxu0 %v1628
      %2105 = vmatprep.subr.mxu0 0.0
      %2106 = vmatpush1.msra.mxu0 %v1627
      %2107 = vmatprep.subr.mxu0 0.0
      %2108 = vmatpush1.msra.mxu0 %v1626
      %2109 = vmatprep.subr.mxu0 0.0
      %2110 = vmatpush1.msra.mxu0 %v1625
      %2111 = vmatprep.subr.mxu0 0.0
      %2112 = vmatpush1.msra.mxu0 %v1624
      %2113 = vmatprep.subr.mxu0 0.0
      %2114 = vmatpush1.msra.mxu0 %v1623
      %2115 = vmatprep.subr.mxu0 0.0
      %2116 = vmatpush1.msra.mxu0 %v1622
      %2117 = vmatprep.subr.mxu0 0.0
      %2118 = vmatpush1.msra.mxu0 %v1621
      %2119 = vmatprep.subr.mxu0 0.0
      %2120 = vmatpush1.msra.mxu0 %v1620
      %2121 = vmatprep.subr.mxu0 0.0
      %2122 = vmatpush1.msra.mxu0 %v1619
      %2123 = vmatprep.subr.mxu0 0.0
      %2124 = vmatpush1.msra.mxu0 %v1618
      %2125 = vmatprep.subr.mxu0 0.0
      %2126 = vmatpush1.msra.mxu0 %v1617
      %2127 = vmatprep.subr.mxu0 0.0
      %2128 = vmatpush1.msra.mxu0 %v1616
      %2129 = vmatprep.subr.mxu0 0.0
      %2130 = vmatpush1.msra.mxu0 %v1615
      %2131 = vmatprep.subr.mxu0 0.0
      %2132 = vmatpush2.msra.mxu0 %v1646
      %2133 = vmatprep.subr.mxu0 0.0
      %2134 = vmatpush2.msra.mxu0 %v1645
      %2135 = vmatprep.subr.mxu0 0.0
      %2136 = vmatpush2.msra.mxu0 %v1644
      %2137 = vmatprep.subr.mxu0 0.0
      %2138 = vmatpush2.msra.mxu0 %v1643
      %2139 = vmatprep.subr.mxu0 0.0
      %2140 = vmatpush2.msra.mxu0 %v1642
      %2141 = vmatprep.subr.mxu0 0.0
      %2142 = vmatpush2.msra.mxu0 %v1641
      %2143 = vmatprep.subr.mxu0 0.0
      %2144 = vmatpush2.msra.mxu0 %v1640
      %2145 = vmatprep.subr.mxu0 0.0
      %2146 = vmatpush2.msra.mxu0 %v1639
      %2147 = vmatprep.subr.mxu0 0.0
      %2148 = vmatpush2.msra.mxu0 %v1638
      %2149 = vmatprep.subr.mxu0 0.0
      %2150 = vmatpush2.msra.mxu0 %v1637
      %2151 = vmatprep.subr.mxu0 0.0
      %2152 = vmatpush2.msra.mxu0 %v1636
      %2153 = vmatprep.subr.mxu0 0.0
      %2154 = vmatpush2.msra.mxu0 %v1635
      %2155 = vmatprep.subr.mxu0 0.0
      %2156 = vmatpush2.msra.mxu0 %v1634
      %2157 = vmatprep.subr.mxu0 0.0
      %2158 = vmatpush2.msra.mxu0 %v1633
      %2159 = vmatprep.subr.mxu0 0.0
      %2160 = vmatpush2.msra.mxu0 %v1632
      %2161 = vmatprep.subr.mxu0 0.0
      %2162 = vmatpush2.msra.mxu0 %v1631
      %2163 = vmatprep.mubr.f32.mxu0 %v1420
      %2164 = vmatmul.mubr.f32.gmra.mxu0 %v1419
      %v2165 = vpop.f32.mrf.mxu0
      %v2166 = vadd.f32 %v2096, %v2165
      %v2167 = vpop.f32.mrf.mxu0
      %2168 = vdwg.mxu0
      %2169 = vmatprep.subr.mxu0 0.0
      %2170 = vmatpush1.msra.mxu0 %v1662
      %2171 = vmatprep.subr.mxu0 0.0
      %2172 = vmatpush1.msra.mxu0 %v1661
      %2173 = vmatprep.subr.mxu0 0.0
      %2174 = vmatpush1.msra.mxu0 %v1660
      %2175 = vmatprep.subr.mxu0 0.0
      %2176 = vmatpush1.msra.mxu0 %v1659
      %2177 = vmatprep.subr.mxu0 0.0
      %2178 = vmatpush1.msra.mxu0 %v1658
      %2179 = vmatprep.subr.mxu0 0.0
      %2180 = vmatpush1.msra.mxu0 %v1657
      %2181 = vmatprep.subr.mxu0 0.0
      %2182 = vmatpush1.msra.mxu0 %v1656
      %2183 = vmatprep.subr.mxu0 0.0
      %2184 = vmatpush1.msra.mxu0 %v1655
      %2185 = vmatprep.subr.mxu0 0.0
      %2186 = vmatpush1.msra.mxu0 %v1654
      %2187 = vmatprep.subr.mxu0 0.0
      %2188 = vmatpush1.msra.mxu0 %v1653
      %2189 = vmatprep.subr.mxu0 0.0
      %2190 = vmatpush1.msra.mxu0 %v1652
      %2191 = vmatprep.subr.mxu0 0.0
      %2192 = vmatpush1.msra.mxu0 %v1651
      %2193 = vmatprep.subr.mxu0 0.0
      %2194 = vmatpush1.msra.mxu0 %v1650
      %2195 = vmatprep.subr.mxu0 0.0
      %2196 = vmatpush1.msra.mxu0 %v1649
      %2197 = vmatprep.subr.mxu0 0.0
      %2198 = vmatpush1.msra.mxu0 %v1648
      %2199 = vmatprep.subr.mxu0 0.0
      %2200 = vmatpush1.msra.mxu0 %v1647
      %2201 = vmatprep.subr.mxu0 0.0
      %2202 = vmatpush2.msra.mxu0 %v1678
      %2203 = vmatprep.subr.mxu0 0.0
      %2204 = vmatpush2.msra.mxu0 %v1677
      %2205 = vmatprep.subr.mxu0 0.0
      %2206 = vmatpush2.msra.mxu0 %v1676
      %2207 = vmatprep.subr.mxu0 0.0
      %2208 = vmatpush2.msra.mxu0 %v1675
      %2209 = vmatprep.subr.mxu0 0.0
      %2210 = vmatpush2.msra.mxu0 %v1674
      %2211 = vmatprep.subr.mxu0 0.0
      %2212 = vmatpush2.msra.mxu0 %v1673
      %2213 = vmatprep.subr.mxu0 0.0
      %2214 = vmatpush2.msra.mxu0 %v1672
      %2215 = vmatprep.subr.mxu0 0.0
      %2216 = vmatpush2.msra.mxu0 %v1671
      %2217 = vmatprep.subr.mxu0 0.0
      %2218 = vmatpush2.msra.mxu0 %v1670
      %2219 = vmatprep.subr.mxu0 0.0
      %2220 = vmatpush2.msra.mxu0 %v1669
      %2221 = vmatprep.subr.mxu0 0.0
      %2222 = vmatpush2.msra.mxu0 %v1668
      %2223 = vmatprep.subr.mxu0 0.0
      %2224 = vmatpush2.msra.mxu0 %v1667
      %2225 = vmatprep.subr.mxu0 0.0
      %2226 = vmatpush2.msra.mxu0 %v1666
      %2227 = vmatprep.subr.mxu0 0.0
      %2228 = vmatpush2.msra.mxu0 %v1665
      %2229 = vmatprep.subr.mxu0 0.0
      %2230 = vmatpush2.msra.mxu0 %v1664
      %2231 = vmatprep.subr.mxu0 0.0
      %2232 = vmatpush2.msra.mxu0 %v1663
      %2233 = vmatprep.mubr.f32.mxu0 %v1422
      %2234 = vmatmul.mubr.f32.gmra.mxu0 %v1421
      %v2235 = vpop.f32.mrf.mxu0
      %v2236 = vadd.f32 %v2166, %v2235
      %v2237 = vpop.f32.mrf.mxu0
      %2238 = vdwg.mxu0
      %2239 = vxpose.xlu0.b32.start [1/16] %v2236, 128
      %2240 = vxpose.xlu0.b32.cont [2/16] 0.0, 128
      %2241 = vxpose.xlu0.b32.cont [3/16] 0.0, 128
      %2242 = vxpose.xlu0.b32.cont [4/16] 0.0, 128
      %2243 = vxpose.xlu0.b32.cont [5/16] 0.0, 128
      %2244 = vxpose.xlu0.b32.cont [6/16] 0.0, 128
      %2245 = vxpose.xlu0.b32.cont [7/16] 0.0, 128
      %2246 = vxpose.xlu0.b32.cont [8/16] 0.0, 128
      %2247 = vxpose.xlu0.b32.cont [9/16] 0.0, 128
      %2248 = vxpose.xlu0.b32.cont [10/16] 0.0, 128
      %2249 = vxpose.xlu0.b32.cont [11/16] 0.0, 128
      %2250 = vxpose.xlu0.b32.cont [12/16] 0.0, 128
      %2251 = vxpose.xlu0.b32.cont [13/16] 0.0, 128
      %2252 = vxpose.xlu0.b32.cont [14/16] 0.0, 128
      %2253 = vxpose.xlu0.b32.cont [15/16] 0.0, 128
      %2254 = vxpose.xlu0.b32.end [16/16] 0.0, 128
      %v2255 = vpop.trf.xlu0
      %v2256 = vpop.trf.xlu0
      %v2257 = vpop.trf.xlu0
      %v2258 = vpop.trf.xlu0
      %v2259 = vpop.trf.xlu0
      %v2260 = vpop.trf.xlu0
      %v2261 = vpop.trf.xlu0
      %v2262 = vpop.trf.xlu0
      %v2263 = vpop.trf.xlu0
      %v2264 = vpop.trf.xlu0
      %v2265 = vpop.trf.xlu0
      %v2266 = vpop.trf.xlu0
      %v2267 = vpop.trf.xlu0
      %v2268 = vpop.trf.xlu0
      %v2269 = vpop.trf.xlu0
      %v2270 = vpop.trf.xlu0
      %v2272 = vlaneseq
      %v2273 = vshrl.u32 %v2272, 7
      %v2274 = vsub.s32 0, %v2273
      %v2275 = vrot.slane %v780, %v2274
      %vm2277 = vcmask 64512
      %v2279 = vsel %vm2277, %v2255, 0
      %2281 = vmatprep.subr.mxu0 0.0
      %2282 = vmatpush1.msra.mxu0 0.0
      %2283 = vmatprep.subr.mxu0 0.0
      %2284 = vmatpush1.msra.mxu0 0.0
      %2285 = vmatprep.subr.mxu0 0.0
      %2286 = vmatpush1.msra.mxu0 0.0
      %2287 = vmatprep.subr.mxu0 0.0
      %2288 = vmatpush1.msra.mxu0 0.0
      %2289 = vmatprep.subr.mxu0 0.0
      %2290 = vmatpush1.msra.mxu0 0.0
      %2291 = vmatprep.subr.mxu0 0.0
      %2292 = vmatpush1.msra.mxu0 0.0
      %2293 = vmatprep.subr.mxu0 0.0
      %2294 = vmatpush1.msra.mxu0 0.0
      %2295 = vmatprep.subr.mxu0 0.0
      %2296 = vmatpush1.msra.mxu0 0.0
      %2297 = vmatprep.subr.mxu0 0.0
      %2298 = vmatpush1.msra.mxu0 0.0
      %2299 = vmatprep.subr.mxu0 0.0
      %2300 = vmatpush1.msra.mxu0 0.0
      %2301 = vmatprep.subr.mxu0 0.0
      %2302 = vmatpush1.msra.mxu0 0.0
      %2303 = vmatprep.subr.mxu0 0.0
      %2304 = vmatpush1.msra.mxu0 0.0
      %2305 = vmatprep.subr.mxu0 0.0
      %2306 = vmatpush1.msra.mxu0 0.0
      %2307 = vmatprep.subr.mxu0 0.0
      %2308 = vmatpush1.msra.mxu0 0.0
      %2309 = vmatprep.subr.mxu0 0.0
      %2310 = vmatpush1.msra.mxu0 0.0
      %2311 = vmatprep.subr.mxu0 0.0
      %2312 = vmatpush1.msra.mxu0 %v779
      %2313 = vmatprep.subr.mxu0 0.0
      %2314 = vmatpush2.msra.mxu0 0.0
      %2315 = vmatprep.subr.mxu0 0.0
      %2316 = vmatpush2.msra.mxu0 0.0
      %2317 = vmatprep.subr.mxu0 0.0
      %2318 = vmatpush2.msra.mxu0 0.0
      %2319 = vmatprep.subr.mxu0 0.0
      %2320 = vmatpush2.msra.mxu0 0.0
      %2321 = vmatprep.subr.mxu0 0.0
      %2322 = vmatpush2.msra.mxu0 0.0
      %2323 = vmatprep.subr.mxu0 0.0
      %2324 = vmatpush2.msra.mxu0 0.0
      %2325 = vmatprep.subr.mxu0 0.0
      %2326 = vmatpush2.msra.mxu0 0.0
      %2327 = vmatprep.subr.mxu0 0.0
      %2328 = vmatpush2.msra.mxu0 0.0
      %2329 = vmatprep.subr.mxu0 0.0
      %2330 = vmatpush2.msra.mxu0 0.0
      %2331 = vmatprep.subr.mxu0 0.0
      %2332 = vmatpush2.msra.mxu0 0.0
      %2333 = vmatprep.subr.mxu0 0.0
      %2334 = vmatpush2.msra.mxu0 0.0
      %2335 = vmatprep.subr.mxu0 0.0
      %2336 = vmatpush2.msra.mxu0 0.0
      %2337 = vmatprep.subr.mxu0 0.0
      %2338 = vmatpush2.msra.mxu0 0.0
      %2339 = vmatprep.subr.mxu0 0.0
      %2340 = vmatpush2.msra.mxu0 0.0
      %2341 = vmatprep.subr.mxu0 0.0
      %2342 = vmatpush2.msra.mxu0 0.0
      %2343 = vmatprep.subr.mxu0 0.0
      %2344 = vmatpush2.msra.mxu0 0.0
      %2345 = vmatprep.mubr.f32.mxu0 0.0
      %2346 = vmatmul.mubr.f32.gmra.mxu0 %v2279
      %v2347 = vpop.f32.mrf.mxu0
      %v2348 = vadd.f32 %v2275, %v2347
      %v2349 = vpop.f32.mrf.mxu0
      %2350 = vdwg.mxu0
      %v2351 = vld [vmem:[%s704] sm:$0xff]
      %v2352 = vld [vmem:[%s704 + $0x8] sm:$0xff]
      %v2353 = vld [vmem:[%s704 + $0x10] sm:$0xff]
      %v2354 = vld [vmem:[%s704 + $0x18] sm:$0xff]
      %v2355 = vld [vmem:[%s704 + $0x20] sm:$0xff]
      %v2356 = vld [vmem:[%s704 + $0x28] sm:$0xff]
      %v2357 = vld [vmem:[%s704 + $0x30] sm:$0xff]
      %v2358 = vld [vmem:[%s704 + $0x38] sm:$0xff]
      %v2359 = vld [vmem:[%s704 + $0x40] sm:$0xff]
      %v2360 = vld [vmem:[%s704 + $0x48] sm:$0xff]
      %v2361 = vld [vmem:[%s704 + $0x50] sm:$0xff]
      %v2362 = vld [vmem:[%s704 + $0x58] sm:$0xff]
      %v2363 = vld [vmem:[%s704 + $0x60] sm:$0xff]
      %v2364 = vld [vmem:[%s704 + $0x68] sm:$0xff]
      %v2365 = vld [vmem:[%s704 + $0x70] sm:$0xff]
      %v2366 = vld [vmem:[%s704 + $0x78] sm:$0xff]
      %v2367 = vld [vmem:[%s704 + $0x80] sm:$0x1]
      %v2368 = vld [vmem:[%s704 + $0x88] sm:$0x1]
      %v2369 = vld [vmem:[%s704 + $0x90] sm:$0x1]
      %v2370 = vld [vmem:[%s704 + $0x98] sm:$0x1]
      %v2371 = vld [vmem:[%s704 + $0xa0] sm:$0x1]
      %v2372 = vld [vmem:[%s704 + $0xa8] sm:$0x1]
      %v2373 = vld [vmem:[%s704 + $0xb0] sm:$0x1]
      %v2374 = vld [vmem:[%s704 + $0xb8] sm:$0x1]
      %v2375 = vld [vmem:[%s704 + $0xc0] sm:$0x1]
      %v2376 = vld [vmem:[%s704 + $0xc8] sm:$0x1]
      %v2377 = vld [vmem:[%s704 + $0xd0] sm:$0x1]
      %v2378 = vld [vmem:[%s704 + $0xd8] sm:$0x1]
      %v2379 = vld [vmem:[%s704 + $0xe0] sm:$0x1]
      %v2380 = vld [vmem:[%s704 + $0xe8] sm:$0x1]
      %v2381 = vld [vmem:[%s704 + $0xf0] sm:$0x1]
      %v2382 = vld [vmem:[%s704 + $0xf8] sm:$0x1]
      %v2383 = vld [vmem:[%s7] sm:$0xff]
      %v2384 = vld [vmem:[%s8] sm:$0xff]
      %v2385 = vld [vmem:[%s9] sm:$0xff]
      %v2386 = vld [vmem:[%s10] sm:$0x1]
      %2388 = vset.pattern.permute.xlu0 0
      %2389 = vperm.xlu0 %2388, %v2384
      %v2390 = vpop.permute.xlu0 %2389
      %vm2392 = vcmask 72704
      %v2394 = vsel %vm2392, %v2383, 0
      %vm2396 = vcmask 1040384
      %v2398 = vsel %vm2396, %v2367, 0
      %v2401 = vsel %vm2396, %v2368, 0
      %v2404 = vsel %vm2396, %v2369, 0
      %v2407 = vsel %vm2396, %v2370, 0
      %v2410 = vsel %vm2396, %v2371, 0
      %v2413 = vsel %vm2396, %v2372, 0
      %v2416 = vsel %vm2396, %v2373, 0
      %v2419 = vsel %vm2396, %v2374, 0
      %v2422 = vsel %vm2396, %v2375, 0
      %v2425 = vsel %vm2396, %v2376, 0
      %v2428 = vsel %vm2396, %v2377, 0
      %v2431 = vsel %vm2396, %v2378, 0
      %v2434 = vsel %vm2396, %v2379, 0
      %v2437 = vsel %vm2396, %v2380, 0
      %v2440 = vsel %vm2396, %v2381, 0
      %v2443 = vsel %vm2396, %v2382, 0
      %2445 = vmatprep.subr.mxu0 0.0
      %2446 = vmatpush1.msra.mxu0 0.0
      %2447 = vmatprep.subr.mxu0 0.0
      %2448 = vmatpush1.msra.mxu0 0.0
      %2449 = vmatprep.subr.mxu0 0.0
      %2450 = vmatpush1.msra.mxu0 0.0
      %2451 = vmatprep.subr.mxu0 0.0
      %2452 = vmatpush1.msra.mxu0 0.0
      %2453 = vmatprep.subr.mxu0 0.0
      %2454 = vmatpush1.msra.mxu0 0.0
      %2455 = vmatprep.subr.mxu0 0.0
      %2456 = vmatpush1.msra.mxu0 0.0
      %2457 = vmatprep.subr.mxu0 0.0
      %2458 = vmatpush1.msra.mxu0 0.0
      %2459 = vmatprep.subr.mxu0 0.0
      %2460 = vmatpush1.msra.mxu0 0.0
      %2461 = vmatprep.subr.mxu0 0.0
      %2462 = vmatpush1.msra.mxu0 0.0
      %2463 = vmatprep.subr.mxu0 0.0
      %2464 = vmatpush1.msra.mxu0 0.0
      %2465 = vmatprep.subr.mxu0 0.0
      %2466 = vmatpush1.msra.mxu0 0.0
      %2467 = vmatprep.subr.mxu0 0.0
      %2468 = vmatpush1.msra.mxu0 0.0
      %2469 = vmatprep.subr.mxu0 0.0
      %2470 = vmatpush1.msra.mxu0 0.0
      %2471 = vmatprep.subr.mxu0 0.0
      %2472 = vmatpush1.msra.mxu0 0.0
      %2473 = vmatprep.subr.mxu0 %v2401
      %2474 = vmatpush1.msra.mxu0 %v2398
      %2475 = vmatprep.subr.mxu0 %v2352
      %2476 = vmatpush1.msra.mxu0 %v2351
      %2477 = vmatprep.subr.mxu0 0.0
      %2478 = vmatpush2.msra.mxu0 0.0
      %2479 = vmatprep.subr.mxu0 0.0
      %2480 = vmatpush2.msra.mxu0 0.0
      %2481 = vmatprep.subr.mxu0 0.0
      %2482 = vmatpush2.msra.mxu0 0.0
      %2483 = vmatprep.subr.mxu0 0.0
      %2484 = vmatpush2.msra.mxu0 0.0
      %2485 = vmatprep.subr.mxu0 0.0
      %2486 = vmatpush2.msra.mxu0 0.0
      %2487 = vmatprep.subr.mxu0 0.0
      %2488 = vmatpush2.msra.mxu0 0.0
      %2489 = vmatprep.subr.mxu0 0.0
      %2490 = vmatpush2.msra.mxu0 0.0
      %2491 = vmatprep.subr.mxu0 0.0
      %2492 = vmatpush2.msra.mxu0 0.0
      %2493 = vmatprep.subr.mxu0 0.0
      %2494 = vmatpush2.msra.mxu0 0.0
      %2495 = vmatprep.subr.mxu0 0.0
      %2496 = vmatpush2.msra.mxu0 0.0
      %2497 = vmatprep.subr.mxu0 0.0
      %2498 = vmatpush2.msra.mxu0 0.0
      %2499 = vmatprep.subr.mxu0 0.0
      %2500 = vmatpush2.msra.mxu0 0.0
      %2501 = vmatprep.subr.mxu0 0.0
      %2502 = vmatpush2.msra.mxu0 0.0
      %2503 = vmatprep.subr.mxu0 0.0
      %2504 = vmatpush2.msra.mxu0 0.0
      %2505 = vmatprep.subr.mxu0 0.0
      %2506 = vmatpush2.msra.mxu0 0.0
      %2507 = vmatprep.subr.mxu0 0.0
      %2508 = vmatpush2.msra.mxu0 0.0
      %2509 = vmatprep.mubr.f32.mxu0 0.0
      %2510 = vmatmul.mubr.f32.gmra.mxu0 %v2394
      %v2511 = vpop.f32.mrf.mxu0
      %v2512 = vadd.f32 %v2390, %v2511
      %v2513 = vpop.f32.mrf.mxu0
      %v2514 = vadd.f32 %v2390, %v2513
      %2515 = vdwg.mxu0
      %2516 = vmatprep.subr.mxu0 0.0
      %2517 = vmatpush1.msra.mxu0 0.0
      %2518 = vmatprep.subr.mxu0 0.0
      %2519 = vmatpush1.msra.mxu0 0.0
      %2520 = vmatprep.subr.mxu0 0.0
      %2521 = vmatpush1.msra.mxu0 0.0
      %2522 = vmatprep.subr.mxu0 0.0
      %2523 = vmatpush1.msra.mxu0 0.0
      %2524 = vmatprep.subr.mxu0 0.0
      %2525 = vmatpush1.msra.mxu0 0.0
      %2526 = vmatprep.subr.mxu0 0.0
      %2527 = vmatpush1.msra.mxu0 0.0
      %2528 = vmatprep.subr.mxu0 0.0
      %2529 = vmatpush1.msra.mxu0 0.0
      %2530 = vmatprep.subr.mxu0 0.0
      %2531 = vmatpush1.msra.mxu0 0.0
      %2532 = vmatprep.subr.mxu0 0.0
      %2533 = vmatpush1.msra.mxu0 0.0
      %2534 = vmatprep.subr.mxu0 0.0
      %2535 = vmatpush1.msra.mxu0 0.0
      %2536 = vmatprep.subr.mxu0 0.0
      %2537 = vmatpush1.msra.mxu0 0.0
      %2538 = vmatprep.subr.mxu0 0.0
      %2539 = vmatpush1.msra.mxu0 0.0
      %2540 = vmatprep.subr.mxu0 0.0
      %2541 = vmatpush1.msra.mxu0 0.0
      %2542 = vmatprep.subr.mxu0 0.0
      %2543 = vmatpush1.msra.mxu0 0.0
      %2544 = vmatprep.subr.mxu0 %v2407
      %2545 = vmatpush1.msra.mxu0 %v2404
      %2546 = vmatprep.subr.mxu0 %v2354
      %2547 = vmatpush1.msra.mxu0 %v2353
      %2548 = vmatprep.subr.mxu0 0.0
      %2549 = vmatpush2.msra.mxu0 0.0
      %2550 = vmatprep.subr.mxu0 0.0
      %2551 = vmatpush2.msra.mxu0 0.0
      %2552 = vmatprep.subr.mxu0 0.0
      %2553 = vmatpush2.msra.mxu0 0.0
      %2554 = vmatprep.subr.mxu0 0.0
      %2555 = vmatpush2.msra.mxu0 0.0
      %2556 = vmatprep.subr.mxu0 0.0
      %2557 = vmatpush2.msra.mxu0 0.0
      %2558 = vmatprep.subr.mxu0 0.0
      %2559 = vmatpush2.msra.mxu0 0.0
      %2560 = vmatprep.subr.mxu0 0.0
      %2561 = vmatpush2.msra.mxu0 0.0
      %2562 = vmatprep.subr.mxu0 0.0
      %2563 = vmatpush2.msra.mxu0 0.0
      %2564 = vmatprep.subr.mxu0 0.0
      %2565 = vmatpush2.msra.mxu0 0.0
      %2566 = vmatprep.subr.mxu0 0.0
      %2567 = vmatpush2.msra.mxu0 0.0
      %2568 = vmatprep.subr.mxu0 0.0
      %2569 = vmatpush2.msra.mxu0 0.0
      %2570 = vmatprep.subr.mxu0 0.0
      %2571 = vmatpush2.msra.mxu0 0.0
      %2572 = vmatprep.subr.mxu0 0.0
      %2573 = vmatpush2.msra.mxu0 0.0
      %2574 = vmatprep.subr.mxu0 0.0
      %2575 = vmatpush2.msra.mxu0 0.0
      %2576 = vmatprep.subr.mxu0 0.0
      %2577 = vmatpush2.msra.mxu0 0.0
      %2578 = vmatprep.subr.mxu0 0.0
      %2579 = vmatpush2.msra.mxu0 0.0
      %2580 = vmatprep.mubr.f32.mxu0 0.0
      %2581 = vmatmul.mubr.f32.gmra.mxu0 %v2394
      %v2582 = vpop.f32.mrf.mxu0
      %v2583 = vadd.f32 %v2390, %v2582
      %v2584 = vpop.f32.mrf.mxu0
      %v2585 = vadd.f32 %v2390, %v2584
      %2586 = vdwg.mxu0
      %2587 = vmatprep.subr.mxu0 0.0
      %2588 = vmatpush1.msra.mxu0 0.0
      %2589 = vmatprep.subr.mxu0 0.0
      %2590 = vmatpush1.msra.mxu0 0.0
      %2591 = vmatprep.subr.mxu0 0.0
      %2592 = vmatpush1.msra.mxu0 0.0
      %2593 = vmatprep.subr.mxu0 0.0
      %2594 = vmatpush1.msra.mxu0 0.0
      %2595 = vmatprep.subr.mxu0 0.0
      %2596 = vmatpush1.msra.mxu0 0.0
      %2597 = vmatprep.subr.mxu0 0.0
      %2598 = vmatpush1.msra.mxu0 0.0
      %2599 = vmatprep.subr.mxu0 0.0
      %2600 = vmatpush1.msra.mxu0 0.0
      %2601 = vmatprep.subr.mxu0 0.0
      %2602 = vmatpush1.msra.mxu0 0.0
      %2603 = vmatprep.subr.mxu0 0.0
      %2604 = vmatpush1.msra.mxu0 0.0
      %2605 = vmatprep.subr.mxu0 0.0
      %2606 = vmatpush1.msra.mxu0 0.0
      %2607 = vmatprep.subr.mxu0 0.0
      %2608 = vmatpush1.msra.mxu0 0.0
      %2609 = vmatprep.subr.mxu0 0.0
      %2610 = vmatpush1.msra.mxu0 0.0
      %2611 = vmatprep.subr.mxu0 0.0
      %2612 = vmatpush1.msra.mxu0 0.0
      %2613 = vmatprep.subr.mxu0 0.0
      %2614 = vmatpush1.msra.mxu0 0.0
      %2615 = vmatprep.subr.mxu0 %v2413
      %2616 = vmatpush1.msra.mxu0 %v2410
      %2617 = vmatprep.subr.mxu0 %v2356
      %2618 = vmatpush1.msra.mxu0 %v2355
      %2619 = vmatprep.subr.mxu0 0.0
      %2620 = vmatpush2.msra.mxu0 0.0
      %2621 = vmatprep.subr.mxu0 0.0
      %2622 = vmatpush2.msra.mxu0 0.0
      %2623 = vmatprep.subr.mxu0 0.0
      %2624 = vmatpush2.msra.mxu0 0.0
      %2625 = vmatprep.subr.mxu0 0.0
      %2626 = vmatpush2.msra.mxu0 0.0
      %2627 = vmatprep.subr.mxu0 0.0
      %2628 = vmatpush2.msra.mxu0 0.0
      %2629 = vmatprep.subr.mxu0 0.0
      %2630 = vmatpush2.msra.mxu0 0.0
      %2631 = vmatprep.subr.mxu0 0.0
      %2632 = vmatpush2.msra.mxu0 0.0
      %2633 = vmatprep.subr.mxu0 0.0
      %2634 = vmatpush2.msra.mxu0 0.0
      %2635 = vmatprep.subr.mxu0 0.0
      %2636 = vmatpush2.msra.mxu0 0.0
      %2637 = vmatprep.subr.mxu0 0.0
      %2638 = vmatpush2.msra.mxu0 0.0
      %2639 = vmatprep.subr.mxu0 0.0
      %2640 = vmatpush2.msra.mxu0 0.0
      %2641 = vmatprep.subr.mxu0 0.0
      %2642 = vmatpush2.msra.mxu0 0.0
      %2643 = vmatprep.subr.mxu0 0.0
      %2644 = vmatpush2.msra.mxu0 0.0
      %2645 = vmatprep.subr.mxu0 0.0
      %2646 = vmatpush2.msra.mxu0 0.0
      %2647 = vmatprep.subr.mxu0 0.0
      %2648 = vmatpush2.msra.mxu0 0.0
      %2649 = vmatprep.subr.mxu0 0.0
      %2650 = vmatpush2.msra.mxu0 0.0
      %2651 = vmatprep.mubr.f32.mxu0 0.0
      %2652 = vmatmul.mubr.f32.gmra.mxu0 %v2394
      %v2653 = vpop.f32.mrf.mxu0
      %v2654 = vadd.f32 %v2390, %v2653
      %v2655 = vpop.f32.mrf.mxu0
      %v2656 = vadd.f32 %v2390, %v2655
      %2657 = vdwg.mxu0
      %2658 = vmatprep.subr.mxu0 0.0
      %2659 = vmatpush1.msra.mxu0 0.0
      %2660 = vmatprep.subr.mxu0 0.0
      %2661 = vmatpush1.msra.mxu0 0.0
      %2662 = vmatprep.subr.mxu0 0.0
      %2663 = vmatpush1.msra.mxu0 0.0
      %2664 = vmatprep.subr.mxu0 0.0
      %2665 = vmatpush1.msra.mxu0 0.0
      %2666 = vmatprep.subr.mxu0 0.0
      %2667 = vmatpush1.msra.mxu0 0.0
      %2668 = vmatprep.subr.mxu0 0.0
      %2669 = vmatpush1.msra.mxu0 0.0
      %2670 = vmatprep.subr.mxu0 0.0
      %2671 = vmatpush1.msra.mxu0 0.0
      %2672 = vmatprep.subr.mxu0 0.0
      %2673 = vmatpush1.msra.mxu0 0.0
      %2674 = vmatprep.subr.mxu0 0.0
      %2675 = vmatpush1.msra.mxu0 0.0
      %2676 = vmatprep.subr.mxu0 0.0
      %2677 = vmatpush1.msra.mxu0 0.0
      %2678 = vmatprep.subr.mxu0 0.0
      %2679 = vmatpush1.msra.mxu0 0.0
      %2680 = vmatprep.subr.mxu0 0.0
      %2681 = vmatpush1.msra.mxu0 0.0
      %2682 = vmatprep.subr.mxu0 0.0
      %2683 = vmatpush1.msra.mxu0 0.0
      %2684 = vmatprep.subr.mxu0 0.0
      %2685 = vmatpush1.msra.mxu0 0.0
      %2686 = vmatprep.subr.mxu0 %v2419
      %2687 = vmatpush1.msra.mxu0 %v2416
      %2688 = vmatprep.subr.mxu0 %v2358
      %2689 = vmatpush1.msra.mxu0 %v2357
      %2690 = vmatprep.subr.mxu0 0.0
      %2691 = vmatpush2.msra.mxu0 0.0
      %2692 = vmatprep.subr.mxu0 0.0
      %2693 = vmatpush2.msra.mxu0 0.0
      %2694 = vmatprep.subr.mxu0 0.0
      %2695 = vmatpush2.msra.mxu0 0.0
      %2696 = vmatprep.subr.mxu0 0.0
      %2697 = vmatpush2.msra.mxu0 0.0
      %2698 = vmatprep.subr.mxu0 0.0
      %2699 = vmatpush2.msra.mxu0 0.0
      %2700 = vmatprep.subr.mxu0 0.0
      %2701 = vmatpush2.msra.mxu0 0.0
      %2702 = vmatprep.subr.mxu0 0.0
      %2703 = vmatpush2.msra.mxu0 0.0
      %2704 = vmatprep.subr.mxu0 0.0
      %2705 = vmatpush2.msra.mxu0 0.0
      %2706 = vmatprep.subr.mxu0 0.0
      %2707 = vmatpush2.msra.mxu0 0.0
      %2708 = vmatprep.subr.mxu0 0.0
      %2709 = vmatpush2.msra.mxu0 0.0
      %2710 = vmatprep.subr.mxu0 0.0
      %2711 = vmatpush2.msra.mxu0 0.0
      %2712 = vmatprep.subr.mxu0 0.0
      %2713 = vmatpush2.msra.mxu0 0.0
      %2714 = vmatprep.subr.mxu0 0.0
      %2715 = vmatpush2.msra.mxu0 0.0
      %2716 = vmatprep.subr.mxu0 0.0
      %2717 = vmatpush2.msra.mxu0 0.0
      %2718 = vmatprep.subr.mxu0 0.0
      %2719 = vmatpush2.msra.mxu0 0.0
      %2720 = vmatprep.subr.mxu0 0.0
      %2721 = vmatpush2.msra.mxu0 0.0
      %2722 = vmatprep.mubr.f32.mxu0 0.0
      %2723 = vmatmul.mubr.f32.gmra.mxu0 %v2394
      %v2724 = vpop.f32.mrf.mxu0
      %v2725 = vadd.f32 %v2390, %v2724
      %v2726 = vpop.f32.mrf.mxu0
      %v2727 = vadd.f32 %v2390, %v2726
      %2728 = vdwg.mxu0
      %2729 = vmatprep.subr.mxu0 0.0
      %2730 = vmatpush1.msra.mxu0 0.0
      %2731 = vmatprep.subr.mxu0 0.0
      %2732 = vmatpush1.msra.mxu0 0.0
      %2733 = vmatprep.subr.mxu0 0.0
      %2734 = vmatpush1.msra.mxu0 0.0
      %2735 = vmatprep.subr.mxu0 0.0
      %2736 = vmatpush1.msra.mxu0 0.0
      %2737 = vmatprep.subr.mxu0 0.0
      %2738 = vmatpush1.msra.mxu0 0.0
      %2739 = vmatprep.subr.mxu0 0.0
      %2740 = vmatpush1.msra.mxu0 0.0
      %2741 = vmatprep.subr.mxu0 0.0
      %2742 = vmatpush1.msra.mxu0 0.0
      %2743 = vmatprep.subr.mxu0 0.0
      %2744 = vmatpush1.msra.mxu0 0.0
      %2745 = vmatprep.subr.mxu0 0.0
      %2746 = vmatpush1.msra.mxu0 0.0
      %2747 = vmatprep.subr.mxu0 0.0
      %2748 = vmatpush1.msra.mxu0 0.0
      %2749 = vmatprep.subr.mxu0 0.0
      %2750 = vmatpush1.msra.mxu0 0.0
      %2751 = vmatprep.subr.mxu0 0.0
      %2752 = vmatpush1.msra.mxu0 0.0
      %2753 = vmatprep.subr.mxu0 0.0
      %2754 = vmatpush1.msra.mxu0 0.0
      %2755 = vmatprep.subr.mxu0 0.0
      %2756 = vmatpush1.msra.mxu0 0.0
      %2757 = vmatprep.subr.mxu0 %v2425
      %2758 = vmatpush1.msra.mxu0 %v2422
      %2759 = vmatprep.subr.mxu0 %v2360
      %2760 = vmatpush1.msra.mxu0 %v2359
      %2761 = vmatprep.subr.mxu0 0.0
      %2762 = vmatpush2.msra.mxu0 0.0
      %2763 = vmatprep.subr.mxu0 0.0
      %2764 = vmatpush2.msra.mxu0 0.0
      %2765 = vmatprep.subr.mxu0 0.0
      %2766 = vmatpush2.msra.mxu0 0.0
      %2767 = vmatprep.subr.mxu0 0.0
      %2768 = vmatpush2.msra.mxu0 0.0
      %2769 = vmatprep.subr.mxu0 0.0
      %2770 = vmatpush2.msra.mxu0 0.0
      %2771 = vmatprep.subr.mxu0 0.0
      %2772 = vmatpush2.msra.mxu0 0.0
      %2773 = vmatprep.subr.mxu0 0.0
      %2774 = vmatpush2.msra.mxu0 0.0
      %2775 = vmatprep.subr.mxu0 0.0
      %2776 = vmatpush2.msra.mxu0 0.0
      %2777 = vmatprep.subr.mxu0 0.0
      %2778 = vmatpush2.msra.mxu0 0.0
      %2779 = vmatprep.subr.mxu0 0.0
      %2780 = vmatpush2.msra.mxu0 0.0
      %2781 = vmatprep.subr.mxu0 0.0
      %2782 = vmatpush2.msra.mxu0 0.0
      %2783 = vmatprep.subr.mxu0 0.0
      %2784 = vmatpush2.msra.mxu0 0.0
      %2785 = vmatprep.subr.mxu0 0.0
      %2786 = vmatpush2.msra.mxu0 0.0
      %2787 = vmatprep.subr.mxu0 0.0
      %2788 = vmatpush2.msra.mxu0 0.0
      %2789 = vmatprep.subr.mxu0 0.0
      %2790 = vmatpush2.msra.mxu0 0.0
      %2791 = vmatprep.subr.mxu0 0.0
      %2792 = vmatpush2.msra.mxu0 0.0
      %2793 = vmatprep.mubr.f32.mxu0 0.0
      %2794 = vmatmul.mubr.f32.gmra.mxu0 %v2394
      %v2795 = vpop.f32.mrf.mxu0
      %v2796 = vadd.f32 %v2390, %v2795
      %v2797 = vpop.f32.mrf.mxu0
      %v2798 = vadd.f32 %v2390, %v2797
      %2799 = vdwg.mxu0
      %2800 = vmatprep.subr.mxu0 0.0
      %2801 = vmatpush1.msra.mxu0 0.0
      %2802 = vmatprep.subr.mxu0 0.0
      %2803 = vmatpush1.msra.mxu0 0.0
      %2804 = vmatprep.subr.mxu0 0.0
      %2805 = vmatpush1.msra.mxu0 0.0
      %2806 = vmatprep.subr.mxu0 0.0
      %2807 = vmatpush1.msra.mxu0 0.0
      %2808 = vmatprep.subr.mxu0 0.0
      %2809 = vmatpush1.msra.mxu0 0.0
      %2810 = vmatprep.subr.mxu0 0.0
      %2811 = vmatpush1.msra.mxu0 0.0
      %2812 = vmatprep.subr.mxu0 0.0
      %2813 = vmatpush1.msra.mxu0 0.0
      %2814 = vmatprep.subr.mxu0 0.0
      %2815 = vmatpush1.msra.mxu0 0.0
      %2816 = vmatprep.subr.mxu0 0.0
      %2817 = vmatpush1.msra.mxu0 0.0
      %2818 = vmatprep.subr.mxu0 0.0
      %2819 = vmatpush1.msra.mxu0 0.0
      %2820 = vmatprep.subr.mxu0 0.0
      %2821 = vmatpush1.msra.mxu0 0.0
      %2822 = vmatprep.subr.mxu0 0.0
      %2823 = vmatpush1.msra.mxu0 0.0
      %2824 = vmatprep.subr.mxu0 0.0
      %2825 = vmatpush1.msra.mxu0 0.0
      %2826 = vmatprep.subr.mxu0 0.0
      %2827 = vmatpush1.msra.mxu0 0.0
      %2828 = vmatprep.subr.mxu0 %v2431
      %2829 = vmatpush1.msra.mxu0 %v2428
      %2830 = vmatprep.subr.mxu0 %v2362
      %2831 = vmatpush1.msra.mxu0 %v2361
      %2832 = vmatprep.subr.mxu0 0.0
      %2833 = vmatpush2.msra.mxu0 0.0
      %2834 = vmatprep.subr.mxu0 0.0
      %2835 = vmatpush2.msra.mxu0 0.0
      %2836 = vmatprep.subr.mxu0 0.0
      %2837 = vmatpush2.msra.mxu0 0.0
      %2838 = vmatprep.subr.mxu0 0.0
      %2839 = vmatpush2.msra.mxu0 0.0
      %2840 = vmatprep.subr.mxu0 0.0
      %2841 = vmatpush2.msra.mxu0 0.0
      %2842 = vmatprep.subr.mxu0 0.0
      %2843 = vmatpush2.msra.mxu0 0.0
      %2844 = vmatprep.subr.mxu0 0.0
      %2845 = vmatpush2.msra.mxu0 0.0
      %2846 = vmatprep.subr.mxu0 0.0
      %2847 = vmatpush2.msra.mxu0 0.0
      %2848 = vmatprep.subr.mxu0 0.0
      %2849 = vmatpush2.msra.mxu0 0.0
      %2850 = vmatprep.subr.mxu0 0.0
      %2851 = vmatpush2.msra.mxu0 0.0
      %2852 = vmatprep.subr.mxu0 0.0
      %2853 = vmatpush2.msra.mxu0 0.0
      %2854 = vmatprep.subr.mxu0 0.0
      %2855 = vmatpush2.msra.mxu0 0.0
      %2856 = vmatprep.subr.mxu0 0.0
      %2857 = vmatpush2.msra.mxu0 0.0
      %2858 = vmatprep.subr.mxu0 0.0
      %2859 = vmatpush2.msra.mxu0 0.0
      %2860 = vmatprep.subr.mxu0 0.0
      %2861 = vmatpush2.msra.mxu0 0.0
      %2862 = vmatprep.subr.mxu0 0.0
      %2863 = vmatpush2.msra.mxu0 0.0
      %2864 = vmatprep.mubr.f32.mxu0 0.0
      %2865 = vmatmul.mubr.f32.gmra.mxu0 %v2394
      %v2866 = vpop.f32.mrf.mxu0
      %v2867 = vadd.f32 %v2390, %v2866
      %v2868 = vpop.f32.mrf.mxu0
      %v2869 = vadd.f32 %v2390, %v2868
      %2870 = vdwg.mxu0
      %2871 = vmatprep.subr.mxu0 0.0
      %2872 = vmatpush1.msra.mxu0 0.0
      %2873 = vmatprep.subr.mxu0 0.0
      %2874 = vmatpush1.msra.mxu0 0.0
      %2875 = vmatprep.subr.mxu0 0.0
      %2876 = vmatpush1.msra.mxu0 0.0
      %2877 = vmatprep.subr.mxu0 0.0
      %2878 = vmatpush1.msra.mxu0 0.0
      %2879 = vmatprep.subr.mxu0 0.0
      %2880 = vmatpush1.msra.mxu0 0.0
      %2881 = vmatprep.subr.mxu0 0.0
      %2882 = vmatpush1.msra.mxu0 0.0
      %2883 = vmatprep.subr.mxu0 0.0
      %2884 = vmatpush1.msra.mxu0 0.0
      %2885 = vmatprep.subr.mxu0 0.0
      %2886 = vmatpush1.msra.mxu0 0.0
      %2887 = vmatprep.subr.mxu0 0.0
      %2888 = vmatpush1.msra.mxu0 0.0
      %2889 = vmatprep.subr.mxu0 0.0
      %2890 = vmatpush1.msra.mxu0 0.0
      %2891 = vmatprep.subr.mxu0 0.0
      %2892 = vmatpush1.msra.mxu0 0.0
      %2893 = vmatprep.subr.mxu0 0.0
      %2894 = vmatpush1.msra.mxu0 0.0
      %2895 = vmatprep.subr.mxu0 0.0
      %2896 = vmatpush1.msra.mxu0 0.0
      %2897 = vmatprep.subr.mxu0 0.0
      %2898 = vmatpush1.msra.mxu0 0.0
      %2899 = vmatprep.subr.mxu0 %v2437
      %2900 = vmatpush1.msra.mxu0 %v2434
      %2901 = vmatprep.subr.mxu0 %v2364
      %2902 = vmatpush1.msra.mxu0 %v2363
      %2903 = vmatprep.subr.mxu0 0.0
      %2904 = vmatpush2.msra.mxu0 0.0
      %2905 = vmatprep.subr.mxu0 0.0
      %2906 = vmatpush2.msra.mxu0 0.0
      %2907 = vmatprep.subr.mxu0 0.0
      %2908 = vmatpush2.msra.mxu0 0.0
      %2909 = vmatprep.subr.mxu0 0.0
      %2910 = vmatpush2.msra.mxu0 0.0
      %2911 = vmatprep.subr.mxu0 0.0
      %2912 = vmatpush2.msra.mxu0 0.0
      %2913 = vmatprep.subr.mxu0 0.0
      %2914 = vmatpush2.msra.mxu0 0.0
      %2915 = vmatprep.subr.mxu0 0.0
      %2916 = vmatpush2.msra.mxu0 0.0
      %2917 = vmatprep.subr.mxu0 0.0
      %2918 = vmatpush2.msra.mxu0 0.0
      %2919 = vmatprep.subr.mxu0 0.0
      %2920 = vmatpush2.msra.mxu0 0.0
      %2921 = vmatprep.subr.mxu0 0.0
      %2922 = vmatpush2.msra.mxu0 0.0
      %2923 = vmatprep.subr.mxu0 0.0
      %2924 = vmatpush2.msra.mxu0 0.0
      %2925 = vmatprep.subr.mxu0 0.0
      %2926 = vmatpush2.msra.mxu0 0.0
      %2927 = vmatprep.subr.mxu0 0.0
      %2928 = vmatpush2.msra.mxu0 0.0
      %2929 = vmatprep.subr.mxu0 0.0
      %2930 = vmatpush2.msra.mxu0 0.0
      %2931 = vmatprep.subr.mxu0 0.0
      %2932 = vmatpush2.msra.mxu0 0.0
      %2933 = vmatprep.subr.mxu0 0.0
      %2934 = vmatpush2.msra.mxu0 0.0
      %2935 = vmatprep.mubr.f32.mxu0 0.0
      %2936 = vmatmul.mubr.f32.gmra.mxu0 %v2394
      %v2937 = vpop.f32.mrf.mxu0
      %v2938 = vadd.f32 %v2390, %v2937
      %v2939 = vpop.f32.mrf.mxu0
      %v2940 = vadd.f32 %v2390, %v2939
      %2941 = vdwg.mxu0
      %2942 = vmatprep.subr.mxu0 0.0
      %2943 = vmatpush1.msra.mxu0 0.0
      %2944 = vmatprep.subr.mxu0 0.0
      %2945 = vmatpush1.msra.mxu0 0.0
      %2946 = vmatprep.subr.mxu0 0.0
      %2947 = vmatpush1.msra.mxu0 0.0
      %2948 = vmatprep.subr.mxu0 0.0
      %2949 = vmatpush1.msra.mxu0 0.0
      %2950 = vmatprep.subr.mxu0 0.0
      %2951 = vmatpush1.msra.mxu0 0.0
      %2952 = vmatprep.subr.mxu0 0.0
      %2953 = vmatpush1.msra.mxu0 0.0
      %2954 = vmatprep.subr.mxu0 0.0
      %2955 = vmatpush1.msra.mxu0 0.0
      %2956 = vmatprep.subr.mxu0 0.0
      %2957 = vmatpush1.msra.mxu0 0.0
      %2958 = vmatprep.subr.mxu0 0.0
      %2959 = vmatpush1.msra.mxu0 0.0
      %2960 = vmatprep.subr.mxu0 0.0
      %2961 = vmatpush1.msra.mxu0 0.0
      %2962 = vmatprep.subr.mxu0 0.0
      %2963 = vmatpush1.msra.mxu0 0.0
      %2964 = vmatprep.subr.mxu0 0.0
      %2965 = vmatpush1.msra.mxu0 0.0
      %2966 = vmatprep.subr.mxu0 0.0
      %2967 = vmatpush1.msra.mxu0 0.0
      %2968 = vmatprep.subr.mxu0 0.0
      %2969 = vmatpush1.msra.mxu0 0.0
      %2970 = vmatprep.subr.mxu0 %v2443
      %2971 = vmatpush1.msra.mxu0 %v2440
      %2972 = vmatprep.subr.mxu0 %v2366
      %2973 = vmatpush1.msra.mxu0 %v2365
      %2974 = vmatprep.subr.mxu0 0.0
      %2975 = vmatpush2.msra.mxu0 0.0
      %2976 = vmatprep.subr.mxu0 0.0
      %2977 = vmatpush2.msra.mxu0 0.0
      %2978 = vmatprep.subr.mxu0 0.0
      %2979 = vmatpush2.msra.mxu0 0.0
      %2980 = vmatprep.subr.mxu0 0.0
      %2981 = vmatpush2.msra.mxu0 0.0
      %2982 = vmatprep.subr.mxu0 0.0
      %2983 = vmatpush2.msra.mxu0 0.0
      %2984 = vmatprep.subr.mxu0 0.0
      %2985 = vmatpush2.msra.mxu0 0.0
      %2986 = vmatprep.subr.mxu0 0.0
      %2987 = vmatpush2.msra.mxu0 0.0
      %2988 = vmatprep.subr.mxu0 0.0
      %2989 = vmatpush2.msra.mxu0 0.0
      %2990 = vmatprep.subr.mxu0 0.0
      %2991 = vmatpush2.msra.mxu0 0.0
      %2992 = vmatprep.subr.mxu0 0.0
      %2993 = vmatpush2.msra.mxu0 0.0
      %2994 = vmatprep.subr.mxu0 0.0
      %2995 = vmatpush2.msra.mxu0 0.0
      %2996 = vmatprep.subr.mxu0 0.0
      %2997 = vmatpush2.msra.mxu0 0.0
      %2998 = vmatprep.subr.mxu0 0.0
      %2999 = vmatpush2.msra.mxu0 0.0
      %3000 = vmatprep.subr.mxu0 0.0
      %3001 = vmatpush2.msra.mxu0 0.0
      %3002 = vmatprep.subr.mxu0 0.0
      %3003 = vmatpush2.msra.mxu0 0.0
      %3004 = vmatprep.subr.mxu0 0.0
      %3005 = vmatpush2.msra.mxu0 0.0
      %3006 = vmatprep.mubr.f32.mxu0 0.0
      %3007 = vmatmul.mubr.f32.gmra.mxu0 %v2394
      %v3008 = vpop.f32.mrf.mxu0
      %v3009 = vadd.f32 %v2390, %v3008
      %v3010 = vpop.f32.mrf.mxu0
      %v3011 = vadd.f32 %v2390, %v3010
      %3012 = vdwg.mxu0
      %v3013 = vmax.f32 %v2512, 0.0
      %v3014 = vmax.f32 %v2514, 0.0
      %v3015 = vmax.f32 %v2583, 0.0
      %v3016 = vmax.f32 %v2585, 0.0
      %v3017 = vmax.f32 %v2654, 0.0
      %v3018 = vmax.f32 %v2656, 0.0
      %v3019 = vmax.f32 %v2725, 0.0
      %v3020 = vmax.f32 %v2727, 0.0
      %v3021 = vmax.f32 %v2796, 0.0
      %v3022 = vmax.f32 %v2798, 0.0
      %v3023 = vmax.f32 %v2867, 0.0
      %v3024 = vmax.f32 %v2869, 0.0
      %v3025 = vmax.f32 %v2938, 0.0
      %v3026 = vmax.f32 %v2940, 0.0
      %v3027 = vmax.f32 %v3009, 0.0
      %v3028 = vmax.f32 %v3011, 0.0
      %3029 = vmatprep.subr.mxu0 0.0
      %3030 = vmatpush1.msra.mxu0 %v1438
      %3031 = vmatprep.subr.mxu0 0.0
      %3032 = vmatpush1.msra.mxu0 %v1437
      %3033 = vmatprep.subr.mxu0 0.0
      %3034 = vmatpush1.msra.mxu0 %v1436
      %3035 = vmatprep.subr.mxu0 0.0
      %3036 = vmatpush1.msra.mxu0 %v1435
      %3037 = vmatprep.subr.mxu0 0.0
      %3038 = vmatpush1.msra.mxu0 %v1434
      %3039 = vmatprep.subr.mxu0 0.0
      %3040 = vmatpush1.msra.mxu0 %v1433
      %3041 = vmatprep.subr.mxu0 0.0
      %3042 = vmatpush1.msra.mxu0 %v1432
      %3043 = vmatprep.subr.mxu0 0.0
      %3044 = vmatpush1.msra.mxu0 %v1431
      %3045 = vmatprep.subr.mxu0 0.0
      %3046 = vmatpush1.msra.mxu0 %v1430
      %3047 = vmatprep.subr.mxu0 0.0
      %3048 = vmatpush1.msra.mxu0 %v1429
      %3049 = vmatprep.subr.mxu0 0.0
      %3050 = vmatpush1.msra.mxu0 %v1428
      %3051 = vmatprep.subr.mxu0 0.0
      %3052 = vmatpush1.msra.mxu0 %v1427
      %3053 = vmatprep.subr.mxu0 0.0
      %3054 = vmatpush1.msra.mxu0 %v1426
      %3055 = vmatprep.subr.mxu0 0.0
      %3056 = vmatpush1.msra.mxu0 %v1425
      %3057 = vmatprep.subr.mxu0 0.0
      %3058 = vmatpush1.msra.mxu0 %v1424
      %3059 = vmatprep.subr.mxu0 0.0
      %3060 = vmatpush1.msra.mxu0 %v1423
      %3061 = vmatprep.subr.mxu0 0.0
      %3062 = vmatpush2.msra.mxu0 %v1454
      %3063 = vmatprep.subr.mxu0 0.0
      %3064 = vmatpush2.msra.mxu0 %v1453
      %3065 = vmatprep.subr.mxu0 0.0
      %3066 = vmatpush2.msra.mxu0 %v1452
      %3067 = vmatprep.subr.mxu0 0.0
      %3068 = vmatpush2.msra.mxu0 %v1451
      %3069 = vmatprep.subr.mxu0 0.0
      %3070 = vmatpush2.msra.mxu0 %v1450
      %3071 = vmatprep.subr.mxu0 0.0
      %3072 = vmatpush2.msra.mxu0 %v1449
      %3073 = vmatprep.subr.mxu0 0.0
      %3074 = vmatpush2.msra.mxu0 %v1448
      %3075 = vmatprep.subr.mxu0 0.0
      %3076 = vmatpush2.msra.mxu0 %v1447
      %3077 = vmatprep.subr.mxu0 0.0
      %3078 = vmatpush2.msra.mxu0 %v1446
      %3079 = vmatprep.subr.mxu0 0.0
      %3080 = vmatpush2.msra.mxu0 %v1445
      %3081 = vmatprep.subr.mxu0 0.0
      %3082 = vmatpush2.msra.mxu0 %v1444
      %3083 = vmatprep.subr.mxu0 0.0
      %3084 = vmatpush2.msra.mxu0 %v1443
      %3085 = vmatprep.subr.mxu0 0.0
      %3086 = vmatpush2.msra.mxu0 %v1442
      %3087 = vmatprep.subr.mxu0 0.0
      %3088 = vmatpush2.msra.mxu0 %v1441
      %3089 = vmatprep.subr.mxu0 0.0
      %3090 = vmatpush2.msra.mxu0 %v1440
      %3091 = vmatprep.subr.mxu0 0.0
      %3092 = vmatpush2.msra.mxu0 %v1439
      %3093 = vmatprep.mubr.f32.mxu0 %v3014
      %3094 = vmatmul.mubr.f32.gmra.mxu0 %v3013
      %v3095 = vpop.f32.mrf.mxu0
      %v3096 = vadd.f32 0.0, %v3095
      %v3097 = vpop.f32.mrf.mxu0
      %3098 = vdwg.mxu0
      %3099 = vmatprep.subr.mxu0 0.0
      %3100 = vmatpush1.msra.mxu0 %v1470
      %3101 = vmatprep.subr.mxu0 0.0
      %3102 = vmatpush1.msra.mxu0 %v1469
      %3103 = vmatprep.subr.mxu0 0.0
      %3104 = vmatpush1.msra.mxu0 %v1468
      %3105 = vmatprep.subr.mxu0 0.0
      %3106 = vmatpush1.msra.mxu0 %v1467
      %3107 = vmatprep.subr.mxu0 0.0
      %3108 = vmatpush1.msra.mxu0 %v1466
      %3109 = vmatprep.subr.mxu0 0.0
      %3110 = vmatpush1.msra.mxu0 %v1465
      %3111 = vmatprep.subr.mxu0 0.0
      %3112 = vmatpush1.msra.mxu0 %v1464
      %3113 = vmatprep.subr.mxu0 0.0
      %3114 = vmatpush1.msra.mxu0 %v1463
      %3115 = vmatprep.subr.mxu0 0.0
      %3116 = vmatpush1.msra.mxu0 %v1462
      %3117 = vmatprep.subr.mxu0 0.0
      %3118 = vmatpush1.msra.mxu0 %v1461
      %3119 = vmatprep.subr.mxu0 0.0
      %3120 = vmatpush1.msra.mxu0 %v1460
      %3121 = vmatprep.subr.mxu0 0.0
      %3122 = vmatpush1.msra.mxu0 %v1459
      %3123 = vmatprep.subr.mxu0 0.0
      %3124 = vmatpush1.msra.mxu0 %v1458
      %3125 = vmatprep.subr.mxu0 0.0
      %3126 = vmatpush1.msra.mxu0 %v1457
      %3127 = vmatprep.subr.mxu0 0.0
      %3128 = vmatpush1.msra.mxu0 %v1456
      %3129 = vmatprep.subr.mxu0 0.0
      %3130 = vmatpush1.msra.mxu0 %v1455
      %3131 = vmatprep.subr.mxu0 0.0
      %3132 = vmatpush2.msra.mxu0 %v1486
      %3133 = vmatprep.subr.mxu0 0.0
      %3134 = vmatpush2.msra.mxu0 %v1485
      %3135 = vmatprep.subr.mxu0 0.0
      %3136 = vmatpush2.msra.mxu0 %v1484
      %3137 = vmatprep.subr.mxu0 0.0
      %3138 = vmatpush2.msra.mxu0 %v1483
      %3139 = vmatprep.subr.mxu0 0.0
      %3140 = vmatpush2.msra.mxu0 %v1482
      %3141 = vmatprep.subr.mxu0 0.0
      %3142 = vmatpush2.msra.mxu0 %v1481
      %3143 = vmatprep.subr.mxu0 0.0
      %3144 = vmatpush2.msra.mxu0 %v1480
      %3145 = vmatprep.subr.mxu0 0.0
      %3146 = vmatpush2.msra.mxu0 %v1479
      %3147 = vmatprep.subr.mxu0 0.0
      %3148 = vmatpush2.msra.mxu0 %v1478
      %3149 = vmatprep.subr.mxu0 0.0
      %3150 = vmatpush2.msra.mxu0 %v1477
      %3151 = vmatprep.subr.mxu0 0.0
      %3152 = vmatpush2.msra.mxu0 %v1476
      %3153 = vmatprep.subr.mxu0 0.0
      %3154 = vmatpush2.msra.mxu0 %v1475
      %3155 = vmatprep.subr.mxu0 0.0
      %3156 = vmatpush2.msra.mxu0 %v1474
      %3157 = vmatprep.subr.mxu0 0.0
      %3158 = vmatpush2.msra.mxu0 %v1473
      %3159 = vmatprep.subr.mxu0 0.0
      %3160 = vmatpush2.msra.mxu0 %v1472
      %3161 = vmatprep.subr.mxu0 0.0
      %3162 = vmatpush2.msra.mxu0 %v1471
      %3163 = vmatprep.mubr.f32.mxu0 %v3016
      %3164 = vmatmul.mubr.f32.gmra.mxu0 %v3015
      %v3165 = vpop.f32.mrf.mxu0
      %v3166 = vadd.f32 %v3096, %v3165
      %v3167 = vpop.f32.mrf.mxu0
      %3168 = vdwg.mxu0
      %3169 = vmatprep.subr.mxu0 0.0
      %3170 = vmatpush1.msra.mxu0 %v1502
      %3171 = vmatprep.subr.mxu0 0.0
      %3172 = vmatpush1.msra.mxu0 %v1501
      %3173 = vmatprep.subr.mxu0 0.0
      %3174 = vmatpush1.msra.mxu0 %v1500
      %3175 = vmatprep.subr.mxu0 0.0
      %3176 = vmatpush1.msra.mxu0 %v1499
      %3177 = vmatprep.subr.mxu0 0.0
      %3178 = vmatpush1.msra.mxu0 %v1498
      %3179 = vmatprep.subr.mxu0 0.0
      %3180 = vmatpush1.msra.mxu0 %v1497
      %3181 = vmatprep.subr.mxu0 0.0
      %3182 = vmatpush1.msra.mxu0 %v1496
      %3183 = vmatprep.subr.mxu0 0.0
      %3184 = vmatpush1.msra.mxu0 %v1495
      %3185 = vmatprep.subr.mxu0 0.0
      %3186 = vmatpush1.msra.mxu0 %v1494
      %3187 = vmatprep.subr.mxu0 0.0
      %3188 = vmatpush1.msra.mxu0 %v1493
      %3189 = vmatprep.subr.mxu0 0.0
      %3190 = vmatpush1.msra.mxu0 %v1492
      %3191 = vmatprep.subr.mxu0 0.0
      %3192 = vmatpush1.msra.mxu0 %v1491
      %3193 = vmatprep.subr.mxu0 0.0
      %3194 = vmatpush1.msra.mxu0 %v1490
      %3195 = vmatprep.subr.mxu0 0.0
      %3196 = vmatpush1.msra.mxu0 %v1489
      %3197 = vmatprep.subr.mxu0 0.0
      %3198 = vmatpush1.msra.mxu0 %v1488
      %3199 = vmatprep.subr.mxu0 0.0
      %3200 = vmatpush1.msra.mxu0 %v1487
      %3201 = vmatprep.subr.mxu0 0.0
      %3202 = vmatpush2.msra.mxu0 %v1518
      %3203 = vmatprep.subr.mxu0 0.0
      %3204 = vmatpush2.msra.mxu0 %v1517
      %3205 = vmatprep.subr.mxu0 0.0
      %3206 = vmatpush2.msra.mxu0 %v1516
      %3207 = vmatprep.subr.mxu0 0.0
      %3208 = vmatpush2.msra.mxu0 %v1515
      %3209 = vmatprep.subr.mxu0 0.0
      %3210 = vmatpush2.msra.mxu0 %v1514
      %3211 = vmatprep.subr.mxu0 0.0
      %3212 = vmatpush2.msra.mxu0 %v1513
      %3213 = vmatprep.subr.mxu0 0.0
      %3214 = vmatpush2.msra.mxu0 %v1512
      %3215 = vmatprep.subr.mxu0 0.0
      %3216 = vmatpush2.msra.mxu0 %v1511
      %3217 = vmatprep.subr.mxu0 0.0
      %3218 = vmatpush2.msra.mxu0 %v1510
      %3219 = vmatprep.subr.mxu0 0.0
      %3220 = vmatpush2.msra.mxu0 %v1509
      %3221 = vmatprep.subr.mxu0 0.0
      %3222 = vmatpush2.msra.mxu0 %v1508
      %3223 = vmatprep.subr.mxu0 0.0
      %3224 = vmatpush2.msra.mxu0 %v1507
      %3225 = vmatprep.subr.mxu0 0.0
      %3226 = vmatpush2.msra.mxu0 %v1506
      %3227 = vmatprep.subr.mxu0 0.0
      %3228 = vmatpush2.msra.mxu0 %v1505
      %3229 = vmatprep.subr.mxu0 0.0
      %3230 = vmatpush2.msra.mxu0 %v1504
      %3231 = vmatprep.subr.mxu0 0.0
      %3232 = vmatpush2.msra.mxu0 %v1503
      %3233 = vmatprep.mubr.f32.mxu0 %v3018
      %3234 = vmatmul.mubr.f32.gmra.mxu0 %v3017
      %v3235 = vpop.f32.mrf.mxu0
      %v3236 = vadd.f32 %v3166, %v3235
      %v3237 = vpop.f32.mrf.mxu0
      %3238 = vdwg.mxu0
      %3239 = vmatprep.subr.mxu0 0.0
      %3240 = vmatpush1.msra.mxu0 %v1534
      %3241 = vmatprep.subr.mxu0 0.0
      %3242 = vmatpush1.msra.mxu0 %v1533
      %3243 = vmatprep.subr.mxu0 0.0
      %3244 = vmatpush1.msra.mxu0 %v1532
      %3245 = vmatprep.subr.mxu0 0.0
      %3246 = vmatpush1.msra.mxu0 %v1531
      %3247 = vmatprep.subr.mxu0 0.0
      %3248 = vmatpush1.msra.mxu0 %v1530
      %3249 = vmatprep.subr.mxu0 0.0
      %3250 = vmatpush1.msra.mxu0 %v1529
      %3251 = vmatprep.subr.mxu0 0.0
      %3252 = vmatpush1.msra.mxu0 %v1528
      %3253 = vmatprep.subr.mxu0 0.0
      %3254 = vmatpush1.msra.mxu0 %v1527
      %3255 = vmatprep.subr.mxu0 0.0
      %3256 = vmatpush1.msra.mxu0 %v1526
      %3257 = vmatprep.subr.mxu0 0.0
      %3258 = vmatpush1.msra.mxu0 %v1525
      %3259 = vmatprep.subr.mxu0 0.0
      %3260 = vmatpush1.msra.mxu0 %v1524
      %3261 = vmatprep.subr.mxu0 0.0
      %3262 = vmatpush1.msra.mxu0 %v1523
      %3263 = vmatprep.subr.mxu0 0.0
      %3264 = vmatpush1.msra.mxu0 %v1522
      %3265 = vmatprep.subr.mxu0 0.0
      %3266 = vmatpush1.msra.mxu0 %v1521
      %3267 = vmatprep.subr.mxu0 0.0
      %3268 = vmatpush1.msra.mxu0 %v1520
      %3269 = vmatprep.subr.mxu0 0.0
      %3270 = vmatpush1.msra.mxu0 %v1519
      %3271 = vmatprep.subr.mxu0 0.0
      %3272 = vmatpush2.msra.mxu0 %v1550
      %3273 = vmatprep.subr.mxu0 0.0
      %3274 = vmatpush2.msra.mxu0 %v1549
      %3275 = vmatprep.subr.mxu0 0.0
      %3276 = vmatpush2.msra.mxu0 %v1548
      %3277 = vmatprep.subr.mxu0 0.0
      %3278 = vmatpush2.msra.mxu0 %v1547
      %3279 = vmatprep.subr.mxu0 0.0
      %3280 = vmatpush2.msra.mxu0 %v1546
      %3281 = vmatprep.subr.mxu0 0.0
      %3282 = vmatpush2.msra.mxu0 %v1545
      %3283 = vmatprep.subr.mxu0 0.0
      %3284 = vmatpush2.msra.mxu0 %v1544
      %3285 = vmatprep.subr.mxu0 0.0
      %3286 = vmatpush2.msra.mxu0 %v1543
      %3287 = vmatprep.subr.mxu0 0.0
      %3288 = vmatpush2.msra.mxu0 %v1542
      %3289 = vmatprep.subr.mxu0 0.0
      %3290 = vmatpush2.msra.mxu0 %v1541
      %3291 = vmatprep.subr.mxu0 0.0
      %3292 = vmatpush2.msra.mxu0 %v1540
      %3293 = vmatprep.subr.mxu0 0.0
      %3294 = vmatpush2.msra.mxu0 %v1539
      %3295 = vmatprep.subr.mxu0 0.0
      %3296 = vmatpush2.msra.mxu0 %v1538
      %3297 = vmatprep.subr.mxu0 0.0
      %3298 = vmatpush2.msra.mxu0 %v1537
      %3299 = vmatprep.subr.mxu0 0.0
      %3300 = vmatpush2.msra.mxu0 %v1536
      %3301 = vmatprep.subr.mxu0 0.0
      %3302 = vmatpush2.msra.mxu0 %v1535
      %3303 = vmatprep.mubr.f32.mxu0 %v3020
      %3304 = vmatmul.mubr.f32.gmra.mxu0 %v3019
      %v3305 = vpop.f32.mrf.mxu0
      %v3306 = vadd.f32 %v3236, %v3305
      %v3307 = vpop.f32.mrf.mxu0
      %3308 = vdwg.mxu0
      %3309 = vmatprep.subr.mxu0 0.0
      %3310 = vmatpush1.msra.mxu0 %v1566
      %3311 = vmatprep.subr.mxu0 0.0
      %3312 = vmatpush1.msra.mxu0 %v1565
      %3313 = vmatprep.subr.mxu0 0.0
      %3314 = vmatpush1.msra.mxu0 %v1564
      %3315 = vmatprep.subr.mxu0 0.0
      %3316 = vmatpush1.msra.mxu0 %v1563
      %3317 = vmatprep.subr.mxu0 0.0
      %3318 = vmatpush1.msra.mxu0 %v1562
      %3319 = vmatprep.subr.mxu0 0.0
      %3320 = vmatpush1.msra.mxu0 %v1561
      %3321 = vmatprep.subr.mxu0 0.0
      %3322 = vmatpush1.msra.mxu0 %v1560
      %3323 = vmatprep.subr.mxu0 0.0
      %3324 = vmatpush1.msra.mxu0 %v1559
      %3325 = vmatprep.subr.mxu0 0.0
      %3326 = vmatpush1.msra.mxu0 %v1558
      %3327 = vmatprep.subr.mxu0 0.0
      %3328 = vmatpush1.msra.mxu0 %v1557
      %3329 = vmatprep.subr.mxu0 0.0
      %3330 = vmatpush1.msra.mxu0 %v1556
      %3331 = vmatprep.subr.mxu0 0.0
      %3332 = vmatpush1.msra.mxu0 %v1555
      %3333 = vmatprep.subr.mxu0 0.0
      %3334 = vmatpush1.msra.mxu0 %v1554
      %3335 = vmatprep.subr.mxu0 0.0
      %3336 = vmatpush1.msra.mxu0 %v1553
      %3337 = vmatprep.subr.mxu0 0.0
      %3338 = vmatpush1.msra.mxu0 %v1552
      %3339 = vmatprep.subr.mxu0 0.0
      %3340 = vmatpush1.msra.mxu0 %v1551
      %3341 = vmatprep.subr.mxu0 0.0
      %3342 = vmatpush2.msra.mxu0 %v1582
      %3343 = vmatprep.subr.mxu0 0.0
      %3344 = vmatpush2.msra.mxu0 %v1581
      %3345 = vmatprep.subr.mxu0 0.0
      %3346 = vmatpush2.msra.mxu0 %v1580
      %3347 = vmatprep.subr.mxu0 0.0
      %3348 = vmatpush2.msra.mxu0 %v1579
      %3349 = vmatprep.subr.mxu0 0.0
      %3350 = vmatpush2.msra.mxu0 %v1578
      %3351 = vmatprep.subr.mxu0 0.0
      %3352 = vmatpush2.msra.mxu0 %v1577
      %3353 = vmatprep.subr.mxu0 0.0
      %3354 = vmatpush2.msra.mxu0 %v1576
      %3355 = vmatprep.subr.mxu0 0.0
      %3356 = vmatpush2.msra.mxu0 %v1575
      %3357 = vmatprep.subr.mxu0 0.0
      %3358 = vmatpush2.msra.mxu0 %v1574
      %3359 = vmatprep.subr.mxu0 0.0
      %3360 = vmatpush2.msra.mxu0 %v1573
      %3361 = vmatprep.subr.mxu0 0.0
      %3362 = vmatpush2.msra.mxu0 %v1572
      %3363 = vmatprep.subr.mxu0 0.0
      %3364 = vmatpush2.msra.mxu0 %v1571
      %3365 = vmatprep.subr.mxu0 0.0
      %3366 = vmatpush2.msra.mxu0 %v1570
      %3367 = vmatprep.subr.mxu0 0.0
      %3368 = vmatpush2.msra.mxu0 %v1569
      %3369 = vmatprep.subr.mxu0 0.0
      %3370 = vmatpush2.msra.mxu0 %v1568
      %3371 = vmatprep.subr.mxu0 0.0
      %3372 = vmatpush2.msra.mxu0 %v1567
      %3373 = vmatprep.mubr.f32.mxu0 %v3022
      %3374 = vmatmul.mubr.f32.gmra.mxu0 %v3021
      %v3375 = vpop.f32.mrf.mxu0
      %v3376 = vadd.f32 %v3306, %v3375
      %v3377 = vpop.f32.mrf.mxu0
      %3378 = vdwg.mxu0
      %3379 = vmatprep.subr.mxu0 0.0
      %3380 = vmatpush1.msra.mxu0 %v1598
      %3381 = vmatprep.subr.mxu0 0.0
      %3382 = vmatpush1.msra.mxu0 %v1597
      %3383 = vmatprep.subr.mxu0 0.0
      %3384 = vmatpush1.msra.mxu0 %v1596
      %3385 = vmatprep.subr.mxu0 0.0
      %3386 = vmatpush1.msra.mxu0 %v1595
      %3387 = vmatprep.subr.mxu0 0.0
      %3388 = vmatpush1.msra.mxu0 %v1594
      %3389 = vmatprep.subr.mxu0 0.0
      %3390 = vmatpush1.msra.mxu0 %v1593
      %3391 = vmatprep.subr.mxu0 0.0
      %3392 = vmatpush1.msra.mxu0 %v1592
      %3393 = vmatprep.subr.mxu0 0.0
      %3394 = vmatpush1.msra.mxu0 %v1591
      %3395 = vmatprep.subr.mxu0 0.0
      %3396 = vmatpush1.msra.mxu0 %v1590
      %3397 = vmatprep.subr.mxu0 0.0
      %3398 = vmatpush1.msra.mxu0 %v1589
      %3399 = vmatprep.subr.mxu0 0.0
      %3400 = vmatpush1.msra.mxu0 %v1588
      %3401 = vmatprep.subr.mxu0 0.0
      %3402 = vmatpush1.msra.mxu0 %v1587
      %3403 = vmatprep.subr.mxu0 0.0
      %3404 = vmatpush1.msra.mxu0 %v1586
      %3405 = vmatprep.subr.mxu0 0.0
      %3406 = vmatpush1.msra.mxu0 %v1585
      %3407 = vmatprep.subr.mxu0 0.0
      %3408 = vmatpush1.msra.mxu0 %v1584
      %3409 = vmatprep.subr.mxu0 0.0
      %3410 = vmatpush1.msra.mxu0 %v1583
      %3411 = vmatprep.subr.mxu0 0.0
      %3412 = vmatpush2.msra.mxu0 %v1614
      %3413 = vmatprep.subr.mxu0 0.0
      %3414 = vmatpush2.msra.mxu0 %v1613
      %3415 = vmatprep.subr.mxu0 0.0
      %3416 = vmatpush2.msra.mxu0 %v1612
      %3417 = vmatprep.subr.mxu0 0.0
      %3418 = vmatpush2.msra.mxu0 %v1611
      %3419 = vmatprep.subr.mxu0 0.0
      %3420 = vmatpush2.msra.mxu0 %v1610
      %3421 = vmatprep.subr.mxu0 0.0
      %3422 = vmatpush2.msra.mxu0 %v1609
      %3423 = vmatprep.subr.mxu0 0.0
      %3424 = vmatpush2.msra.mxu0 %v1608
      %3425 = vmatprep.subr.mxu0 0.0
      %3426 = vmatpush2.msra.mxu0 %v1607
      %3427 = vmatprep.subr.mxu0 0.0
      %3428 = vmatpush2.msra.mxu0 %v1606
      %3429 = vmatprep.subr.mxu0 0.0
      %3430 = vmatpush2.msra.mxu0 %v1605
      %3431 = vmatprep.subr.mxu0 0.0
      %3432 = vmatpush2.msra.mxu0 %v1604
      %3433 = vmatprep.subr.mxu0 0.0
      %3434 = vmatpush2.msra.mxu0 %v1603
      %3435 = vmatprep.subr.mxu0 0.0
      %3436 = vmatpush2.msra.mxu0 %v1602
      %3437 = vmatprep.subr.mxu0 0.0
      %3438 = vmatpush2.msra.mxu0 %v1601
      %3439 = vmatprep.subr.mxu0 0.0
      %3440 = vmatpush2.msra.mxu0 %v1600
      %3441 = vmatprep.subr.mxu0 0.0
      %3442 = vmatpush2.msra.mxu0 %v1599
      %3443 = vmatprep.mubr.f32.mxu0 %v3024
      %3444 = vmatmul.mubr.f32.gmra.mxu0 %v3023
      %v3445 = vpop.f32.mrf.mxu0
      %v3446 = vadd.f32 %v3376, %v3445
      %v3447 = vpop.f32.mrf.mxu0
      %3448 = vdwg.mxu0
      %3449 = vmatprep.subr.mxu0 0.0
      %3450 = vmatpush1.msra.mxu0 %v1630
      %3451 = vmatprep.subr.mxu0 0.0
      %3452 = vmatpush1.msra.mxu0 %v1629
      %3453 = vmatprep.subr.mxu0 0.0
      %3454 = vmatpush1.msra.mxu0 %v1628
      %3455 = vmatprep.subr.mxu0 0.0
      %3456 = vmatpush1.msra.mxu0 %v1627
      %3457 = vmatprep.subr.mxu0 0.0
      %3458 = vmatpush1.msra.mxu0 %v1626
      %3459 = vmatprep.subr.mxu0 0.0
      %3460 = vmatpush1.msra.mxu0 %v1625
      %3461 = vmatprep.subr.mxu0 0.0
      %3462 = vmatpush1.msra.mxu0 %v1624
      %3463 = vmatprep.subr.mxu0 0.0
      %3464 = vmatpush1.msra.mxu0 %v1623
      %3465 = vmatprep.subr.mxu0 0.0
      %3466 = vmatpush1.msra.mxu0 %v1622
      %3467 = vmatprep.subr.mxu0 0.0
      %3468 = vmatpush1.msra.mxu0 %v1621
      %3469 = vmatprep.subr.mxu0 0.0
      %3470 = vmatpush1.msra.mxu0 %v1620
      %3471 = vmatprep.subr.mxu0 0.0
      %3472 = vmatpush1.msra.mxu0 %v1619
      %3473 = vmatprep.subr.mxu0 0.0
      %3474 = vmatpush1.msra.mxu0 %v1618
      %3475 = vmatprep.subr.mxu0 0.0
      %3476 = vmatpush1.msra.mxu0 %v1617
      %3477 = vmatprep.subr.mxu0 0.0
      %3478 = vmatpush1.msra.mxu0 %v1616
      %3479 = vmatprep.subr.mxu0 0.0
      %3480 = vmatpush1.msra.mxu0 %v1615
      %3481 = vmatprep.subr.mxu0 0.0
      %3482 = vmatpush2.msra.mxu0 %v1646
      %3483 = vmatprep.subr.mxu0 0.0
      %3484 = vmatpush2.msra.mxu0 %v1645
      %3485 = vmatprep.subr.mxu0 0.0
      %3486 = vmatpush2.msra.mxu0 %v1644
      %3487 = vmatprep.subr.mxu0 0.0
      %3488 = vmatpush2.msra.mxu0 %v1643
      %3489 = vmatprep.subr.mxu0 0.0
      %3490 = vmatpush2.msra.mxu0 %v1642
      %3491 = vmatprep.subr.mxu0 0.0
      %3492 = vmatpush2.msra.mxu0 %v1641
      %3493 = vmatprep.subr.mxu0 0.0
      %3494 = vmatpush2.msra.mxu0 %v1640
      %3495 = vmatprep.subr.mxu0 0.0
      %3496 = vmatpush2.msra.mxu0 %v1639
      %3497 = vmatprep.subr.mxu0 0.0
      %3498 = vmatpush2.msra.mxu0 %v1638
      %3499 = vmatprep.subr.mxu0 0.0
      %3500 = vmatpush2.msra.mxu0 %v1637
      %3501 = vmatprep.subr.mxu0 0.0
      %3502 = vmatpush2.msra.mxu0 %v1636
      %3503 = vmatprep.subr.mxu0 0.0
      %3504 = vmatpush2.msra.mxu0 %v1635
      %3505 = vmatprep.subr.mxu0 0.0
      %3506 = vmatpush2.msra.mxu0 %v1634
      %3507 = vmatprep.subr.mxu0 0.0
      %3508 = vmatpush2.msra.mxu0 %v1633
      %3509 = vmatprep.subr.mxu0 0.0
      %3510 = vmatpush2.msra.mxu0 %v1632
      %3511 = vmatprep.subr.mxu0 0.0
      %3512 = vmatpush2.msra.mxu0 %v1631
      %3513 = vmatprep.mubr.f32.mxu0 %v3026
      %3514 = vmatmul.mubr.f32.gmra.mxu0 %v3025
      %v3515 = vpop.f32.mrf.mxu0
      %v3516 = vadd.f32 %v3446, %v3515
      %v3517 = vpop.f32.mrf.mxu0
      %3518 = vdwg.mxu0
      %3519 = vmatprep.subr.mxu0 0.0
      %3520 = vmatpush1.msra.mxu0 %v1662
      %3521 = vmatprep.subr.mxu0 0.0
      %3522 = vmatpush1.msra.mxu0 %v1661
      %3523 = vmatprep.subr.mxu0 0.0
      %3524 = vmatpush1.msra.mxu0 %v1660
      %3525 = vmatprep.subr.mxu0 0.0
      %3526 = vmatpush1.msra.mxu0 %v1659
      %3527 = vmatprep.subr.mxu0 0.0
      %3528 = vmatpush1.msra.mxu0 %v1658
      %3529 = vmatprep.subr.mxu0 0.0
      %3530 = vmatpush1.msra.mxu0 %v1657
      %3531 = vmatprep.subr.mxu0 0.0
      %3532 = vmatpush1.msra.mxu0 %v1656
      %3533 = vmatprep.subr.mxu0 0.0
      %3534 = vmatpush1.msra.mxu0 %v1655
      %3535 = vmatprep.subr.mxu0 0.0
      %3536 = vmatpush1.msra.mxu0 %v1654
      %3537 = vmatprep.subr.mxu0 0.0
      %3538 = vmatpush1.msra.mxu0 %v1653
      %3539 = vmatprep.subr.mxu0 0.0
      %3540 = vmatpush1.msra.mxu0 %v1652
      %3541 = vmatprep.subr.mxu0 0.0
      %3542 = vmatpush1.msra.mxu0 %v1651
      %3543 = vmatprep.subr.mxu0 0.0
      %3544 = vmatpush1.msra.mxu0 %v1650
      %3545 = vmatprep.subr.mxu0 0.0
      %3546 = vmatpush1.msra.mxu0 %v1649
      %3547 = vmatprep.subr.mxu0 0.0
      %3548 = vmatpush1.msra.mxu0 %v1648
      %3549 = vmatprep.subr.mxu0 0.0
      %3550 = vmatpush1.msra.mxu0 %v1647
      %3551 = vmatprep.subr.mxu0 0.0
      %3552 = vmatpush2.msra.mxu0 %v1678
      %3553 = vmatprep.subr.mxu0 0.0
      %3554 = vmatpush2.msra.mxu0 %v1677
      %3555 = vmatprep.subr.mxu0 0.0
      %3556 = vmatpush2.msra.mxu0 %v1676
      %3557 = vmatprep.subr.mxu0 0.0
      %3558 = vmatpush2.msra.mxu0 %v1675
      %3559 = vmatprep.subr.mxu0 0.0
      %3560 = vmatpush2.msra.mxu0 %v1674
      %3561 = vmatprep.subr.mxu0 0.0
      %3562 = vmatpush2.msra.mxu0 %v1673
      %3563 = vmatprep.subr.mxu0 0.0
      %3564 = vmatpush2.msra.mxu0 %v1672
      %3565 = vmatprep.subr.mxu0 0.0
      %3566 = vmatpush2.msra.mxu0 %v1671
      %3567 = vmatprep.subr.mxu0 0.0
      %3568 = vmatpush2.msra.mxu0 %v1670
      %3569 = vmatprep.subr.mxu0 0.0
      %3570 = vmatpush2.msra.mxu0 %v1669
      %3571 = vmatprep.subr.mxu0 0.0
      %3572 = vmatpush2.msra.mxu0 %v1668
      %3573 = vmatprep.subr.mxu0 0.0
      %3574 = vmatpush2.msra.mxu0 %v1667
      %3575 = vmatprep.subr.mxu0 0.0
      %3576 = vmatpush2.msra.mxu0 %v1666
      %3577 = vmatprep.subr.mxu0 0.0
      %3578 = vmatpush2.msra.mxu0 %v1665
      %3579 = vmatprep.subr.mxu0 0.0
      %3580 = vmatpush2.msra.mxu0 %v1664
      %3581 = vmatprep.subr.mxu0 0.0
      %3582 = vmatpush2.msra.mxu0 %v1663
      %3583 = vmatprep.mubr.f32.mxu0 %v3028
      %3584 = vmatmul.mubr.f32.gmra.mxu0 %v3027
      %v3585 = vpop.f32.mrf.mxu0
      %v3586 = vadd.f32 %v3516, %v3585
      %v3587 = vpop.f32.mrf.mxu0
      %3588 = vdwg.mxu0
      %3589 = vxpose.xlu0.b32.start [1/16] %v3586, 128
      %3590 = vxpose.xlu0.b32.cont [2/16] 0.0, 128
      %3591 = vxpose.xlu0.b32.cont [3/16] 0.0, 128
      %3592 = vxpose.xlu0.b32.cont [4/16] 0.0, 128
      %3593 = vxpose.xlu0.b32.cont [5/16] 0.0, 128
      %3594 = vxpose.xlu0.b32.cont [6/16] 0.0, 128
      %3595 = vxpose.xlu0.b32.cont [7/16] 0.0, 128
      %3596 = vxpose.xlu0.b32.cont [8/16] 0.0, 128
      %3597 = vxpose.xlu0.b32.cont [9/16] 0.0, 128
      %3598 = vxpose.xlu0.b32.cont [10/16] 0.0, 128
      %3599 = vxpose.xlu0.b32.cont [11/16] 0.0, 128
      %3600 = vxpose.xlu0.b32.cont [12/16] 0.0, 128
      %3601 = vxpose.xlu0.b32.cont [13/16] 0.0, 128
      %3602 = vxpose.xlu0.b32.cont [14/16] 0.0, 128
      %3603 = vxpose.xlu0.b32.cont [15/16] 0.0, 128
      %3604 = vxpose.xlu0.b32.end [16/16] 0.0, 128
      %v3605 = vpop.trf.xlu0
      %v3606 = vpop.trf.xlu0
      %v3607 = vpop.trf.xlu0
      %v3608 = vpop.trf.xlu0
      %v3609 = vpop.trf.xlu0
      %v3610 = vpop.trf.xlu0
      %v3611 = vpop.trf.xlu0
      %v3612 = vpop.trf.xlu0
      %v3613 = vpop.trf.xlu0
      %v3614 = vpop.trf.xlu0
      %v3615 = vpop.trf.xlu0
      %v3616 = vpop.trf.xlu0
      %v3617 = vpop.trf.xlu0
      %v3618 = vpop.trf.xlu0
      %v3619 = vpop.trf.xlu0
      %v3620 = vpop.trf.xlu0
      %v3622 = vlaneseq
      %v3623 = vshrl.u32 %v3622, 7
      %v3624 = vsub.s32 0, %v3623
      %v3625 = vrot.slane %v2386, %v3624
      %v3628 = vsel %vm2277, %v3605, 0
      %3630 = vmatprep.subr.mxu0 0.0
      %3631 = vmatpush1.msra.mxu0 0.0
      %3632 = vmatprep.subr.mxu0 0.0
      %3633 = vmatpush1.msra.mxu0 0.0
      %3634 = vmatprep.subr.mxu0 0.0
      %3635 = vmatpush1.msra.mxu0 0.0
      %3636 = vmatprep.subr.mxu0 0.0
      %3637 = vmatpush1.msra.mxu0 0.0
      %3638 = vmatprep.subr.mxu0 0.0
      %3639 = vmatpush1.msra.mxu0 0.0
      %3640 = vmatprep.subr.mxu0 0.0
      %3641 = vmatpush1.msra.mxu0 0.0
      %3642 = vmatprep.subr.mxu0 0.0
      %3643 = vmatpush1.msra.mxu0 0.0
      %3644 = vmatprep.subr.mxu0 0.0
      %3645 = vmatpush1.msra.mxu0 0.0
      %3646 = vmatprep.subr.mxu0 0.0
      %3647 = vmatpush1.msra.mxu0 0.0
      %3648 = vmatprep.subr.mxu0 0.0
      %3649 = vmatpush1.msra.mxu0 0.0
      %3650 = vmatprep.subr.mxu0 0.0
      %3651 = vmatpush1.msra.mxu0 0.0
      %3652 = vmatprep.subr.mxu0 0.0
      %3653 = vmatpush1.msra.mxu0 0.0
      %3654 = vmatprep.subr.mxu0 0.0
      %3655 = vmatpush1.msra.mxu0 0.0
      %3656 = vmatprep.subr.mxu0 0.0
      %3657 = vmatpush1.msra.mxu0 0.0
      %3658 = vmatprep.subr.mxu0 0.0
      %3659 = vmatpush1.msra.mxu0 0.0
      %3660 = vmatprep.subr.mxu0 0.0
      %3661 = vmatpush1.msra.mxu0 %v2385
      %3662 = vmatprep.subr.mxu0 0.0
      %3663 = vmatpush2.msra.mxu0 0.0
      %3664 = vmatprep.subr.mxu0 0.0
      %3665 = vmatpush2.msra.mxu0 0.0
      %3666 = vmatprep.subr.mxu0 0.0
      %3667 = vmatpush2.msra.mxu0 0.0
      %3668 = vmatprep.subr.mxu0 0.0
      %3669 = vmatpush2.msra.mxu0 0.0
      %3670 = vmatprep.subr.mxu0 0.0
      %3671 = vmatpush2.msra.mxu0 0.0
      %3672 = vmatprep.subr.mxu0 0.0
      %3673 = vmatpush2.msra.mxu0 0.0
      %3674 = vmatprep.subr.mxu0 0.0
      %3675 = vmatpush2.msra.mxu0 0.0
      %3676 = vmatprep.subr.mxu0 0.0
      %3677 = vmatpush2.msra.mxu0 0.0
      %3678 = vmatprep.subr.mxu0 0.0
      %3679 = vmatpush2.msra.mxu0 0.0
      %3680 = vmatprep.subr.mxu0 0.0
      %3681 = vmatpush2.msra.mxu0 0.0
      %3682 = vmatprep.subr.mxu0 0.0
      %3683 = vmatpush2.msra.mxu0 0.0
      %3684 = vmatprep.subr.mxu0 0.0
      %3685 = vmatpush2.msra.mxu0 0.0
      %3686 = vmatprep.subr.mxu0 0.0
      %3687 = vmatpush2.msra.mxu0 0.0
      %3688 = vmatprep.subr.mxu0 0.0
      %3689 = vmatpush2.msra.mxu0 0.0
      %3690 = vmatprep.subr.mxu0 0.0
      %3691 = vmatpush2.msra.mxu0 0.0
      %3692 = vmatprep.subr.mxu0 0.0
      %3693 = vmatpush2.msra.mxu0 0.0
      %3694 = vmatprep.mubr.f32.mxu0 0.0
      %3695 = vmatmul.mubr.f32.gmra.mxu0 %v3628
      %v3696 = vpop.f32.mrf.mxu0
      %v3697 = vadd.f32 %v3625, %v3696
      %v3698 = vpop.f32.mrf.mxu0
      %3699 = vdwg.mxu0
      %v3700 = vmax.f32 %v2348, 0.0
      %v3701 = vmax.f32 %v3697, 0.0
      %v3702 = vld [vmem:[%s11] sm:$0xff]
      %v3703 = vld [vmem:[%s11 + $0x8] sm:$0xff]
      %v3704 = vld [vmem:[%s11 + $0x10] sm:$0xff]
      %v3705 = vld [vmem:[%s11 + $0x18] sm:$0xff]
      %v3706 = vld [vmem:[%s12] sm:$0xff]
      %v3707 = vld [vmem:[%s12 + $0x8] sm:$0xff]
      %v3708 = vld [vmem:[%s12 + $0x10] sm:$0xff]
      %v3709 = vld [vmem:[%s12 + $0x18] sm:$0xff]
      %vm3710 = vcmask 261120
      %v3712 = vsel %vm3710, %v3701, 0
      %3714 = vmatprep.subr.mxu0 0.0
      %3715 = vmatpush1.msra.mxu0 0.0
      %3716 = vmatprep.subr.mxu0 0.0
      %3717 = vmatpush1.msra.mxu0 0.0
      %3718 = vmatprep.subr.mxu0 0.0
      %3719 = vmatpush1.msra.mxu0 0.0
      %3720 = vmatprep.subr.mxu0 0.0
      %3721 = vmatpush1.msra.mxu0 0.0
      %3722 = vmatprep.subr.mxu0 0.0
      %3723 = vmatpush1.msra.mxu0 0.0
      %3724 = vmatprep.subr.mxu0 0.0
      %3725 = vmatpush1.msra.mxu0 0.0
      %3726 = vmatprep.subr.mxu0 0.0
      %3727 = vmatpush1.msra.mxu0 0.0
      %3728 = vmatprep.subr.mxu0 0.0
      %3729 = vmatpush1.msra.mxu0 0.0
      %3730 = vmatprep.subr.mxu0 0.0
      %3731 = vmatpush1.msra.mxu0 0.0
      %3732 = vmatprep.subr.mxu0 0.0
      %3733 = vmatpush1.msra.mxu0 0.0
      %3734 = vmatprep.subr.mxu0 0.0
      %3735 = vmatpush1.msra.mxu0 0.0
      %3736 = vmatprep.subr.mxu0 0.0
      %3737 = vmatpush1.msra.mxu0 0.0
      %3738 = vmatprep.subr.mxu0 0.0
      %3739 = vmatpush1.msra.mxu0 %v3709
      %3740 = vmatprep.subr.mxu0 0.0
      %3741 = vmatpush1.msra.mxu0 %v3708
      %3742 = vmatprep.subr.mxu0 0.0
      %3743 = vmatpush1.msra.mxu0 %v3707
      %3744 = vmatprep.subr.mxu0 0.0
      %3745 = vmatpush1.msra.mxu0 %v3706
      %3746 = vmatprep.subr.mxu0 0.0
      %3747 = vmatpush2.msra.mxu0 0.0
      %3748 = vmatprep.subr.mxu0 0.0
      %3749 = vmatpush2.msra.mxu0 0.0
      %3750 = vmatprep.subr.mxu0 0.0
      %3751 = vmatpush2.msra.mxu0 0.0
      %3752 = vmatprep.subr.mxu0 0.0
      %3753 = vmatpush2.msra.mxu0 0.0
      %3754 = vmatprep.subr.mxu0 0.0
      %3755 = vmatpush2.msra.mxu0 0.0
      %3756 = vmatprep.subr.mxu0 0.0
      %3757 = vmatpush2.msra.mxu0 0.0
      %3758 = vmatprep.subr.mxu0 0.0
      %3759 = vmatpush2.msra.mxu0 0.0
      %3760 = vmatprep.subr.mxu0 0.0
      %3761 = vmatpush2.msra.mxu0 0.0
      %3762 = vmatprep.subr.mxu0 0.0
      %3763 = vmatpush2.msra.mxu0 0.0
      %3764 = vmatprep.subr.mxu0 0.0
      %3765 = vmatpush2.msra.mxu0 0.0
      %3766 = vmatprep.subr.mxu0 0.0
      %3767 = vmatpush2.msra.mxu0 0.0
      %3768 = vmatprep.subr.mxu0 0.0
      %3769 = vmatpush2.msra.mxu0 0.0
      %3770 = vmatprep.subr.mxu0 0.0
      %3771 = vmatpush2.msra.mxu0 0.0
      %3772 = vmatprep.subr.mxu0 0.0
      %3773 = vmatpush2.msra.mxu0 0.0
      %3774 = vmatprep.subr.mxu0 0.0
      %3775 = vmatpush2.msra.mxu0 0.0
      %3776 = vmatprep.subr.mxu0 0.0
      %3777 = vmatpush2.msra.mxu0 0.0
      %3778 = vmatprep.mubr.f32.mxu0 0.0
      %3779 = vmatmul.mubr.f32.gmra.mxu0 %v3712
      %v3780 = vpop.f32.mrf.mxu0
      %v3781 = vadd.f32 0.0, %v3780
      %v3782 = vpop.f32.mrf.mxu0
      %3783 = vdwg.mxu0
      %v3785 = vsel %vm3710, %v3700, 0
      %3787 = vmatprep.subr.mxu0 0.0
      %3788 = vmatpush1.msra.mxu0 0.0
      %3789 = vmatprep.subr.mxu0 0.0
      %3790 = vmatpush1.msra.mxu0 0.0
      %3791 = vmatprep.subr.mxu0 0.0
      %3792 = vmatpush1.msra.mxu0 0.0
      %3793 = vmatprep.subr.mxu0 0.0
      %3794 = vmatpush1.msra.mxu0 0.0
      %3795 = vmatprep.subr.mxu0 0.0
      %3796 = vmatpush1.msra.mxu0 0.0
      %3797 = vmatprep.subr.mxu0 0.0
      %3798 = vmatpush1.msra.mxu0 0.0
      %3799 = vmatprep.subr.mxu0 0.0
      %3800 = vmatpush1.msra.mxu0 0.0
      %3801 = vmatprep.subr.mxu0 0.0
      %3802 = vmatpush1.msra.mxu0 0.0
      %3803 = vmatprep.subr.mxu0 0.0
      %3804 = vmatpush1.msra.mxu0 0.0
      %3805 = vmatprep.subr.mxu0 0.0
      %3806 = vmatpush1.msra.mxu0 0.0
      %3807 = vmatprep.subr.mxu0 0.0
      %3808 = vmatpush1.msra.mxu0 0.0
      %3809 = vmatprep.subr.mxu0 0.0
      %3810 = vmatpush1.msra.mxu0 0.0
      %3811 = vmatprep.subr.mxu0 0.0
      %3812 = vmatpush1.msra.mxu0 %v3705
      %3813 = vmatprep.subr.mxu0 0.0
      %3814 = vmatpush1.msra.mxu0 %v3704
      %3815 = vmatprep.subr.mxu0 0.0
      %3816 = vmatpush1.msra.mxu0 %v3703
      %3817 = vmatprep.subr.mxu0 0.0
      %3818 = vmatpush1.msra.mxu0 %v3702
      %3819 = vmatprep.subr.mxu0 0.0
      %3820 = vmatpush2.msra.mxu0 0.0
      %3821 = vmatprep.subr.mxu0 0.0
      %3822 = vmatpush2.msra.mxu0 0.0
      %3823 = vmatprep.subr.mxu0 0.0
      %3824 = vmatpush2.msra.mxu0 0.0
      %3825 = vmatprep.subr.mxu0 0.0
      %3826 = vmatpush2.msra.mxu0 0.0
      %3827 = vmatprep.subr.mxu0 0.0
      %3828 = vmatpush2.msra.mxu0 0.0
      %3829 = vmatprep.subr.mxu0 0.0
      %3830 = vmatpush2.msra.mxu0 0.0
      %3831 = vmatprep.subr.mxu0 0.0
      %3832 = vmatpush2.msra.mxu0 0.0
      %3833 = vmatprep.subr.mxu0 0.0
      %3834 = vmatpush2.msra.mxu0 0.0
      %3835 = vmatprep.subr.mxu0 0.0
      %3836 = vmatpush2.msra.mxu0 0.0
      %3837 = vmatprep.subr.mxu0 0.0
      %3838 = vmatpush2.msra.mxu0 0.0
      %3839 = vmatprep.subr.mxu0 0.0
      %3840 = vmatpush2.msra.mxu0 0.0
      %3841 = vmatprep.subr.mxu0 0.0
      %3842 = vmatpush2.msra.mxu0 0.0
      %3843 = vmatprep.subr.mxu0 0.0
      %3844 = vmatpush2.msra.mxu0 0.0
      %3845 = vmatprep.subr.mxu0 0.0
      %3846 = vmatpush2.msra.mxu0 0.0
      %3847 = vmatprep.subr.mxu0 0.0
      %3848 = vmatpush2.msra.mxu0 0.0
      %3849 = vmatprep.subr.mxu0 0.0
      %3850 = vmatpush2.msra.mxu0 0.0
      %3851 = vmatprep.mubr.f32.mxu0 0.0
      %3852 = vmatmul.mubr.f32.gmra.mxu0 %v3785
      %v3853 = vpop.f32.mrf.mxu0
      %v3854 = vadd.f32 %v3781, %v3853
      %v3855 = vpop.f32.mrf.mxu0
      %3856 = vdwg.mxu0
      %v3857 = vld [vmem:[%s14] sm:$0x1]
      %v3859 = vlaneseq
      %v3860 = vshrl.u32 %v3859, 7
      %v3861 = vsub.s32 0, %v3860
      %v3862 = vrot.slane %v3857, %v3861
      %v3864 = vadd.f32 %v3854, %v3862
      %v3865 = vld [vmem:[%s13] sm:$0xff]
      %v3866 = vld [vmem:[%s13 + $0x8] sm:$0xff]
      %v3867 = vld [vmem:[%s13 + $0x10] sm:$0xff]
      %v3868 = vld [vmem:[%s13 + $0x18] sm:$0xff]
      %v3870 = vsel %vm3710, 0.0, 0
      %3872 = vmatprep.subr.mxu0 0.0
      %3873 = vmatpush1.msra.mxu0 0.0
      %3874 = vmatprep.subr.mxu0 0.0
      %3875 = vmatpush1.msra.mxu0 0.0
      %3876 = vmatprep.subr.mxu0 0.0
      %3877 = vmatpush1.msra.mxu0 0.0
      %3878 = vmatprep.subr.mxu0 0.0
      %3879 = vmatpush1.msra.mxu0 0.0
      %3880 = vmatprep.subr.mxu0 0.0
      %3881 = vmatpush1.msra.mxu0 0.0
      %3882 = vmatprep.subr.mxu0 0.0
      %3883 = vmatpush1.msra.mxu0 0.0
      %3884 = vmatprep.subr.mxu0 0.0
      %3885 = vmatpush1.msra.mxu0 0.0
      %3886 = vmatprep.subr.mxu0 0.0
      %3887 = vmatpush1.msra.mxu0 0.0
      %3888 = vmatprep.subr.mxu0 0.0
      %3889 = vmatpush1.msra.mxu0 0.0
      %3890 = vmatprep.subr.mxu0 0.0
      %3891 = vmatpush1.msra.mxu0 0.0
      %3892 = vmatprep.subr.mxu0 0.0
      %3893 = vmatpush1.msra.mxu0 0.0
      %3894 = vmatprep.subr.mxu0 0.0
      %3895 = vmatpush1.msra.mxu0 0.0
      %3896 = vmatprep.subr.mxu0 0.0
      %3897 = vmatpush1.msra.mxu0 %v3868
      %3898 = vmatprep.subr.mxu0 0.0
      %3899 = vmatpush1.msra.mxu0 %v3867
      %3900 = vmatprep.subr.mxu0 0.0
      %3901 = vmatpush1.msra.mxu0 %v3866
      %3902 = vmatprep.subr.mxu0 0.0
      %3903 = vmatpush1.msra.mxu0 %v3865
      %3904 = vmatprep.subr.mxu0 0.0
      %3905 = vmatpush2.msra.mxu0 0.0
      %3906 = vmatprep.subr.mxu0 0.0
      %3907 = vmatpush2.msra.mxu0 0.0
      %3908 = vmatprep.subr.mxu0 0.0
      %3909 = vmatpush2.msra.mxu0 0.0
      %3910 = vmatprep.subr.mxu0 0.0
      %3911 = vmatpush2.msra.mxu0 0.0
      %3912 = vmatprep.subr.mxu0 0.0
      %3913 = vmatpush2.msra.mxu0 0.0
      %3914 = vmatprep.subr.mxu0 0.0
      %3915 = vmatpush2.msra.mxu0 0.0
      %3916 = vmatprep.subr.mxu0 0.0
      %3917 = vmatpush2.msra.mxu0 0.0
      %3918 = vmatprep.subr.mxu0 0.0
      %3919 = vmatpush2.msra.mxu0 0.0
      %3920 = vmatprep.subr.mxu0 0.0
      %3921 = vmatpush2.msra.mxu0 0.0
      %3922 = vmatprep.subr.mxu0 0.0
      %3923 = vmatpush2.msra.mxu0 0.0
      %3924 = vmatprep.subr.mxu0 0.0
      %3925 = vmatpush2.msra.mxu0 0.0
      %3926 = vmatprep.subr.mxu0 0.0
      %3927 = vmatpush2.msra.mxu0 0.0
      %3928 = vmatprep.subr.mxu0 0.0
      %3929 = vmatpush2.msra.mxu0 0.0
      %3930 = vmatprep.subr.mxu0 0.0
      %3931 = vmatpush2.msra.mxu0 0.0
      %3932 = vmatprep.subr.mxu0 0.0
      %3933 = vmatpush2.msra.mxu0 0.0
      %3934 = vmatprep.subr.mxu0 0.0
      %3935 = vmatpush2.msra.mxu0 0.0
      %3936 = vmatprep.mubr.f32.mxu0 0.0
      %3937 = vmatmul.mubr.f32.gmra.mxu0 %v3870
      %v3938 = vpop.f32.mrf.mxu0
      %v3939 = vadd.f32 0.0, %v3938
      %v3940 = vpop.f32.mrf.mxu0
      %3941 = vdwg.mxu0
      %v3942 = vadd.f32 %v3864, %v3939
      %v3943 = vxor.u32 %v3942, 2147483648
      %v3944 = vmul.f32 %v3943, 1.442695
      %v3945 = vpow.pop %v3944
      %v3946 = vadd.f32 %v3945, 1.0
      %v3947 = vrcp.pop %v3946
      %v3948 = vmul.f32 1.0, %v3947
      %v3949 = vtanh.pop %v3942
      %v3950 = vmul.f32 %v3948, 0.0
      %3952 = vrot.lane.b32.xlu0 %v3949, 64
      %v3953 = vpop.permute.xlu0 %3952
      %v3955 = vmul.f32 %v3948, %v3953
      %3957 = vrot.lane.b32.xlu0 %v3955, 32
      %v3958 = vpop.permute.xlu0 %3957
      %v3960 = vadd.f32 %v3950, %v3958
      %v3961 = vtanh.pop %v3960
      %3963 = vrot.lane.b32.xlu0 %v3961, 64
      %v3964 = vpop.permute.xlu0 %3963
      %v3966 = vmul.f32 %v3948, %v3964
      %3968 = vrot.lane.b32.xlu0 %v3966, 32
      %v3969 = vpop.permute.xlu0 %3968
      %vm3971 = vcmask 253952
      %3972 = vst.msk [vmem:[#allocation2] sm:$0x1] %vm3971, %v3969
      %v3973 = vsel %vm3710, %v3969, 0
      %3975 = vmatprep.subr.mxu0 0.0
      %3976 = vmatpush1.msra.mxu0 0.0
      %3977 = vmatprep.subr.mxu0 0.0
      %3978 = vmatpush1.msra.mxu0 0.0
      %3979 = vmatprep.subr.mxu0 0.0
      %3980 = vmatpush1.msra.mxu0 0.0
      %3981 = vmatprep.subr.mxu0 0.0
      %3982 = vmatpush1.msra.mxu0 0.0
      %3983 = vmatprep.subr.mxu0 0.0
      %3984 = vmatpush1.msra.mxu0 0.0
      %3985 = vmatprep.subr.mxu0 0.0
      %3986 = vmatpush1.msra.mxu0 0.0
      %3987 = vmatprep.subr.mxu0 0.0
      %3988 = vmatpush1.msra.mxu0 0.0
      %3989 = vmatprep.subr.mxu0 0.0
      %3990 = vmatpush1.msra.mxu0 0.0
      %3991 = vmatprep.subr.mxu0 0.0
      %3992 = vmatpush1.msra.mxu0 0.0
      %3993 = vmatprep.subr.mxu0 0.0
      %3994 = vmatpush1.msra.mxu0 0.0
      %3995 = vmatprep.subr.mxu0 0.0
      %3996 = vmatpush1.msra.mxu0 0.0
      %3997 = vmatprep.subr.mxu0 0.0
      %3998 = vmatpush1.msra.mxu0 0.0
      %3999 = vmatprep.subr.mxu0 0.0
      %4000 = vmatpush1.msra.mxu0 %v3868
      %4001 = vmatprep.subr.mxu0 0.0
      %4002 = vmatpush1.msra.mxu0 %v3867
      %4003 = vmatprep.subr.mxu0 0.0
      %4004 = vmatpush1.msra.mxu0 %v3866
      %4005 = vmatprep.subr.mxu0 0.0
      %4006 = vmatpush1.msra.mxu0 %v3865
      %4007 = vmatprep.subr.mxu0 0.0
      %4008 = vmatpush2.msra.mxu0 0.0
      %4009 = vmatprep.subr.mxu0 0.0
      %4010 = vmatpush2.msra.mxu0 0.0
      %4011 = vmatprep.subr.mxu0 0.0
      %4012 = vmatpush2.msra.mxu0 0.0
      %4013 = vmatprep.subr.mxu0 0.0
      %4014 = vmatpush2.msra.mxu0 0.0
      %4015 = vmatprep.subr.mxu0 0.0
      %4016 = vmatpush2.msra.mxu0 0.0
      %4017 = vmatprep.subr.mxu0 0.0
      %4018 = vmatpush2.msra.mxu0 0.0
      %4019 = vmatprep.subr.mxu0 0.0
      %4020 = vmatpush2.msra.mxu0 0.0
      %4021 = vmatprep.subr.mxu0 0.0
      %4022 = vmatpush2.msra.mxu0 0.0
      %4023 = vmatprep.subr.mxu0 0.0
      %4024 = vmatpush2.msra.mxu0 0.0
      %4025 = vmatprep.subr.mxu0 0.0
      %4026 = vmatpush2.msra.mxu0 0.0
      %4027 = vmatprep.subr.mxu0 0.0
      %4028 = vmatpush2.msra.mxu0 0.0
      %4029 = vmatprep.subr.mxu0 0.0
      %4030 = vmatpush2.msra.mxu0 0.0
      %4031 = vmatprep.subr.mxu0 0.0
      %4032 = vmatpush2.msra.mxu0 0.0
      %4033 = vmatprep.subr.mxu0 0.0
      %4034 = vmatpush2.msra.mxu0 0.0
      %4035 = vmatprep.subr.mxu0 0.0
      %4036 = vmatpush2.msra.mxu0 0.0
      %4037 = vmatprep.subr.mxu0 0.0
      %4038 = vmatpush2.msra.mxu0 0.0
      %4039 = vmatprep.mubr.f32.mxu0 0.0
      %4040 = vmatmul.mubr.f32.gmra.mxu0 %v3973
      %v4041 = vpop.f32.mrf.mxu0
      %v4042 = vadd.f32 0.0, %v4041
      %v4043 = vpop.f32.mrf.mxu0
      %4044 = vdwg.mxu0
      %v4046 = vrot.slane %v4042, 7
      %v4048 = vadd.f32 %v3864, %v4046
      %v4049 = vxor.u32 %v4048, 2147483648
      %v4050 = vmul.f32 %v4049, 1.442695
      %v4051 = vpow.pop %v4050
      %v4052 = vadd.f32 %v4051, 1.0
      %v4053 = vrcp.pop %v4052
      %v4054 = vmul.f32 1.0, %v4053
      %v4055 = vtanh.pop %v4048
      %v4057 = vrot.slane %v3960, 7
      %v4059 = vmul.f32 %v4054, %v4057
      %4061 = vrot.lane.b32.xlu0 %v4055, 64
      %v4062 = vpop.permute.xlu0 %4061
      %v4064 = vmul.f32 %v4054, %v4062
      %4066 = vrot.lane.b32.xlu0 %v4064, 32
      %v4067 = vpop.permute.xlu0 %4066
      %v4069 = vadd.f32 %v4059, %v4067
      %v4070 = vtanh.pop %v4069
      %4072 = vrot.lane.b32.xlu0 %v4070, 64
      %v4073 = vpop.permute.xlu0 %4072
      %v4075 = vmul.f32 %v4054, %v4073
      %4077 = vrot.lane.b32.xlu0 %v4075, 32
      %v4078 = vpop.permute.xlu0 %4077
      %vm4080 = vcmask 254977
      %4081 = vst.msk [vmem:[#allocation2] sm:$0x2] %vm4080, %v4078
      %v4082 = vrot.slane %v4075, 1
      %4083 = vrot.lane.b32.xlu0 %v4082, 32
      %v4084 = vpop.permute.xlu0 %4083
      %v4085 = vsel %vm3710, %v4084, 0
      %4087 = vmatprep.subr.mxu0 0.0
      %4088 = vmatpush1.msra.mxu0 0.0
      %4089 = vmatprep.subr.mxu0 0.0
      %4090 = vmatpush1.msra.mxu0 0.0
      %4091 = vmatprep.subr.mxu0 0.0
      %4092 = vmatpush1.msra.mxu0 0.0
      %4093 = vmatprep.subr.mxu0 0.0
      %4094 = vmatpush1.msra.mxu0 0.0
      %4095 = vmatprep.subr.mxu0 0.0
      %4096 = vmatpush1.msra.mxu0 0.0
      %4097 = vmatprep.subr.mxu0 0.0
      %4098 = vmatpush1.msra.mxu0 0.0
      %4099 = vmatprep.subr.mxu0 0.0
      %4100 = vmatpush1.msra.mxu0 0.0
      %4101 = vmatprep.subr.mxu0 0.0
      %4102 = vmatpush1.msra.mxu0 0.0
      %4103 = vmatprep.subr.mxu0 0.0
      %4104 = vmatpush1.msra.mxu0 0.0
      %4105 = vmatprep.subr.mxu0 0.0
      %4106 = vmatpush1.msra.mxu0 0.0
      %4107 = vmatprep.subr.mxu0 0.0
      %4108 = vmatpush1.msra.mxu0 0.0
      %4109 = vmatprep.subr.mxu0 0.0
      %4110 = vmatpush1.msra.mxu0 0.0
      %4111 = vmatprep.subr.mxu0 0.0
      %4112 = vmatpush1.msra.mxu0 %v3868
      %4113 = vmatprep.subr.mxu0 0.0
      %4114 = vmatpush1.msra.mxu0 %v3867
      %4115 = vmatprep.subr.mxu0 0.0
      %4116 = vmatpush1.msra.mxu0 %v3866
      %4117 = vmatprep.subr.mxu0 0.0
      %4118 = vmatpush1.msra.mxu0 %v3865
      %4119 = vmatprep.subr.mxu0 0.0
      %4120 = vmatpush2.msra.mxu0 0.0
      %4121 = vmatprep.subr.mxu0 0.0
      %4122 = vmatpush2.msra.mxu0 0.0
      %4123 = vmatprep.subr.mxu0 0.0
      %4124 = vmatpush2.msra.mxu0 0.0
      %4125 = vmatprep.subr.mxu0 0.0
      %4126 = vmatpush2.msra.mxu0 0.0
      %4127 = vmatprep.subr.mxu0 0.0
      %4128 = vmatpush2.msra.mxu0 0.0
      %4129 = vmatprep.subr.mxu0 0.0
      %4130 = vmatpush2.msra.mxu0 0.0
      %4131 = vmatprep.subr.mxu0 0.0
      %4132 = vmatpush2.msra.mxu0 0.0
      %4133 = vmatprep.subr.mxu0 0.0
      %4134 = vmatpush2.msra.mxu0 0.0
      %4135 = vmatprep.subr.mxu0 0.0
      %4136 = vmatpush2.msra.mxu0 0.0
      %4137 = vmatprep.subr.mxu0 0.0
      %4138 = vmatpush2.msra.mxu0 0.0
      %4139 = vmatprep.subr.mxu0 0.0
      %4140 = vmatpush2.msra.mxu0 0.0
      %4141 = vmatprep.subr.mxu0 0.0
      %4142 = vmatpush2.msra.mxu0 0.0
      %4143 = vmatprep.subr.mxu0 0.0
      %4144 = vmatpush2.msra.mxu0 0.0
      %4145 = vmatprep.subr.mxu0 0.0
      %4146 = vmatpush2.msra.mxu0 0.0
      %4147 = vmatprep.subr.mxu0 0.0
      %4148 = vmatpush2.msra.mxu0 0.0
      %4149 = vmatprep.subr.mxu0 0.0
      %4150 = vmatpush2.msra.mxu0 0.0
      %4151 = vmatprep.mubr.f32.mxu0 0.0
      %4152 = vmatmul.mubr.f32.gmra.mxu0 %v4085
      %v4153 = vpop.f32.mrf.mxu0
      %v4154 = vadd.f32 0.0, %v4153
      %v4155 = vpop.f32.mrf.mxu0
      %4156 = vdwg.mxu0
      %v4158 = vrot.slane %v4154, 6
      %v4160 = vadd.f32 %v3864, %v4158
      %v4161 = vxor.u32 %v4160, 2147483648
      %v4162 = vmul.f32 %v4161, 1.442695
      %v4163 = vpow.pop %v4162
      %v4164 = vadd.f32 %v4163, 1.0
      %v4165 = vrcp.pop %v4164
      %v4166 = vmul.f32 1.0, %v4165
      %v4167 = vtanh.pop %v4160
      %v4169 = vrot.slane %v4069, 7
      %v4171 = vmul.f32 %v4166, %v4169
      %4173 = vrot.lane.b32.xlu0 %v4167, 64
      %v4174 = vpop.permute.xlu0 %4173
      %v4176 = vmul.f32 %v4166, %v4174
      %4178 = vrot.lane.b32.xlu0 %v4176, 32
      %v4179 = vpop.permute.xlu0 %4178
      %v4181 = vadd.f32 %v4171, %v4179
      %v4182 = vtanh.pop %v4181
      %4184 = vrot.lane.b32.xlu0 %v4182, 64
      %v4185 = vpop.permute.xlu0 %4184
      %v4187 = vmul.f32 %v4166, %v4185
      %4189 = vrot.lane.b32.xlu0 %v4187, 32
      %v4190 = vpop.permute.xlu0 %4189
      %vm4192 = vcmask 256002
      %4193 = vst.msk [vmem:[#allocation2] sm:$0x4] %vm4192, %v4190
      %v4194 = vrot.slane %v4187, 2
      %4195 = vrot.lane.b32.xlu0 %v4194, 32
      %v4196 = vpop.permute.xlu0 %4195
      %v4197 = vsel %vm3710, %v4196, 0
      %4199 = vmatprep.subr.mxu0 0.0
      %4200 = vmatpush1.msra.mxu0 0.0
      %4201 = vmatprep.subr.mxu0 0.0
      %4202 = vmatpush1.msra.mxu0 0.0
      %4203 = vmatprep.subr.mxu0 0.0
      %4204 = vmatpush1.msra.mxu0 0.0
      %4205 = vmatprep.subr.mxu0 0.0
      %4206 = vmatpush1.msra.mxu0 0.0
      %4207 = vmatprep.subr.mxu0 0.0
      %4208 = vmatpush1.msra.mxu0 0.0
      %4209 = vmatprep.subr.mxu0 0.0
      %4210 = vmatpush1.msra.mxu0 0.0
      %4211 = vmatprep.subr.mxu0 0.0
      %4212 = vmatpush1.msra.mxu0 0.0
      %4213 = vmatprep.subr.mxu0 0.0
      %4214 = vmatpush1.msra.mxu0 0.0
      %4215 = vmatprep.subr.mxu0 0.0
      %4216 = vmatpush1.msra.mxu0 0.0
      %4217 = vmatprep.subr.mxu0 0.0
      %4218 = vmatpush1.msra.mxu0 0.0
      %4219 = vmatprep.subr.mxu0 0.0
      %4220 = vmatpush1.msra.mxu0 0.0
      %4221 = vmatprep.subr.mxu0 0.0
      %4222 = vmatpush1.msra.mxu0 0.0
      %4223 = vmatprep.subr.mxu0 0.0
      %4224 = vmatpush1.msra.mxu0 %v3868
      %4225 = vmatprep.subr.mxu0 0.0
      %4226 = vmatpush1.msra.mxu0 %v3867
      %4227 = vmatprep.subr.mxu0 0.0
      %4228 = vmatpush1.msra.mxu0 %v3866
      %4229 = vmatprep.subr.mxu0 0.0
      %4230 = vmatpush1.msra.mxu0 %v3865
      %4231 = vmatprep.subr.mxu0 0.0
      %4232 = vmatpush2.msra.mxu0 0.0
      %4233 = vmatprep.subr.mxu0 0.0
      %4234 = vmatpush2.msra.mxu0 0.0
      %4235 = vmatprep.subr.mxu0 0.0
      %4236 = vmatpush2.msra.mxu0 0.0
      %4237 = vmatprep.subr.mxu0 0.0
      %4238 = vmatpush2.msra.mxu0 0.0
      %4239 = vmatprep.subr.mxu0 0.0
      %4240 = vmatpush2.msra.mxu0 0.0
      %4241 = vmatprep.subr.mxu0 0.0
      %4242 = vmatpush2.msra.mxu0 0.0
      %4243 = vmatprep.subr.mxu0 0.0
      %4244 = vmatpush2.msra.mxu0 0.0
      %4245 = vmatprep.subr.mxu0 0.0
      %4246 = vmatpush2.msra.mxu0 0.0
      %4247 = vmatprep.subr.mxu0 0.0
      %4248 = vmatpush2.msra.mxu0 0.0
      %4249 = vmatprep.subr.mxu0 0.0
      %4250 = vmatpush2.msra.mxu0 0.0
      %4251 = vmatprep.subr.mxu0 0.0
      %4252 = vmatpush2.msra.mxu0 0.0
      %4253 = vmatprep.subr.mxu0 0.0
      %4254 = vmatpush2.msra.mxu0 0.0
      %4255 = vmatprep.subr.mxu0 0.0
      %4256 = vmatpush2.msra.mxu0 0.0
      %4257 = vmatprep.subr.mxu0 0.0
      %4258 = vmatpush2.msra.mxu0 0.0
      %4259 = vmatprep.subr.mxu0 0.0
      %4260 = vmatpush2.msra.mxu0 0.0
      %4261 = vmatprep.subr.mxu0 0.0
      %4262 = vmatpush2.msra.mxu0 0.0
      %4263 = vmatprep.mubr.f32.mxu0 0.0
      %4264 = vmatmul.mubr.f32.gmra.mxu0 %v4197
      %v4265 = vpop.f32.mrf.mxu0
      %v4266 = vadd.f32 0.0, %v4265
      %v4267 = vpop.f32.mrf.mxu0
      %4268 = vdwg.mxu0
      %v4270 = vrot.slane %v4266, 5
      %v4272 = vadd.f32 %v3864, %v4270
      %v4273 = vxor.u32 %v4272, 2147483648
      %v4274 = vmul.f32 %v4273, 1.442695
      %v4275 = vpow.pop %v4274
      %v4276 = vadd.f32 %v4275, 1.0
      %v4277 = vrcp.pop %v4276
      %v4278 = vmul.f32 1.0, %v4277
      %v4279 = vtanh.pop %v4272
      %v4281 = vrot.slane %v4181, 7
      %v4283 = vmul.f32 %v4278, %v4281
      %4285 = vrot.lane.b32.xlu0 %v4279, 64
      %v4286 = vpop.permute.xlu0 %4285
      %v4288 = vmul.f32 %v4278, %v4286
      %4290 = vrot.lane.b32.xlu0 %v4288, 32
      %v4291 = vpop.permute.xlu0 %4290
      %v4293 = vadd.f32 %v4283, %v4291
      %v4294 = vtanh.pop %v4293
      %4296 = vrot.lane.b32.xlu0 %v4294, 64
      %v4297 = vpop.permute.xlu0 %4296
      %v4299 = vmul.f32 %v4278, %v4297
      %4301 = vrot.lane.b32.xlu0 %v4299, 32
      %v4302 = vpop.permute.xlu0 %4301
      %vm4304 = vcmask 257027
      %4305 = vst.msk [vmem:[#allocation2] sm:$0x8] %vm4304, %v4302
      %v4306 = vrot.slane %v4299, 3
      %4307 = vrot.lane.b32.xlu0 %v4306, 32
      %v4308 = vpop.permute.xlu0 %4307
      %v4309 = vsel %vm3710, %v4308, 0
      %4311 = vmatprep.subr.mxu0 0.0
      %4312 = vmatpush1.msra.mxu0 0.0
      %4313 = vmatprep.subr.mxu0 0.0
      %4314 = vmatpush1.msra.mxu0 0.0
      %4315 = vmatprep.subr.mxu0 0.0
      %4316 = vmatpush1.msra.mxu0 0.0
      %4317 = vmatprep.subr.mxu0 0.0
      %4318 = vmatpush1.msra.mxu0 0.0
      %4319 = vmatprep.subr.mxu0 0.0
      %4320 = vmatpush1.msra.mxu0 0.0
      %4321 = vmatprep.subr.mxu0 0.0
      %4322 = vmatpush1.msra.mxu0 0.0
      %4323 = vmatprep.subr.mxu0 0.0
      %4324 = vmatpush1.msra.mxu0 0.0
      %4325 = vmatprep.subr.mxu0 0.0
      %4326 = vmatpush1.msra.mxu0 0.0
      %4327 = vmatprep.subr.mxu0 0.0
      %4328 = vmatpush1.msra.mxu0 0.0
      %4329 = vmatprep.subr.mxu0 0.0
      %4330 = vmatpush1.msra.mxu0 0.0
      %4331 = vmatprep.subr.mxu0 0.0
      %4332 = vmatpush1.msra.mxu0 0.0
      %4333 = vmatprep.subr.mxu0 0.0
      %4334 = vmatpush1.msra.mxu0 0.0
      %4335 = vmatprep.subr.mxu0 0.0
      %4336 = vmatpush1.msra.mxu0 %v3868
      %4337 = vmatprep.subr.mxu0 0.0
      %4338 = vmatpush1.msra.mxu0 %v3867
      %4339 = vmatprep.subr.mxu0 0.0
      %4340 = vmatpush1.msra.mxu0 %v3866
      %4341 = vmatprep.subr.mxu0 0.0
      %4342 = vmatpush1.msra.mxu0 %v3865
      %4343 = vmatprep.subr.mxu0 0.0
      %4344 = vmatpush2.msra.mxu0 0.0
      %4345 = vmatprep.subr.mxu0 0.0
      %4346 = vmatpush2.msra.mxu0 0.0
      %4347 = vmatprep.subr.mxu0 0.0
      %4348 = vmatpush2.msra.mxu0 0.0
      %4349 = vmatprep.subr.mxu0 0.0
      %4350 = vmatpush2.msra.mxu0 0.0
      %4351 = vmatprep.subr.mxu0 0.0
      %4352 = vmatpush2.msra.mxu0 0.0
      %4353 = vmatprep.subr.mxu0 0.0
      %4354 = vmatpush2.msra.mxu0 0.0
      %4355 = vmatprep.subr.mxu0 0.0
      %4356 = vmatpush2.msra.mxu0 0.0
      %4357 = vmatprep.subr.mxu0 0.0
      %4358 = vmatpush2.msra.mxu0 0.0
      %4359 = vmatprep.subr.mxu0 0.0
      %4360 = vmatpush2.msra.mxu0 0.0
      %4361 = vmatprep.subr.mxu0 0.0
      %4362 = vmatpush2.msra.mxu0 0.0
      %4363 = vmatprep.subr.mxu0 0.0
      %4364 = vmatpush2.msra.mxu0 0.0
      %4365 = vmatprep.subr.mxu0 0.0
      %4366 = vmatpush2.msra.mxu0 0.0
      %4367 = vmatprep.subr.mxu0 0.0
      %4368 = vmatpush2.msra.mxu0 0.0
      %4369 = vmatprep.subr.mxu0 0.0
      %4370 = vmatpush2.msra.mxu0 0.0
      %4371 = vmatprep.subr.mxu0 0.0
      %4372 = vmatpush2.msra.mxu0 0.0
      %4373 = vmatprep.subr.mxu0 0.0
      %4374 = vmatpush2.msra.mxu0 0.0
      %4375 = vmatprep.mubr.f32.mxu0 0.0
      %4376 = vmatmul.mubr.f32.gmra.mxu0 %v4309
      %v4377 = vpop.f32.mrf.mxu0
      %v4378 = vadd.f32 0.0, %v4377
      %v4379 = vpop.f32.mrf.mxu0
      %4380 = vdwg.mxu0
      %v4382 = vrot.slane %v4378, 4
      %v4384 = vadd.f32 %v3864, %v4382
      %v4385 = vxor.u32 %v4384, 2147483648
      %v4386 = vmul.f32 %v4385, 1.442695
      %v4387 = vpow.pop %v4386
      %v4388 = vadd.f32 %v4387, 1.0
      %v4389 = vrcp.pop %v4388
      %v4390 = vmul.f32 1.0, %v4389
      %v4391 = vtanh.pop %v4384
      %v4393 = vrot.slane %v4293, 7
      %v4395 = vmul.f32 %v4390, %v4393
      %4397 = vrot.lane.b32.xlu0 %v4391, 64
      %v4398 = vpop.permute.xlu0 %4397
      %v4400 = vmul.f32 %v4390, %v4398
      %4402 = vrot.lane.b32.xlu0 %v4400, 32
      %v4403 = vpop.permute.xlu0 %4402
      %v4405 = vadd.f32 %v4395, %v4403
      %v4406 = vtanh.pop %v4405
      %4408 = vrot.lane.b32.xlu0 %v4406, 64
      %v4409 = vpop.permute.xlu0 %4408
      %v4411 = vmul.f32 %v4390, %v4409
      %4413 = vrot.lane.b32.xlu0 %v4411, 32
      %v4414 = vpop.permute.xlu0 %4413
      %vm4416 = vcmask 258052
      %4417 = vst.msk [vmem:[#allocation2] sm:$0x10] %vm4416, %v4414
      %v4418 = vrot.slane %v4411, 4
      %4419 = vrot.lane.b32.xlu0 %v4418, 32
      %v4420 = vpop.permute.xlu0 %4419
      %v4421 = vsel %vm3710, %v4420, 0
      %4423 = vmatprep.subr.mxu0 0.0
      %4424 = vmatpush1.msra.mxu0 0.0
      %4425 = vmatprep.subr.mxu0 0.0
      %4426 = vmatpush1.msra.mxu0 0.0
      %4427 = vmatprep.subr.mxu0 0.0
      %4428 = vmatpush1.msra.mxu0 0.0
      %4429 = vmatprep.subr.mxu0 0.0
      %4430 = vmatpush1.msra.mxu0 0.0
      %4431 = vmatprep.subr.mxu0 0.0
      %4432 = vmatpush1.msra.mxu0 0.0
      %4433 = vmatprep.subr.mxu0 0.0
      %4434 = vmatpush1.msra.mxu0 0.0
      %4435 = vmatprep.subr.mxu0 0.0
      %4436 = vmatpush1.msra.mxu0 0.0
      %4437 = vmatprep.subr.mxu0 0.0
      %4438 = vmatpush1.msra.mxu0 0.0
      %4439 = vmatprep.subr.mxu0 0.0
      %4440 = vmatpush1.msra.mxu0 0.0
      %4441 = vmatprep.subr.mxu0 0.0
      %4442 = vmatpush1.msra.mxu0 0.0
      %4443 = vmatprep.subr.mxu0 0.0
      %4444 = vmatpush1.msra.mxu0 0.0
      %4445 = vmatprep.subr.mxu0 0.0
      %4446 = vmatpush1.msra.mxu0 0.0
      %4447 = vmatprep.subr.mxu0 0.0
      %4448 = vmatpush1.msra.mxu0 %v3868
      %4449 = vmatprep.subr.mxu0 0.0
      %4450 = vmatpush1.msra.mxu0 %v3867
      %4451 = vmatprep.subr.mxu0 0.0
      %4452 = vmatpush1.msra.mxu0 %v3866
      %4453 = vmatprep.subr.mxu0 0.0
      %4454 = vmatpush1.msra.mxu0 %v3865
      %4455 = vmatprep.subr.mxu0 0.0
      %4456 = vmatpush2.msra.mxu0 0.0
      %4457 = vmatprep.subr.mxu0 0.0
      %4458 = vmatpush2.msra.mxu0 0.0
      %4459 = vmatprep.subr.mxu0 0.0
      %4460 = vmatpush2.msra.mxu0 0.0
      %4461 = vmatprep.subr.mxu0 0.0
      %4462 = vmatpush2.msra.mxu0 0.0
      %4463 = vmatprep.subr.mxu0 0.0
      %4464 = vmatpush2.msra.mxu0 0.0
      %4465 = vmatprep.subr.mxu0 0.0
      %4466 = vmatpush2.msra.mxu0 0.0
      %4467 = vmatprep.subr.mxu0 0.0
      %4468 = vmatpush2.msra.mxu0 0.0
      %4469 = vmatprep.subr.mxu0 0.0
      %4470 = vmatpush2.msra.mxu0 0.0
      %4471 = vmatprep.subr.mxu0 0.0
      %4472 = vmatpush2.msra.mxu0 0.0
      %4473 = vmatprep.subr.mxu0 0.0
      %4474 = vmatpush2.msra.mxu0 0.0
      %4475 = vmatprep.subr.mxu0 0.0
      %4476 = vmatpush2.msra.mxu0 0.0
      %4477 = vmatprep.subr.mxu0 0.0
      %4478 = vmatpush2.msra.mxu0 0.0
      %4479 = vmatprep.subr.mxu0 0.0
      %4480 = vmatpush2.msra.mxu0 0.0
      %4481 = vmatprep.subr.mxu0 0.0
      %4482 = vmatpush2.msra.mxu0 0.0
      %4483 = vmatprep.subr.mxu0 0.0
      %4484 = vmatpush2.msra.mxu0 0.0
      %4485 = vmatprep.subr.mxu0 0.0
      %4486 = vmatpush2.msra.mxu0 0.0
      %4487 = vmatprep.mubr.f32.mxu0 0.0
      %4488 = vmatmul.mubr.f32.gmra.mxu0 %v4421
      %v4489 = vpop.f32.mrf.mxu0
      %v4490 = vadd.f32 0.0, %v4489
      %v4491 = vpop.f32.mrf.mxu0
      %4492 = vdwg.mxu0
      %v4494 = vrot.slane %v4490, 3
      %v4496 = vadd.f32 %v3864, %v4494
      %v4497 = vxor.u32 %v4496, 2147483648
      %v4498 = vmul.f32 %v4497, 1.442695
      %v4499 = vpow.pop %v4498
      %v4500 = vadd.f32 %v4499, 1.0
      %v4501 = vrcp.pop %v4500
      %v4502 = vmul.f32 1.0, %v4501
      %v4503 = vtanh.pop %v4496
      %v4505 = vrot.slane %v4405, 7
      %v4507 = vmul.f32 %v4502, %v4505
      %4509 = vrot.lane.b32.xlu0 %v4503, 64
      %v4510 = vpop.permute.xlu0 %4509
      %v4512 = vmul.f32 %v4502, %v4510
      %4514 = vrot.lane.b32.xlu0 %v4512, 32
      %v4515 = vpop.permute.xlu0 %4514
      %v4517 = vadd.f32 %v4507, %v4515
      %v4518 = vtanh.pop %v4517
      %4520 = vrot.lane.b32.xlu0 %v4518, 64
      %v4521 = vpop.permute.xlu0 %4520
      %v4523 = vmul.f32 %v4502, %v4521
      %4525 = vrot.lane.b32.xlu0 %v4523, 32
      %v4526 = vpop.permute.xlu0 %4525
      %vm4528 = vcmask 259077
      %4529 = vst.msk [vmem:[#allocation2] sm:$0x20] %vm4528, %v4526
      %v4530 = vrot.slane %v4523, 5
      %4531 = vrot.lane.b32.xlu0 %v4530, 32
      %v4532 = vpop.permute.xlu0 %4531
      %v4533 = vsel %vm3710, %v4532, 0
      %4535 = vmatprep.subr.mxu0 0.0
      %4536 = vmatpush1.msra.mxu0 0.0
      %4537 = vmatprep.subr.mxu0 0.0
      %4538 = vmatpush1.msra.mxu0 0.0
      %4539 = vmatprep.subr.mxu0 0.0
      %4540 = vmatpush1.msra.mxu0 0.0
      %4541 = vmatprep.subr.mxu0 0.0
      %4542 = vmatpush1.msra.mxu0 0.0
      %4543 = vmatprep.subr.mxu0 0.0
      %4544 = vmatpush1.msra.mxu0 0.0
      %4545 = vmatprep.subr.mxu0 0.0
      %4546 = vmatpush1.msra.mxu0 0.0
      %4547 = vmatprep.subr.mxu0 0.0
      %4548 = vmatpush1.msra.mxu0 0.0
      %4549 = vmatprep.subr.mxu0 0.0
      %4550 = vmatpush1.msra.mxu0 0.0
      %4551 = vmatprep.subr.mxu0 0.0
      %4552 = vmatpush1.msra.mxu0 0.0
      %4553 = vmatprep.subr.mxu0 0.0
      %4554 = vmatpush1.msra.mxu0 0.0
      %4555 = vmatprep.subr.mxu0 0.0
      %4556 = vmatpush1.msra.mxu0 0.0
      %4557 = vmatprep.subr.mxu0 0.0
      %4558 = vmatpush1.msra.mxu0 0.0
      %4559 = vmatprep.subr.mxu0 0.0
      %4560 = vmatpush1.msra.mxu0 %v3868
      %4561 = vmatprep.subr.mxu0 0.0
      %4562 = vmatpush1.msra.mxu0 %v3867
      %4563 = vmatprep.subr.mxu0 0.0
      %4564 = vmatpush1.msra.mxu0 %v3866
      %4565 = vmatprep.subr.mxu0 0.0
      %4566 = vmatpush1.msra.mxu0 %v3865
      %4567 = vmatprep.subr.mxu0 0.0
      %4568 = vmatpush2.msra.mxu0 0.0
      %4569 = vmatprep.subr.mxu0 0.0
      %4570 = vmatpush2.msra.mxu0 0.0
      %4571 = vmatprep.subr.mxu0 0.0
      %4572 = vmatpush2.msra.mxu0 0.0
      %4573 = vmatprep.subr.mxu0 0.0
      %4574 = vmatpush2.msra.mxu0 0.0
      %4575 = vmatprep.subr.mxu0 0.0
      %4576 = vmatpush2.msra.mxu0 0.0
      %4577 = vmatprep.subr.mxu0 0.0
      %4578 = vmatpush2.msra.mxu0 0.0
      %4579 = vmatprep.subr.mxu0 0.0
      %4580 = vmatpush2.msra.mxu0 0.0
      %4581 = vmatprep.subr.mxu0 0.0
      %4582 = vmatpush2.msra.mxu0 0.0
      %4583 = vmatprep.subr.mxu0 0.0
      %4584 = vmatpush2.msra.mxu0 0.0
      %4585 = vmatprep.subr.mxu0 0.0
      %4586 = vmatpush2.msra.mxu0 0.0
      %4587 = vmatprep.subr.mxu0 0.0
      %4588 = vmatpush2.msra.mxu0 0.0
      %4589 = vmatprep.subr.mxu0 0.0
      %4590 = vmatpush2.msra.mxu0 0.0
      %4591 = vmatprep.subr.mxu0 0.0
      %4592 = vmatpush2.msra.mxu0 0.0
      %4593 = vmatprep.subr.mxu0 0.0
      %4594 = vmatpush2.msra.mxu0 0.0
      %4595 = vmatprep.subr.mxu0 0.0
      %4596 = vmatpush2.msra.mxu0 0.0
      %4597 = vmatprep.subr.mxu0 0.0
      %4598 = vmatpush2.msra.mxu0 0.0
      %4599 = vmatprep.mubr.f32.mxu0 0.0
      %4600 = vmatmul.mubr.f32.gmra.mxu0 %v4533
      %v4601 = vpop.f32.mrf.mxu0
      %v4602 = vadd.f32 0.0, %v4601
      %v4603 = vpop.f32.mrf.mxu0
      %4604 = vdwg.mxu0
      %v4606 = vrot.slane %v4602, 2
      %v4608 = vadd.f32 %v3864, %v4606
      %v4609 = vxor.u32 %v4608, 2147483648
      %v4610 = vmul.f32 %v4609, 1.442695
      %v4611 = vpow.pop %v4610
      %v4612 = vadd.f32 %v4611, 1.0
      %v4613 = vrcp.pop %v4612
      %v4614 = vmul.f32 1.0, %v4613
      %v4615 = vtanh.pop %v4608
      %v4617 = vrot.slane %v4517, 7
      %v4619 = vmul.f32 %v4614, %v4617
      %4621 = vrot.lane.b32.xlu0 %v4615, 64
      %v4622 = vpop.permute.xlu0 %4621
      %v4624 = vmul.f32 %v4614, %v4622
      %4626 = vrot.lane.b32.xlu0 %v4624, 32
      %v4627 = vpop.permute.xlu0 %4626
      %v4629 = vadd.f32 %v4619, %v4627
      %v4630 = vtanh.pop %v4629
      %4632 = vrot.lane.b32.xlu0 %v4630, 64
      %v4633 = vpop.permute.xlu0 %4632
      %v4635 = vmul.f32 %v4614, %v4633
      %4637 = vrot.lane.b32.xlu0 %v4635, 32
      %v4638 = vpop.permute.xlu0 %4637
      %vm4640 = vcmask 260102
      %4641 = vst.msk [vmem:[#allocation2] sm:$0x40] %vm4640, %v4638
      %v4642 = vrot.slane %v4635, 6
      %4643 = vrot.lane.b32.xlu0 %v4642, 32
      %v4644 = vpop.permute.xlu0 %4643
      %v4645 = vsel %vm3710, %v4644, 0
      %4647 = vmatprep.subr.mxu0 0.0
      %4648 = vmatpush1.msra.mxu0 0.0
      %4649 = vmatprep.subr.mxu0 0.0
      %4650 = vmatpush1.msra.mxu0 0.0
      %4651 = vmatprep.subr.mxu0 0.0
      %4652 = vmatpush1.msra.mxu0 0.0
      %4653 = vmatprep.subr.mxu0 0.0
      %4654 = vmatpush1.msra.mxu0 0.0
      %4655 = vmatprep.subr.mxu0 0.0
      %4656 = vmatpush1.msra.mxu0 0.0
      %4657 = vmatprep.subr.mxu0 0.0
      %4658 = vmatpush1.msra.mxu0 0.0
      %4659 = vmatprep.subr.mxu0 0.0
      %4660 = vmatpush1.msra.mxu0 0.0
      %4661 = vmatprep.subr.mxu0 0.0
      %4662 = vmatpush1.msra.mxu0 0.0
      %4663 = vmatprep.subr.mxu0 0.0
      %4664 = vmatpush1.msra.mxu0 0.0
      %4665 = vmatprep.subr.mxu0 0.0
      %4666 = vmatpush1.msra.mxu0 0.0
      %4667 = vmatprep.subr.mxu0 0.0
      %4668 = vmatpush1.msra.mxu0 0.0
      %4669 = vmatprep.subr.mxu0 0.0
      %4670 = vmatpush1.msra.mxu0 0.0
      %4671 = vmatprep.subr.mxu0 0.0
      %4672 = vmatpush1.msra.mxu0 %v3868
      %4673 = vmatprep.subr.mxu0 0.0
      %4674 = vmatpush1.msra.mxu0 %v3867
      %4675 = vmatprep.subr.mxu0 0.0
      %4676 = vmatpush1.msra.mxu0 %v3866
      %4677 = vmatprep.subr.mxu0 0.0
      %4678 = vmatpush1.msra.mxu0 %v3865
      %4679 = vmatprep.subr.mxu0 0.0
      %4680 = vmatpush2.msra.mxu0 0.0
      %4681 = vmatprep.subr.mxu0 0.0
      %4682 = vmatpush2.msra.mxu0 0.0
      %4683 = vmatprep.subr.mxu0 0.0
      %4684 = vmatpush2.msra.mxu0 0.0
      %4685 = vmatprep.subr.mxu0 0.0
      %4686 = vmatpush2.msra.mxu0 0.0
      %4687 = vmatprep.subr.mxu0 0.0
      %4688 = vmatpush2.msra.mxu0 0.0
      %4689 = vmatprep.subr.mxu0 0.0
      %4690 = vmatpush2.msra.mxu0 0.0
      %4691 = vmatprep.subr.mxu0 0.0
      %4692 = vmatpush2.msra.mxu0 0.0
      %4693 = vmatprep.subr.mxu0 0.0
      %4694 = vmatpush2.msra.mxu0 0.0
      %4695 = vmatprep.subr.mxu0 0.0
      %4696 = vmatpush2.msra.mxu0 0.0
      %4697 = vmatprep.subr.mxu0 0.0
      %4698 = vmatpush2.msra.mxu0 0.0
      %4699 = vmatprep.subr.mxu0 0.0
      %4700 = vmatpush2.msra.mxu0 0.0
      %4701 = vmatprep.subr.mxu0 0.0
      %4702 = vmatpush2.msra.mxu0 0.0
      %4703 = vmatprep.subr.mxu0 0.0
      %4704 = vmatpush2.msra.mxu0 0.0
      %4705 = vmatprep.subr.mxu0 0.0
      %4706 = vmatpush2.msra.mxu0 0.0
      %4707 = vmatprep.subr.mxu0 0.0
      %4708 = vmatpush2.msra.mxu0 0.0
      %4709 = vmatprep.subr.mxu0 0.0
      %4710 = vmatpush2.msra.mxu0 0.0
      %4711 = vmatprep.mubr.f32.mxu0 0.0
      %4712 = vmatmul.mubr.f32.gmra.mxu0 %v4645
      %v4713 = vpop.f32.mrf.mxu0
      %v4714 = vadd.f32 0.0, %v4713
      %v4715 = vpop.f32.mrf.mxu0
      %4716 = vdwg.mxu0
      %v4718 = vrot.slane %v4714, 1
      %v4720 = vadd.f32 %v3864, %v4718
      %v4721 = vxor.u32 %v4720, 2147483648
      %v4722 = vmul.f32 %v4721, 1.442695
      %v4723 = vpow.pop %v4722
      %v4724 = vadd.f32 %v4723, 1.0
      %v4725 = vrcp.pop %v4724
      %v4726 = vmul.f32 1.0, %v4725
      %v4727 = vtanh.pop %v4720
      %v4729 = vrot.slane %v4629, 7
      %v4731 = vmul.f32 %v4726, %v4729
      %4733 = vrot.lane.b32.xlu0 %v4727, 64
      %v4734 = vpop.permute.xlu0 %4733
      %v4736 = vmul.f32 %v4726, %v4734
      %4738 = vrot.lane.b32.xlu0 %v4736, 32
      %v4739 = vpop.permute.xlu0 %4738
      %v4741 = vadd.f32 %v4731, %v4739
      %v4742 = vtanh.pop %v4741
      %4744 = vrot.lane.b32.xlu0 %v4742, 64
      %v4745 = vpop.permute.xlu0 %4744
      %v4747 = vmul.f32 %v4726, %v4745
      %4749 = vrot.lane.b32.xlu0 %v4747, 32
      %v4750 = vpop.permute.xlu0 %4749
      %vm4752 = vcmask 261127
      %4753 = vst.msk [vmem:[#allocation2] sm:$0x80] %vm4752, %v4750
      %v4754 = vld [vmem:[#allocation2] sm:$0xff]
      %v4755 = vmax.f32 %v4754, 0.0
      %v4756 = vld [vmem:[%s15] sm:$0xff]
      %v4757 = vld [vmem:[%s15 + $0x8] sm:$0xff]
      %v4758 = vld [vmem:[%s15 + $0x10] sm:$0xff]
      %v4759 = vld [vmem:[%s15 + $0x18] sm:$0xff]
      %v4760 = vld [vmem:[%s16] sm:$0x1]
      %v4762 = vlaneseq
      %v4763 = vshrl.u32 %v4762, 7
      %v4764 = vsub.s32 0, %v4763
      %v4765 = vrot.slane %v4760, %v4764
      %v4768 = vsel %vm3710, %v4755, 0
      %4770 = vmatprep.subr.mxu0 0.0
      %4771 = vmatpush1.msra.mxu0 0.0
      %4772 = vmatprep.subr.mxu0 0.0
      %4773 = vmatpush1.msra.mxu0 0.0
      %4774 = vmatprep.subr.mxu0 0.0
      %4775 = vmatpush1.msra.mxu0 0.0
      %4776 = vmatprep.subr.mxu0 0.0
      %4777 = vmatpush1.msra.mxu0 0.0
      %4778 = vmatprep.subr.mxu0 0.0
      %4779 = vmatpush1.msra.mxu0 0.0
      %4780 = vmatprep.subr.mxu0 0.0
      %4781 = vmatpush1.msra.mxu0 0.0
      %4782 = vmatprep.subr.mxu0 0.0
      %4783 = vmatpush1.msra.mxu0 0.0
      %4784 = vmatprep.subr.mxu0 0.0
      %4785 = vmatpush1.msra.mxu0 0.0
      %4786 = vmatprep.subr.mxu0 0.0
      %4787 = vmatpush1.msra.mxu0 0.0
      %4788 = vmatprep.subr.mxu0 0.0
      %4789 = vmatpush1.msra.mxu0 0.0
      %4790 = vmatprep.subr.mxu0 0.0
      %4791 = vmatpush1.msra.mxu0 0.0
      %4792 = vmatprep.subr.mxu0 0.0
      %4793 = vmatpush1.msra.mxu0 0.0
      %4794 = vmatprep.subr.mxu0 0.0
      %4795 = vmatpush1.msra.mxu0 %v4759
      %4796 = vmatprep.subr.mxu0 0.0
      %4797 = vmatpush1.msra.mxu0 %v4758
      %4798 = vmatprep.subr.mxu0 0.0
      %4799 = vmatpush1.msra.mxu0 %v4757
      %4800 = vmatprep.subr.mxu0 0.0
      %4801 = vmatpush1.msra.mxu0 %v4756
      %4802 = vmatprep.subr.mxu0 0.0
      %4803 = vmatpush2.msra.mxu0 0.0
      %4804 = vmatprep.subr.mxu0 0.0
      %4805 = vmatpush2.msra.mxu0 0.0
      %4806 = vmatprep.subr.mxu0 0.0
      %4807 = vmatpush2.msra.mxu0 0.0
      %4808 = vmatprep.subr.mxu0 0.0
      %4809 = vmatpush2.msra.mxu0 0.0
      %4810 = vmatprep.subr.mxu0 0.0
      %4811 = vmatpush2.msra.mxu0 0.0
      %4812 = vmatprep.subr.mxu0 0.0
      %4813 = vmatpush2.msra.mxu0 0.0
      %4814 = vmatprep.subr.mxu0 0.0
      %4815 = vmatpush2.msra.mxu0 0.0
      %4816 = vmatprep.subr.mxu0 0.0
      %4817 = vmatpush2.msra.mxu0 0.0
      %4818 = vmatprep.subr.mxu0 0.0
      %4819 = vmatpush2.msra.mxu0 0.0
      %4820 = vmatprep.subr.mxu0 0.0
      %4821 = vmatpush2.msra.mxu0 0.0
      %4822 = vmatprep.subr.mxu0 0.0
      %4823 = vmatpush2.msra.mxu0 0.0
      %4824 = vmatprep.subr.mxu0 0.0
      %4825 = vmatpush2.msra.mxu0 0.0
      %4826 = vmatprep.subr.mxu0 0.0
      %4827 = vmatpush2.msra.mxu0 0.0
      %4828 = vmatprep.subr.mxu0 0.0
      %4829 = vmatpush2.msra.mxu0 0.0
      %4830 = vmatprep.subr.mxu0 0.0
      %4831 = vmatpush2.msra.mxu0 0.0
      %4832 = vmatprep.subr.mxu0 0.0
      %4833 = vmatpush2.msra.mxu0 0.0
      %4834 = vmatprep.mubr.f32.mxu0 0.0
      %4835 = vmatmul.mubr.f32.gmra.mxu0 %v4768
      %v4836 = vpop.f32.mrf.mxu0
      %v4837 = vadd.f32 %v4765, %v4836
      %v4838 = vpop.f32.mrf.mxu0
      %4839 = vdwg.mxu0
      %vm4840 = vcmask 39936
      %v4841 = vsel %vm4840, %v4837, -inf
      %4842 = vmax.xlane.f32.xlu0 %v4841
      %v4843 = vpop.xlane.xlu0 %4842
      %v4844 = vsub.f32 %v4837, %v4843
      %v4845 = vmul.f32 %v4844, 1.442695
      %v4846 = vpow.pop %v4845
      %v4847 = vsel %vm4840, %v4846, 0.0
      %4848 = vadd.xlane.f32.xlu0 %v4847
      %v4849 = vpop.xlane.xlu0 %4848
      %v4850 = vlog2.pop %v4849
      %v4851 = vmul.f32 %v4850, 0.6931472
      %v4852 = vsub.f32 %v4844, %v4851
      %4853 = vst.msk [vmem:[%s708] sm:$0xff] %vm4840, %v4852
      %v4854 = vmax.f32 %v4837, 0.0
      %v4855 = vld [vmem:[%s17] sm:$0x1f]
      %v4856 = vld [vmem:[%s18] sm:$0xff]
      %v4857 = vld [vmem:[%s18 + $0x8] sm:$0xff]
      %v4858 = vld [vmem:[%s18 + $0x10] sm:$0xff]
      %v4859 = vld [vmem:[%s18 + $0x18] sm:$0xff]
      %4860 = vmatprep.subr.mxu0 0.0
      %4861 = vmatpush1.msra.mxu0 0.0
      %4862 = vmatprep.subr.mxu0 0.0
      %4863 = vmatpush1.msra.mxu0 0.0
      %4864 = vmatprep.subr.mxu0 0.0
      %4865 = vmatpush1.msra.mxu0 0.0
      %4866 = vmatprep.subr.mxu0 0.0
      %4867 = vmatpush1.msra.mxu0 0.0
      %4868 = vmatprep.subr.mxu0 0.0
      %4869 = vmatpush1.msra.mxu0 0.0
      %4870 = vmatprep.subr.mxu0 0.0
      %4871 = vmatpush1.msra.mxu0 0.0
      %4872 = vmatprep.subr.mxu0 0.0
      %4873 = vmatpush1.msra.mxu0 0.0
      %4874 = vmatprep.subr.mxu0 0.0
      %4875 = vmatpush1.msra.mxu0 0.0
      %4876 = vmatprep.subr.mxu0 0.0
      %4877 = vmatpush1.msra.mxu0 0.0
      %4878 = vmatprep.subr.mxu0 0.0
      %4879 = vmatpush1.msra.mxu0 0.0
      %4880 = vmatprep.subr.mxu0 0.0
      %4881 = vmatpush1.msra.mxu0 0.0
      %4882 = vmatprep.subr.mxu0 0.0
      %4883 = vmatpush1.msra.mxu0 0.0
      %4884 = vmatprep.subr.mxu0 0.0
      %4885 = vmatpush1.msra.mxu0 %v4859
      %4886 = vmatprep.subr.mxu0 0.0
      %4887 = vmatpush1.msra.mxu0 %v4858
      %4888 = vmatprep.subr.mxu0 0.0
      %4889 = vmatpush1.msra.mxu0 %v4857
      %4890 = vmatprep.subr.mxu0 0.0
      %4891 = vmatpush1.msra.mxu0 %v4856
      %4892 = vmatprep.subr.mxu0 0.0
      %4893 = vmatpush2.msra.mxu0 0.0
      %4894 = vmatprep.subr.mxu0 0.0
      %4895 = vmatpush2.msra.mxu0 0.0
      %4896 = vmatprep.subr.mxu0 0.0
      %4897 = vmatpush2.msra.mxu0 0.0
      %4898 = vmatprep.subr.mxu0 0.0
      %4899 = vmatpush2.msra.mxu0 0.0
      %4900 = vmatprep.subr.mxu0 0.0
      %4901 = vmatpush2.msra.mxu0 0.0
      %4902 = vmatprep.subr.mxu0 0.0
      %4903 = vmatpush2.msra.mxu0 0.0
      %4904 = vmatprep.subr.mxu0 0.0
      %4905 = vmatpush2.msra.mxu0 0.0
      %4906 = vmatprep.subr.mxu0 0.0
      %4907 = vmatpush2.msra.mxu0 0.0
      %4908 = vmatprep.subr.mxu0 0.0
      %4909 = vmatpush2.msra.mxu0 0.0
      %4910 = vmatprep.subr.mxu0 0.0
      %4911 = vmatpush2.msra.mxu0 0.0
      %4912 = vmatprep.subr.mxu0 0.0
      %4913 = vmatpush2.msra.mxu0 0.0
      %4914 = vmatprep.subr.mxu0 0.0
      %4915 = vmatpush2.msra.mxu0 0.0
      %4916 = vmatprep.subr.mxu0 0.0
      %4917 = vmatpush2.msra.mxu0 0.0
      %4918 = vmatprep.subr.mxu0 0.0
      %4919 = vmatpush2.msra.mxu0 0.0
      %4920 = vmatprep.subr.mxu0 0.0
      %4921 = vmatpush2.msra.mxu0 0.0
      %4922 = vmatprep.subr.mxu0 0.0
      %4923 = vmatpush2.msra.mxu0 0.0
      %4924 = vmatprep.mubr.f32.mxu0 0.0
      %4925 = vmatmul.mubr.f32.gmra.mxu0 %v3785
      %v4926 = vpop.f32.mrf.mxu0
      %v4927 = vadd.f32 0.0, %v4926
      %v4928 = vpop.f32.mrf.mxu0
      %4929 = vdwg.mxu0
      %v4931 = vsel %vm4840, %v4854, 0
      %vm4933 = vcmask 1044480
      %v4935 = vsel %vm4933, %v4855, 0
      %4937 = vmatprep.subr.mxu0 0.0
      %4938 = vmatpush1.msra.mxu0 0.0
      %4939 = vmatprep.subr.mxu0 0.0
      %4940 = vmatpush1.msra.mxu0 0.0
      %4941 = vmatprep.subr.mxu0 0.0
      %4942 = vmatpush1.msra.mxu0 0.0
      %4943 = vmatprep.subr.mxu0 0.0
      %4944 = vmatpush1.msra.mxu0 0.0
      %4945 = vmatprep.subr.mxu0 0.0
      %4946 = vmatpush1.msra.mxu0 0.0
      %4947 = vmatprep.subr.mxu0 0.0
      %4948 = vmatpush1.msra.mxu0 0.0
      %4949 = vmatprep.subr.mxu0 0.0
      %4950 = vmatpush1.msra.mxu0 0.0
      %4951 = vmatprep.subr.mxu0 0.0
      %4952 = vmatpush1.msra.mxu0 0.0
      %4953 = vmatprep.subr.mxu0 0.0
      %4954 = vmatpush1.msra.mxu0 0.0
      %4955 = vmatprep.subr.mxu0 0.0
      %4956 = vmatpush1.msra.mxu0 0.0
      %4957 = vmatprep.subr.mxu0 0.0
      %4958 = vmatpush1.msra.mxu0 0.0
      %4959 = vmatprep.subr.mxu0 0.0
      %4960 = vmatpush1.msra.mxu0 0.0
      %4961 = vmatprep.subr.mxu0 0.0
      %4962 = vmatpush1.msra.mxu0 0.0
      %4963 = vmatprep.subr.mxu0 0.0
      %4964 = vmatpush1.msra.mxu0 0.0
      %4965 = vmatprep.subr.mxu0 0.0
      %4966 = vmatpush1.msra.mxu0 0.0
      %4967 = vmatprep.subr.mxu0 0.0
      %4968 = vmatpush1.msra.mxu0 %v4935
      %4969 = vmatprep.subr.mxu0 0.0
      %4970 = vmatpush2.msra.mxu0 0.0
      %4971 = vmatprep.subr.mxu0 0.0
      %4972 = vmatpush2.msra.mxu0 0.0
      %4973 = vmatprep.subr.mxu0 0.0
      %4974 = vmatpush2.msra.mxu0 0.0
      %4975 = vmatprep.subr.mxu0 0.0
      %4976 = vmatpush2.msra.mxu0 0.0
      %4977 = vmatprep.subr.mxu0 0.0
      %4978 = vmatpush2.msra.mxu0 0.0
      %4979 = vmatprep.subr.mxu0 0.0
      %4980 = vmatpush2.msra.mxu0 0.0
      %4981 = vmatprep.subr.mxu0 0.0
      %4982 = vmatpush2.msra.mxu0 0.0
      %4983 = vmatprep.subr.mxu0 0.0
      %4984 = vmatpush2.msra.mxu0 0.0
      %4985 = vmatprep.subr.mxu0 0.0
      %4986 = vmatpush2.msra.mxu0 0.0
      %4987 = vmatprep.subr.mxu0 0.0
      %4988 = vmatpush2.msra.mxu0 0.0
      %4989 = vmatprep.subr.mxu0 0.0
      %4990 = vmatpush2.msra.mxu0 0.0
      %4991 = vmatprep.subr.mxu0 0.0
      %4992 = vmatpush2.msra.mxu0 0.0
      %4993 = vmatprep.subr.mxu0 0.0
      %4994 = vmatpush2.msra.mxu0 0.0
      %4995 = vmatprep.subr.mxu0 0.0
      %4996 = vmatpush2.msra.mxu0 0.0
      %4997 = vmatprep.subr.mxu0 0.0
      %4998 = vmatpush2.msra.mxu0 0.0
      %4999 = vmatprep.subr.mxu0 0.0
      %5000 = vmatpush2.msra.mxu0 0.0
      %5001 = vmatprep.mubr.f32.mxu0 0.0
      %5002 = vmatmul.mubr.f32.gmra.mxu0 %v4931
      %v5003 = vpop.f32.mrf.mxu0
      %v5004 = vadd.f32 %v4927, %v5003
      %v5005 = vpop.f32.mrf.mxu0
      %5006 = vdwg.mxu0
      %v5007 = vld [vmem:[%s19] sm:$0xff]
      %v5008 = vld [vmem:[%s19 + $0x8] sm:$0xff]
      %v5009 = vld [vmem:[%s19 + $0x10] sm:$0xff]
      %v5010 = vld [vmem:[%s19 + $0x18] sm:$0xff]
      %5011 = vmatprep.subr.mxu0 0.0
      %5012 = vmatpush1.msra.mxu0 0.0
      %5013 = vmatprep.subr.mxu0 0.0
      %5014 = vmatpush1.msra.mxu0 0.0
      %5015 = vmatprep.subr.mxu0 0.0
      %5016 = vmatpush1.msra.mxu0 0.0
      %5017 = vmatprep.subr.mxu0 0.0
      %5018 = vmatpush1.msra.mxu0 0.0
      %5019 = vmatprep.subr.mxu0 0.0
      %5020 = vmatpush1.msra.mxu0 0.0
      %5021 = vmatprep.subr.mxu0 0.0
      %5022 = vmatpush1.msra.mxu0 0.0
      %5023 = vmatprep.subr.mxu0 0.0
      %5024 = vmatpush1.msra.mxu0 0.0
      %5025 = vmatprep.subr.mxu0 0.0
      %5026 = vmatpush1.msra.mxu0 0.0
      %5027 = vmatprep.subr.mxu0 0.0
      %5028 = vmatpush1.msra.mxu0 0.0
      %5029 = vmatprep.subr.mxu0 0.0
      %5030 = vmatpush1.msra.mxu0 0.0
      %5031 = vmatprep.subr.mxu0 0.0
      %5032 = vmatpush1.msra.mxu0 0.0
      %5033 = vmatprep.subr.mxu0 0.0
      %5034 = vmatpush1.msra.mxu0 0.0
      %5035 = vmatprep.subr.mxu0 0.0
      %5036 = vmatpush1.msra.mxu0 %v5010
      %5037 = vmatprep.subr.mxu0 0.0
      %5038 = vmatpush1.msra.mxu0 %v5009
      %5039 = vmatprep.subr.mxu0 0.0
      %5040 = vmatpush1.msra.mxu0 %v5008
      %5041 = vmatprep.subr.mxu0 0.0
      %5042 = vmatpush1.msra.mxu0 %v5007
      %5043 = vmatprep.subr.mxu0 0.0
      %5044 = vmatpush2.msra.mxu0 0.0
      %5045 = vmatprep.subr.mxu0 0.0
      %5046 = vmatpush2.msra.mxu0 0.0
      %5047 = vmatprep.subr.mxu0 0.0
      %5048 = vmatpush2.msra.mxu0 0.0
      %5049 = vmatprep.subr.mxu0 0.0
      %5050 = vmatpush2.msra.mxu0 0.0
      %5051 = vmatprep.subr.mxu0 0.0
      %5052 = vmatpush2.msra.mxu0 0.0
      %5053 = vmatprep.subr.mxu0 0.0
      %5054 = vmatpush2.msra.mxu0 0.0
      %5055 = vmatprep.subr.mxu0 0.0
      %5056 = vmatpush2.msra.mxu0 0.0
      %5057 = vmatprep.subr.mxu0 0.0
      %5058 = vmatpush2.msra.mxu0 0.0
      %5059 = vmatprep.subr.mxu0 0.0
      %5060 = vmatpush2.msra.mxu0 0.0
      %5061 = vmatprep.subr.mxu0 0.0
      %5062 = vmatpush2.msra.mxu0 0.0
      %5063 = vmatprep.subr.mxu0 0.0
      %5064 = vmatpush2.msra.mxu0 0.0
      %5065 = vmatprep.subr.mxu0 0.0
      %5066 = vmatpush2.msra.mxu0 0.0
      %5067 = vmatprep.subr.mxu0 0.0
      %5068 = vmatpush2.msra.mxu0 0.0
      %5069 = vmatprep.subr.mxu0 0.0
      %5070 = vmatpush2.msra.mxu0 0.0
      %5071 = vmatprep.subr.mxu0 0.0
      %5072 = vmatpush2.msra.mxu0 0.0
      %5073 = vmatprep.subr.mxu0 0.0
      %5074 = vmatpush2.msra.mxu0 0.0
      %5075 = vmatprep.mubr.f32.mxu0 0.0
      %5076 = vmatmul.mubr.f32.gmra.mxu0 %v3712
      %v5077 = vpop.f32.mrf.mxu0
      %v5078 = vadd.f32 0.0, %v5077
      %v5079 = vpop.f32.mrf.mxu0
      %5080 = vdwg.mxu0
      %v5081 = vadd.f32 %v5004, %v5078
      %v5082 = vld [vmem:[%s20] sm:$0x1]
      %v5084 = vlaneseq
      %v5085 = vshrl.u32 %v5084, 7
      %v5086 = vsub.s32 0, %v5085
      %v5087 = vrot.slane %v5082, %v5086
      %v5089 = vadd.f32 %v5081, %v5087
      %v5090 = vsel %vm4840, %v5089, -inf
      %5091 = vmax.xlane.f32.xlu0 %v5090
      %v5092 = vpop.xlane.xlu0 %5091
      %v5093 = vsub.f32 %v5089, %v5092
      %v5094 = vmul.f32 %v5093, 1.442695
      %v5095 = vpow.pop %v5094
      %v5096 = vsel %vm4840, %v5095, 0.0
      %5097 = vadd.xlane.f32.xlu0 %v5096
      %v5098 = vpop.xlane.xlu0 %5097
      %v5099 = vlog2.pop %v5098
      %v5100 = vmul.f32 %v5099, 0.6931472
      %v5101 = vsub.f32 %v5093, %v5100
      %5102 = vst.msk [vmem:[%s712] sm:$0xff] %vm4840, %v5101
      %p5103 = scmp.lt.s32.totalorder %s34, 1
      %s5104 = scalar_select %p5103, %s34, 1
      %s5105 = smul.addr %s5104, 8
      %s5106 = scalar_lea.vmem %s21, %s5105
      %p5107 = scmp.lt.s32.totalorder %s34, 1
      %s5108 = scalar_select %p5107, %s34, 1
      %s5109 = smul.addr %s5108, 8
      %s5110 = scalar_lea.vmem %s22, %s5109
      // Predicated region
      $region105: #{tomnet_forward.1} parent=103 // pred_check
        %p5111 = pneg %p503
      $region106: #{tomnet_forward.1} parent=103 // pred_check_branch
        %5113 = sbr.rel (%p5111) target = $region108
      $region107: #{tomnet_forward.1} parent=103 // pred_region
        _
      $region108: #{tomnet_forward.1} parent=103 // pred_fallthru
        _
      // Predicated region
      $region109: #{tomnet_forward.1} parent=103 // pred_check
        %p5114 = pneg %p529
      $region110: #{tomnet_forward.1} parent=103 // pred_check_branch
        %5116 = sbr.rel (%p5114) target = $region112
      $region111: #{tomnet_forward.1} parent=103 // pred_region
        _
      $region112: #{tomnet_forward.1} parent=103 // pred_fallthru
        _
    $region104: #{tomnet_forward.1} parent=5 // pred_fallthru
      _
    %p5117 = scmp.le.s32.totalorder 2, %s29
    // Predicated region
    $region113: #{tomnet_forward.1} parent=5 // pred_check
      %p5118 = pneg %p5117
    $region114: #{tomnet_forward.1} parent=5 // pred_check_branch
      %5120 = sbr.rel (%p5118) target = $region116
    $region115: #{tomnet_forward.1} parent=5 // pred_region
      %s5121 = ssub.s32 %s29, 2
      // Predicated region
      $region117: #{tomnet_forward.1} parent=115 // pred_check
        %p5122 = pneg %p509
      $region118: #{tomnet_forward.1} parent=115 // pred_check_branch
        %5124 = sbr.rel (%p5122) target = $region120
      $region119: #{tomnet_forward.1} parent=115 // pred_region
        %p5125 = scmp.lt.s32.totalorder %s35, 1
        %s5126 = scalar_select %p5125, %s35, 1
        %s5127 = smul.addr %s5126, 8
        %s5128 = scalar_lea.vmem %s21, %s5127
      $region120: #{tomnet_forward.1} parent=115 // pred_fallthru
        _
      // Predicated region
      $region121: #{tomnet_forward.1} parent=115 // pred_check
        %p5129 = pneg %p535
      $region122: #{tomnet_forward.1} parent=115 // pred_check_branch
        %5131 = sbr.rel (%p5129) target = $region124
      $region123: #{tomnet_forward.1} parent=115 // pred_region
        %p5132 = scmp.lt.s32.totalorder %s35, 1
        %s5133 = scalar_select %p5132, %s35, 1
        %s5134 = smul.addr %s5133, 8
        %s5135 = scalar_lea.vmem %s22, %s5134
      $region124: #{tomnet_forward.1} parent=115 // pred_fallthru
        _
    $region116: #{tomnet_forward.1} parent=5 // pred_fallthru
      _
  $region6: #{tomnet_forward.1} parent=0 // loop_footer
    %s33 = sadd.s32 1, %s29
  $region7: #{tomnet_forward.1} parent=0 // loop_footer_branch
    %28 = sbr.rel target = $region3
  $region8: #{tomnet_forward.1} parent=0 // loop_exit
    _

</llo_original>
